<compile_context>
chip_gen: v7x
topology: tpu7x:2x2x1
jax: 0.10.0
libtpu: 0.0.40
codegen_flags: <defaults>
</compile_context>

<pallas_src>
import functools
import math

import jax
import jax.numpy as jnp
import numpy as np
from jax import lax
from jax.experimental import pallas as pl
from jax.experimental.pallas import tpu as pltpu

_PAD = 128                                         # lane padding (>= W+1) on each side
_TAPS = [(dy, dx) for dy in (-1, 0, 1) for dx in (-1, 0, 1)]


# --------------------------- host-side constant builders ---------------------------- #

def _block_conv_weight(w, n_batch):
    """(Cout, Cin, 3, 3) conv weight -> (N*Cout, 9*N*Cin) block-diagonal bf16 matrix.

    Row index    = n*Cout + cout.
    Column index = tap*(N*Cin) + n*Cin + cin, tap = kh*3 + kw (matches kernel tap order).
    """
    w = np.asarray(w, np.float32)
    cout, cin = w.shape[0], w.shape[1]
    wt = np.transpose(w, (2, 3, 0, 1)).reshape(9, cout, cin)          # (tap, cout, cin)
    blk = np.zeros((n_batch, cout, 9, n_batch, cin), np.float32)
    for n in range(n_batch):
        blk[n, :, :, n, :] = np.transpose(wt, (1, 0, 2))              # (cout, tap, cin)
    return jnp.asarray(blk.reshape(n_batch * cout, 9 * n_batch * cin), jnp.bfloat16)


def _block_bias(b, n_batch):
    b = np.asarray(b, np.float32)
    return jnp.asarray(np.tile(b, n_batch).reshape(-1, 1))            # (N*Cout, 1) f32


def _pool_gather(H, W):
    """G[p, k] = 1 iff flat pixel p is the top-left corner of pooled output pixel k."""
    Ho, Wo = H // 2, W // 2
    G = np.zeros((H * W, Ho * Wo), np.float32)
    for ho in range(Ho):
        for wo in range(Wo):
            G[(2 * ho) * W + 2 * wo, ho * Wo + wo] = 1.0
    return jnp.asarray(G, jnp.bfloat16)            # exactly representable 0/1


def _upsample_gather(H, W):
    """U[p, k] = 1 iff upsampled (2H x 2W) output pixel k replicates input pixel p."""
    U = np.zeros((H * W, 4 * H * W), np.float32)
    for hp in range(2 * H):
        for wp in range(2 * W):
            U[(hp // 2) * W + (wp // 2), hp * (2 * W) + wp] = 1.0
    return jnp.asarray(U, jnp.bfloat16)


# ------------------------------ fused kernel -------------------------------- #

def _make_kernel(layer_dims):
    uniq_dims = sorted(set(layer_dims))

    def tap_masks(H, W):
        """Per-tap (1, H*W) validity masks; W is a power of two (asserted host-side)."""
        HW = H * W
        logw = int(math.log2(W))
        p = lax.broadcasted_iota(jnp.int32, (1, HW), 1)
        wc = p & (W - 1)
        hc = p >> logw
        left, right = wc > 0, wc < (W - 1)
        top, bot = hc > 0, hc < (H - 1)
        out = []
        for dy, dx in _TAPS:
            m = None
            if dy == -1:
                m = top
            elif dy == 1:
                m = bot
            if dx == -1:
                m = left if m is None else jnp.logical_and(m, left)
            elif dx == 1:
                m = right if m is None else jnp.logical_and(m, right)
            out.append(None if m is None else m.astype(jnp.float32))
        return out

    def kernel(x_ref, w1, b1, w2, b2, w3, b3, w4, b4, w5, b5, w6, b6,
               g1, g2, u1, u2, o_ref, scr):
        # One-time zero fill: only the (never re-written) borders must stay finite/zero;
        # stale activations from a previous, larger layer are always masked before use.
        scr[...] = jnp.zeros(scr.shape, scr.dtype)

        # Hoisted boundary masks: one set per distinct spatial size, shared by layers.
        masks = {dims: tap_masks(*dims) for dims in uniq_dims}

        def conv3x3_relu(y, dims, w_ref, b_ref):
            H, W = dims
            HW = H * W
            rows = y.shape[0]                       # N * Cin
            scr[0:rows, _PAD:_PAD + HW] = y         # stage once (lane-aligned store)
            z = scr[0:rows, 0:_PAD + HW + _PAD]
            taps = []
            for t, (dy, dx) in enumerate(_TAPS):
                s = dy * W + dx
                tp = z[:, _PAD + s:_PAD + s + HW]
                m = masks[dims][t]
                if m is not None:
                    tp = tp * m
                taps.append(tp)
            # Single MXU matmul per conv: K = 9 * N * Cin, bf16 operands, f32 accum.
            tmat = jnp.concatenate(taps, axis=0).astype(jnp.bfloat16)
            acc = jnp.dot(w_ref[...], tmat, preferred_element_type=jnp.float32)
            return jnp.maximum(acc + b_ref[...], 0.0)

        def maxpool2(y, dims, g_ref):
            H, W = dims
            HW = H * W
            rows = y.shape[0]
            scr[0:rows, _PAD:_PAD + HW] = y
            z = scr[0:rows, 0:_PAD + HW + _PAD]
            m = jnp.maximum(
                jnp.maximum(z[:, _PAD:_PAD + HW], z[:, _PAD + 1:_PAD + 1 + HW]),
                jnp.maximum(z[:, _PAD + W:_PAD + W + HW],
                            z[:, _PAD + W + 1:_PAD + W + 1 + HW]))
            # Gather the top-left corner of every 2x2 window (exact 0/1 matmul).
            return jnp.dot(m, g_ref[...].astype(jnp.float32),
                           preferred_element_type=jnp.float32)

        def upsample2(y, u_ref):
            return jnp.dot(y, u_ref[...].astype(jnp.float32),
                           preferred_element_type=jnp.float32)

        d1, d2, d3, d4, d5, d6 = layer_dims
        y = x_ref[...]                                           # (N*C0, H*W) f32
        y = maxpool2(conv3x3_relu(y, d1, w1, b1), d1, g1)        # encoder1
        y = maxpool2(conv3x3_relu(y, d2, w2, b2), d2, g2)        # encoder2
        y = conv3x3_relu(y, d3, w3, b3)                          # encoder3
        y = conv3x3_relu(y, d4, w4, b4)                          # decoder1 conv
        y = upsample2(y, u1)                                     # decoder1 upsample x2
        y = conv3x3_relu(y, d5, w5, b5)                          # decoder2 conv
        y = upsample2(y, u2)                                     # decoder2 upsample x2
        y = conv3x3_relu(y, d6, w6, b6)                          # decoder3
        o_ref[...] = y.astype(o_ref.dtype)

    return kernel


# ------------------------------- full model --------------------------------- #

def my_conv_autoencoder1(params, x_nchw):
    """Forward pass matching MyConvAutoEncoder1.forward.  x: (N, C, H, W) float32."""
    (w1, b1), (w2, b2), (w3, b3), (w4, b4), (w5, b5), (w6, b6) = params
    N, C0, H0, W0 = x_nchw.shape
    assert H0 % 4 == 0 and W0 % 4 == 0
    for wd in (W0, W0 // 2, W0 // 4):
        assert wd >= 2 and (wd & (wd - 1)) == 0, "kernel assumes power-of-two widths"
    assert W0 + 1 <= _PAD

    d1, d2, d3 = (H0, W0), (H0 // 2, W0 // 2), (H0 // 4, W0 // 4)
    layer_dims = [d1, d2, d3, d3, d2, d1]

    weights = [(_block_conv_weight(w, N), _block_bias(b, N)) for (w, b) in params]
    g1, g2 = _pool_gather(*d1), _pool_gather(*d2)
    u1, u2 = _upsample_gather(*d3), _upsample_gather(*d2)

    c_last = w6.shape[0]
    max_chan = max(max(w.shape[0], w.shape[1]) for (w, _) in params)
    scr_rows = ((N * max_chan + 7) // 8) * 8
    scr_cols = 2 * _PAD + H0 * W0

    # NCHW is already (n, c)-major: a pure reshape, no host relayout needed.
    x2d = x_nchw.reshape(N * C0, H0 * W0)

    operands = [x2d]
    for wb, bb in weights:
        operands += [wb, bb]
    operands += [g1, g2, u1, u2]

    in_specs = [pl.BlockSpec(op.shape, lambda i, nd=op.ndim: (0,) * nd)
                for op in operands]

    out2d = pl.pallas_call(
        _make_kernel(layer_dims),
        out_shape=jax.ShapeDtypeStruct((N * c_last, H0 * W0), x_nchw.dtype),
        grid_spec=pltpu.PrefetchScalarGridSpec(
            num_scalar_prefetch=0,
            grid=(1,),                      # batch folded onto sublanes -> single step
            in_specs=in_specs,
            out_specs=pl.BlockSpec((N * c_last, H0 * W0), lambda i: (0, 0)),
            scratch_shapes=[pltpu.VMEM((scr_rows, scr_cols), jnp.float32)],
        ),
        compiler_params=pltpu.CompilerParams(dimension_semantics=("arbitrary",)),
    )(*operands)

    return out2d.reshape(N, c_last, H0, W0)


def init_params(key, img_chan):
    n_chan1, n_chan2 = 32, 8
    shapes = [(n_chan1, img_chan), (n_chan2, n_chan1), (n_chan2, n_chan2),
              (n_chan2, n_chan2), (n_chan1, n_chan2), (img_chan, n_chan1)]
    params = []
    keys = jax.random.split(key, len(shapes))
    for k, (cout, cin) in zip(keys, shapes):
        kw, kb = jax.random.split(k)
        bound = 1.0 / math.sqrt(cin * 9)             # PyTorch Conv2d default bound
        w = jax.random.uniform(kw, (cout, cin, 3, 3), jnp.float32, -bound, bound)
        b = jax.random.uniform(kb, (cout,), jnp.float32, -bound, bound)
        params.append((w, b))
    return params


# ---------------------------- pure-JAX reference ----------------------------- #

def _ref_conv_relu(x, w, b):
    y = lax.conv_general_dilated(
        x, w, window_strides=(1, 1), padding=((1, 1), (1, 1)),
        dimension_numbers=("NCHW", "OIHW", "NCHW"),
        precision=lax.Precision.HIGHEST)
    return jax.nn.relu(y + b[None, :, None, None])


def _ref_forward(params, x):
    (w1, b1), (w2, b2), (w3, b3), (w4, b4), (w5, b5), (w6, b6) = params
    pool = lambda t: lax.reduce_window(t, -jnp.inf, lax.max,
                                       (1, 1, 2, 2), (1, 1, 2, 2), "VALID")
    up = lambda t: jnp.repeat(jnp.repeat(t, 2, axis=2), 2, axis=3)
    y = pool(_ref_conv_relu(x, w1, b1))
    y = pool(_ref_conv_relu(y, w2, b2))
    y = _ref_conv_relu(y, w3, b3)
    y = up(_ref_conv_relu(y, w4, b4))
    y = up(_ref_conv_relu(y, w5, b5))
    y = _ref_conv_relu(y, w6, b6)
    return y


# ----------------------------------- main ------------------------------------ #

if __name__ == "__main__":
    key = jax.random.PRNGKey(0)
    k_params, k_x = jax.random.split(key)

    img_chan, N, H, W = 4, 2, 16, 16
    params = init_params(k_params, img_chan)
    x = jax.random.normal(k_x, (N, img_chan, H, W), jnp.float32)

    fwd = jax.jit(functools.partial(my_conv_autoencoder1, params))
    out = jax.block_until_ready(fwd(x))

    assert out.shape == (N, img_chan, H, W), out.shape
    ref = jax.block_until_ready(_ref_forward(params, x))
    # bf16 conv operands (f32 accumulation) vs HIGHEST-precision f32 reference:
    # expected element error is ~1e-3..1e-2 after 6 layers, so compare at 2e-2.
    np.testing.assert_allclose(np.asarray(out), np.asarray(ref),
                               rtol=2e-2, atol=2e-2)
    print("KERNEL_OK")
</pallas_src>

<mosaic_0001>
module attributes {stable_mosaic.version = 11 : i64} {
  func.func @kernel(%arg0: i32, %arg1: memref<8x256xf32, #tpu.memory_space<vmem>>, %arg2: memref<64x72xbf16, #tpu.memory_space<vmem>>, %arg3: memref<64x1xf32, #tpu.memory_space<vmem>>, %arg4: memref<16x576xbf16, #tpu.memory_space<vmem>>, %arg5: memref<16x1xf32, #tpu.memory_space<vmem>>, %arg6: memref<16x144xbf16, #tpu.memory_space<vmem>>, %arg7: memref<16x1xf32, #tpu.memory_space<vmem>>, %arg8: memref<16x144xbf16, #tpu.memory_space<vmem>>, %arg9: memref<16x1xf32, #tpu.memory_space<vmem>>, %arg10: memref<64x144xbf16, #tpu.memory_space<vmem>>, %arg11: memref<64x1xf32, #tpu.memory_space<vmem>>, %arg12: memref<8x576xbf16, #tpu.memory_space<vmem>>, %arg13: memref<8x1xf32, #tpu.memory_space<vmem>>, %arg14: memref<256x64xbf16, #tpu.memory_space<vmem>>, %arg15: memref<64x16xbf16, #tpu.memory_space<vmem>>, %arg16: memref<16x64xbf16, #tpu.memory_space<vmem>>, %arg17: memref<64x256xbf16, #tpu.memory_space<vmem>>, %arg18: memref<8x256xf32, #tpu.memory_space<vmem>>, %arg19: memref<64x512xf32, #tpu.memory_space<vmem>>) attributes {dimension_semantics = [#tpu.dimension_semantics<arbitrary>], iteration_bounds = array<i64: 1>, scalar_prefetch = 0 : i64, scratch_operands = 1 : i64, tpu.core_type = #tpu.core_type<tc>, window_params = [{pipeline_mode = #tpu.pipeline_mode<synchronous>, transform_indices = @transform_0, window_bounds = array<i64: 8, 256>}, {pipeline_mode = #tpu.pipeline_mode<synchronous>, transform_indices = @transform_1, window_bounds = array<i64: 64, 72>}, {pipeline_mode = #tpu.pipeline_mode<synchronous>, transform_indices = @transform_2, window_bounds = array<i64: 64, 1>}, {pipeline_mode = #tpu.pipeline_mode<synchronous>, transform_indices = @transform_3, window_bounds = array<i64: 16, 576>}, {pipeline_mode = #tpu.pipeline_mode<synchronous>, transform_indices = @transform_4, window_bounds = array<i64: 16, 1>}, {pipeline_mode = #tpu.pipeline_mode<synchronous>, transform_indices = @transform_5, window_bounds = array<i64: 16, 144>}, {pipeline_mode = #tpu.pipeline_mode<synchronous>, transform_indices = @transform_6, window_bounds = array<i64: 16, 1>}, {pipeline_mode = #tpu.pipeline_mode<synchronous>, transform_indices = @transform_7, window_bounds = array<i64: 16, 144>}, {pipeline_mode = #tpu.pipeline_mode<synchronous>, transform_indices = @transform_8, window_bounds = array<i64: 16, 1>}, {pipeline_mode = #tpu.pipeline_mode<synchronous>, transform_indices = @transform_9, window_bounds = array<i64: 64, 144>}, {pipeline_mode = #tpu.pipeline_mode<synchronous>, transform_indices = @transform_10, window_bounds = array<i64: 64, 1>}, {pipeline_mode = #tpu.pipeline_mode<synchronous>, transform_indices = @transform_11, window_bounds = array<i64: 8, 576>}, {pipeline_mode = #tpu.pipeline_mode<synchronous>, transform_indices = @transform_12, window_bounds = array<i64: 8, 1>}, {pipeline_mode = #tpu.pipeline_mode<synchronous>, transform_indices = @transform_13, window_bounds = array<i64: 256, 64>}, {pipeline_mode = #tpu.pipeline_mode<synchronous>, transform_indices = @transform_14, window_bounds = array<i64: 64, 16>}, {pipeline_mode = #tpu.pipeline_mode<synchronous>, transform_indices = @transform_15, window_bounds = array<i64: 16, 64>}, {pipeline_mode = #tpu.pipeline_mode<synchronous>, transform_indices = @transform_16, window_bounds = array<i64: 64, 256>}, {pipeline_mode = #tpu.pipeline_mode<synchronous>, transform_indices = @transform_17, window_bounds = array<i64: 8, 256>}]} {
    %cst = arith.constant 0.000000e+00 : f32
    %0 = vector.broadcast %cst : f32 to vector<64x512xf32>
    %c0 = arith.constant 0 : index
    %c0_0 = arith.constant 0 : index
    %1 = vector.load %arg19[%c0, %c0_0] : memref<64x512xf32, #tpu.memory_space<vmem>>, vector<64x512xf32>
    tpu.vector_store %arg19[%c0, %c0_0], %0 {strides = array<i32>} : memref<64x512xf32, #tpu.memory_space<vmem>>, vector<64x512xf32>,
    %2 = tpu.iota {dimensions = array<i32: 1>} : vector<1x16xi32>
    %c3_i32 = arith.constant 3 : i32
    %3 = vector.broadcast %c3_i32 : i32 to vector<1x16xi32>
    %4 = arith.andi %2, %3 : vector<1x16xi32>
    %c2_i32 = arith.constant 2 : i32
    %5 = vector.broadcast %c2_i32 : i32 to vector<1x16xi32>
    %6 = arith.shrsi %2, %5 : vector<1x16xi32>
    %c0_i32 = arith.constant 0 : i32
    %7 = vector.broadcast %c0_i32 : i32 to vector<1x16xi32>
    %8 = arith.cmpi sgt, %4, %7 : vector<1x16xi32>
    %c3_i32_1 = arith.constant 3 : i32
    %9 = vector.broadcast %c3_i32_1 : i32 to vector<1x16xi32>
    %10 = arith.cmpi slt, %4, %9 : vector<1x16xi32>
    %c0_i32_2 = arith.constant 0 : i32
    %11 = vector.broadcast %c0_i32_2 : i32 to vector<1x16xi32>
    %12 = arith.cmpi sgt, %6, %11 : vector<1x16xi32>
    %c3_i32_3 = arith.constant 3 : i32
    %13 = vector.broadcast %c3_i32_3 : i32 to vector<1x16xi32>
    %14 = arith.cmpi slt, %6, %13 : vector<1x16xi32>
    %15 = arith.andi %12, %8 : vector<1x16xi1>
    %16 = arith.extui %15 : vector<1x16xi1> to vector<1x16xi32>
    %17 = arith.sitofp %16 : vector<1x16xi32> to vector<1x16xf32>
    %18 = arith.extui %12 : vector<1x16xi1> to vector<1x16xi32>
    %19 = arith.sitofp %18 : vector<1x16xi32> to vector<1x16xf32>
    %20 = arith.andi %12, %10 : vector<1x16xi1>
    %21 = arith.extui %20 : vector<1x16xi1> to vector<1x16xi32>
    %22 = arith.sitofp %21 : vector<1x16xi32> to vector<1x16xf32>
    %23 = arith.extui %8 : vector<1x16xi1> to vector<1x16xi32>
    %24 = arith.sitofp %23 : vector<1x16xi32> to vector<1x16xf32>
    %25 = arith.extui %10 : vector<1x16xi1> to vector<1x16xi32>
    %26 = arith.sitofp %25 : vector<1x16xi32> to vector<1x16xf32>
    %27 = arith.andi %14, %8 : vector<1x16xi1>
    %28 = arith.extui %27 : vector<1x16xi1> to vector<1x16xi32>
    %29 = arith.sitofp %28 : vector<1x16xi32> to vector<1x16xf32>
    %30 = arith.extui %14 : vector<1x16xi1> to vector<1x16xi32>
    %31 = arith.sitofp %30 : vector<1x16xi32> to vector<1x16xf32>
    %32 = arith.andi %14, %10 : vector<1x16xi1>
    %33 = arith.extui %32 : vector<1x16xi1> to vector<1x16xi32>
    %34 = arith.sitofp %33 : vector<1x16xi32> to vector<1x16xf32>
    %35 = tpu.iota {dimensions = array<i32: 1>} : vector<1x64xi32>
    %c7_i32 = arith.constant 7 : i32
    %36 = vector.broadcast %c7_i32 : i32 to vector<1x64xi32>
    %37 = arith.andi %35, %36 : vector<1x64xi32>
    %c3_i32_4 = arith.constant 3 : i32
    %38 = vector.broadcast %c3_i32_4 : i32 to vector<1x64xi32>
    %39 = arith.shrsi %35, %38 : vector<1x64xi32>
    %c0_i32_5 = arith.constant 0 : i32
    %40 = vector.broadcast %c0_i32_5 : i32 to vector<1x64xi32>
    %41 = arith.cmpi sgt, %37, %40 : vector<1x64xi32>
    %c7_i32_6 = arith.constant 7 : i32
    %42 = vector.broadcast %c7_i32_6 : i32 to vector<1x64xi32>
    %43 = arith.cmpi slt, %37, %42 : vector<1x64xi32>
    %c0_i32_7 = arith.constant 0 : i32
    %44 = vector.broadcast %c0_i32_7 : i32 to vector<1x64xi32>
    %45 = arith.cmpi sgt, %39, %44 : vector<1x64xi32>
    %c7_i32_8 = arith.constant 7 : i32
    %46 = vector.broadcast %c7_i32_8 : i32 to vector<1x64xi32>
    %47 = arith.cmpi slt, %39, %46 : vector<1x64xi32>
    %48 = arith.andi %45, %41 : vector<1x64xi1>
    %49 = arith.extui %48 : vector<1x64xi1> to vector<1x64xi32>
    %50 = arith.sitofp %49 : vector<1x64xi32> to vector<1x64xf32>
    %51 = arith.extui %45 : vector<1x64xi1> to vector<1x64xi32>
    %52 = arith.sitofp %51 : vector<1x64xi32> to vector<1x64xf32>
    %53 = arith.andi %45, %43 : vector<1x64xi1>
    %54 = arith.extui %53 : vector<1x64xi1> to vector<1x64xi32>
    %55 = arith.sitofp %54 : vector<1x64xi32> to vector<1x64xf32>
    %56 = arith.extui %41 : vector<1x64xi1> to vector<1x64xi32>
    %57 = arith.sitofp %56 : vector<1x64xi32> to vector<1x64xf32>
    %58 = arith.extui %43 : vector<1x64xi1> to vector<1x64xi32>
    %59 = arith.sitofp %58 : vector<1x64xi32> to vector<1x64xf32>
    %60 = arith.andi %47, %41 : vector<1x64xi1>
    %61 = arith.extui %60 : vector<1x64xi1> to vector<1x64xi32>
    %62 = arith.sitofp %61 : vector<1x64xi32> to vector<1x64xf32>
    %63 = arith.extui %47 : vector<1x64xi1> to vector<1x64xi32>
    %64 = arith.sitofp %63 : vector<1x64xi32> to vector<1x64xf32>
    %65 = arith.andi %47, %43 : vector<1x64xi1>
    %66 = arith.extui %65 : vector<1x64xi1> to vector<1x64xi32>
    %67 = arith.sitofp %66 : vector<1x64xi32> to vector<1x64xf32>
    %68 = tpu.iota {dimensions = array<i32: 1>} : vector<1x256xi32>
    %c15_i32 = arith.constant 15 : i32
    %69 = vector.broadcast %c15_i32 : i32 to vector<1x256xi32>
    %70 = arith.andi %68, %69 : vector<1x256xi32>
    %c4_i32 = arith.constant 4 : i32
    %71 = vector.broadcast %c4_i32 : i32 to vector<1x256xi32>
    %72 = arith.shrsi %68, %71 : vector<1x256xi32>
    %c0_i32_9 = arith.constant 0 : i32
    %73 = vector.broadcast %c0_i32_9 : i32 to vector<1x256xi32>
    %74 = arith.cmpi sgt, %70, %73 : vector<1x256xi32>
    %c15_i32_10 = arith.constant 15 : i32
    %75 = vector.broadcast %c15_i32_10 : i32 to vector<1x256xi32>
    %76 = arith.cmpi slt, %70, %75 : vector<1x256xi32>
    %c0_i32_11 = arith.constant 0 : i32
    %77 = vector.broadcast %c0_i32_11 : i32 to vector<1x256xi32>
    %78 = arith.cmpi sgt, %72, %77 : vector<1x256xi32>
    %c15_i32_12 = arith.constant 15 : i32
    %79 = vector.broadcast %c15_i32_12 : i32 to vector<1x256xi32>
    %80 = arith.cmpi slt, %72, %79 : vector<1x256xi32>
    %81 = arith.andi %78, %74 : vector<1x256xi1>
    %82 = arith.extui %81 : vector<1x256xi1> to vector<1x256xi32>
    %83 = arith.sitofp %82 : vector<1x256xi32> to vector<1x256xf32>
    %84 = arith.extui %78 : vector<1x256xi1> to vector<1x256xi32>
    %85 = arith.sitofp %84 : vector<1x256xi32> to vector<1x256xf32>
    %86 = arith.andi %78, %76 : vector<1x256xi1>
    %87 = arith.extui %86 : vector<1x256xi1> to vector<1x256xi32>
    %88 = arith.sitofp %87 : vector<1x256xi32> to vector<1x256xf32>
    %89 = arith.extui %74 : vector<1x256xi1> to vector<1x256xi32>
    %90 = arith.sitofp %89 : vector<1x256xi32> to vector<1x256xf32>
    %91 = arith.extui %76 : vector<1x256xi1> to vector<1x256xi32>
    %92 = arith.sitofp %91 : vector<1x256xi32> to vector<1x256xf32>
    %93 = arith.andi %80, %74 : vector<1x256xi1>
    %94 = arith.extui %93 : vector<1x256xi1> to vector<1x256xi32>
    %95 = arith.sitofp %94 : vector<1x256xi32> to vector<1x256xf32>
    %96 = arith.extui %80 : vector<1x256xi1> to vector<1x256xi32>
    %97 = arith.sitofp %96 : vector<1x256xi32> to vector<1x256xf32>
    %98 = arith.andi %80, %76 : vector<1x256xi1>
    %99 = arith.extui %98 : vector<1x256xi1> to vector<1x256xi32>
    %100 = arith.sitofp %99 : vector<1x256xi32> to vector<1x256xf32>
    %c0_13 = arith.constant 0 : index
    %c0_14 = arith.constant 0 : index
    %101 = vector.load %arg1[%c0_13, %c0_14] : memref<8x256xf32, #tpu.memory_space<vmem>>, vector<8x256xf32>
    %c0_15 = arith.constant 0 : index
    %c128 = arith.constant 128 : index
    %102 = vector.load %arg19[%c0_15, %c128] : memref<64x512xf32, #tpu.memory_space<vmem>>, vector<8x256xf32>
    tpu.vector_store %arg19[%c0_15, %c128], %101 {strides = array<i32>} : memref<64x512xf32, #tpu.memory_space<vmem>>, vector<8x256xf32>,
    %c0_16 = arith.constant 0 : index
    %c0_17 = arith.constant 0 : index
    %103 = vector.load %arg19[%c0_16, %c0_17] : memref<64x512xf32, #tpu.memory_space<vmem>>, vector<8x512xf32>
    %104 = vector.extract_strided_slice %103 {offsets = [0, 111], sizes = [8, 256], strides = [1, 1]} : vector<8x512xf32> to vector<8x256xf32>
    %105 = vector.broadcast %83 : vector<1x256xf32> to vector<8x256xf32>
    %106 = arith.mulf %104, %105 : vector<8x256xf32>
    %107 = vector.extract_strided_slice %103 {offsets = [0, 112], sizes = [8, 256], strides = [1, 1]} : vector<8x512xf32> to vector<8x256xf32>
    %108 = vector.broadcast %85 : vector<1x256xf32> to vector<8x256xf32>
    %109 = arith.mulf %107, %108 : vector<8x256xf32>
    %110 = vector.extract_strided_slice %103 {offsets = [0, 113], sizes = [8, 256], strides = [1, 1]} : vector<8x512xf32> to vector<8x256xf32>
    %111 = vector.broadcast %88 : vector<1x256xf32> to vector<8x256xf32>
    %112 = arith.mulf %110, %111 : vector<8x256xf32>
    %113 = vector.extract_strided_slice %103 {offsets = [0, 127], sizes = [8, 256], strides = [1, 1]} : vector<8x512xf32> to vector<8x256xf32>
    %114 = vector.broadcast %90 : vector<1x256xf32> to vector<8x256xf32>
    %115 = arith.mulf %113, %114 : vector<8x256xf32>
    %116 = vector.extract_strided_slice %103 {offsets = [0, 128], sizes = [8, 256], strides = [1, 1]} : vector<8x512xf32> to vector<8x256xf32>
    %117 = vector.extract_strided_slice %103 {offsets = [0, 129], sizes = [8, 256], strides = [1, 1]} : vector<8x512xf32> to vector<8x256xf32>
    %118 = vector.broadcast %92 : vector<1x256xf32> to vector<8x256xf32>
    %119 = arith.mulf %117, %118 : vector<8x256xf32>
    %120 = vector.extract_strided_slice %103 {offsets = [0, 143], sizes = [8, 256], strides = [1, 1]} : vector<8x512xf32> to vector<8x256xf32>
    %121 = vector.broadcast %95 : vector<1x256xf32> to vector<8x256xf32>
    %122 = arith.mulf %120, %121 : vector<8x256xf32>
    %123 = vector.extract_strided_slice %103 {offsets = [0, 144], sizes = [8, 256], strides = [1, 1]} : vector<8x512xf32> to vector<8x256xf32>
    %124 = vector.broadcast %97 : vector<1x256xf32> to vector<8x256xf32>
    %125 = arith.mulf %123, %124 : vector<8x256xf32>
    %126 = vector.extract_strided_slice %103 {offsets = [0, 145], sizes = [8, 256], strides = [1, 1]} : vector<8x512xf32> to vector<8x256xf32>
    %127 = vector.broadcast %100 : vector<1x256xf32> to vector<8x256xf32>
    %128 = arith.mulf %126, %127 : vector<8x256xf32>
    %129 = tpu.concatenate %106, %109, %112, %115, %116, %119, %122, %125, %128 in 0 : vector<8x256xf32>, vector<8x256xf32>, vector<8x256xf32>, vector<8x256xf32>, vector<8x256xf32>, vector<8x256xf32>, vector<8x256xf32>, vector<8x256xf32>, vector<8x256xf32> -> vector<72x256xf32>
    %130 = arith.truncf %129 : vector<72x256xf32> to vector<72x256xbf16>
    %c0_18 = arith.constant 0 : index
    %c0_19 = arith.constant 0 : index
    %131 = vector.load %arg2[%c0_18, %c0_19] : memref<64x72xbf16, #tpu.memory_space<vmem>>, vector<64x72xbf16>
    %cst_20 = arith.constant dense<0.000000e+00> : vector<64x256xf32>
    %132 = tpu.matmul %131, %130, %cst_20 {dimension_numbers = #tpu.dot_dimension_numbers<[1], [0], [0], [1], [0, 0, 1, 1], [], []>} : vector<64x72xbf16>, vector<72x256xbf16>, vector<64x256xf32> -> vector<64x256xf32>
    %c0_21 = arith.constant 0 : index
    %c0_22 = arith.constant 0 : index
    %133 = vector.load %arg3[%c0_21, %c0_22] : memref<64x1xf32, #tpu.memory_space<vmem>>, vector<64x1xf32>
    %134 = vector.broadcast %133 : vector<64x1xf32> to vector<64x256xf32>
    %135 = arith.addf %132, %134 : vector<64x256xf32>
    %cst_23 = arith.constant 0.000000e+00 : f32
    %136 = vector.broadcast %cst_23 : f32 to vector<64x256xf32>
    %137 = arith.maximumf %135, %136 : vector<64x256xf32>
    %c0_24 = arith.constant 0 : index
    %c128_25 = arith.constant 128 : index
    %138 = vector.load %arg19[%c0_24, %c128_25] : memref<64x512xf32, #tpu.memory_space<vmem>>, vector<64x256xf32>
    tpu.vector_store %arg19[%c0_24, %c128_25], %137 {strides = array<i32>} : memref<64x512xf32, #tpu.memory_space<vmem>>, vector<64x256xf32>,
    %c0_26 = arith.constant 0 : index
    %c0_27 = arith.constant 0 : index
    %139 = vector.load %arg19[%c0_26, %c0_27] : memref<64x512xf32, #tpu.memory_space<vmem>>, vector<64x512xf32>
    %140 = vector.extract_strided_slice %139 {offsets = [0, 128], sizes = [64, 256], strides = [1, 1]} : vector<64x512xf32> to vector<64x256xf32>
    %141 = vector.extract_strided_slice %139 {offsets = [0, 129], sizes = [64, 256], strides = [1, 1]} : vector<64x512xf32> to vector<64x256xf32>
    %142 = arith.maximumf %140, %141 : vector<64x256xf32>
    %143 = vector.extract_strided_slice %139 {offsets = [0, 144], sizes = [64, 256], strides = [1, 1]} : vector<64x512xf32> to vector<64x256xf32>
    %144 = vector.extract_strided_slice %139 {offsets = [0, 145], sizes = [64, 256], strides = [1, 1]} : vector<64x512xf32> to vector<64x256xf32>
    %145 = arith.maximumf %143, %144 : vector<64x256xf32>
    %146 = arith.maximumf %142, %145 : vector<64x256xf32>
    %c0_28 = arith.constant 0 : index
    %c0_29 = arith.constant 0 : index
    %147 = vector.load %arg14[%c0_28, %c0_29] : memref<256x64xbf16, #tpu.memory_space<vmem>>, vector<256x64xbf16>
    %148 = arith.extf %147 : vector<256x64xbf16> to vector<256x64xf32>
    %cst_30 = arith.constant dense<0.000000e+00> : vector<64x64xf32>
    %149 = tpu.matmul %146, %148, %cst_30 {dimension_numbers = #tpu.dot_dimension_numbers<[1], [0], [0], [1], [0, 0, 1, 1], [], []>} : vector<64x256xf32>, vector<256x64xf32>, vector<64x64xf32> -> vector<64x64xf32>
    %c0_31 = arith.constant 0 : index
    %c128_32 = arith.constant 128 : index
    %150 = vector.load %arg19[%c0_31, %c128_32] : memref<64x512xf32, #tpu.memory_space<vmem>>, vector<64x64xf32>
    tpu.vector_store %arg19[%c0_31, %c128_32], %149 {strides = array<i32>} : memref<64x512xf32, #tpu.memory_space<vmem>>, vector<64x64xf32>,
    %c0_33 = arith.constant 0 : index
    %c0_34 = arith.constant 0 : index
    %151 = vector.load %arg19[%c0_33, %c0_34] : memref<64x512xf32, #tpu.memory_space<vmem>>, vector<64x320xf32>
    %152 = vector.extract_strided_slice %151 {offsets = [0, 119], sizes = [64, 64], strides = [1, 1]} : vector<64x320xf32> to vector<64x64xf32>
    %153 = vector.broadcast %50 : vector<1x64xf32> to vector<64x64xf32>
    %154 = arith.mulf %152, %153 : vector<64x64xf32>
    %155 = vector.extract_strided_slice %151 {offsets = [0, 120], sizes = [64, 64], strides = [1, 1]} : vector<64x320xf32> to vector<64x64xf32>
    %156 = vector.broadcast %52 : vector<1x64xf32> to vector<64x64xf32>
    %157 = arith.mulf %155, %156 : vector<64x64xf32>
    %158 = vector.extract_strided_slice %151 {offsets = [0, 121], sizes = [64, 64], strides = [1, 1]} : vector<64x320xf32> to vector<64x64xf32>
    %159 = vector.broadcast %55 : vector<1x64xf32> to vector<64x64xf32>
    %160 = arith.mulf %158, %159 : vector<64x64xf32>
    %161 = vector.extract_strided_slice %151 {offsets = [0, 127], sizes = [64, 64], strides = [1, 1]} : vector<64x320xf32> to vector<64x64xf32>
    %162 = vector.broadcast %57 : vector<1x64xf32> to vector<64x64xf32>
    %163 = arith.mulf %161, %162 : vector<64x64xf32>
    %164 = vector.extract_strided_slice %151 {offsets = [0, 128], sizes = [64, 64], strides = [1, 1]} : vector<64x320xf32> to vector<64x64xf32>
    %165 = vector.extract_strided_slice %151 {offsets = [0, 129], sizes = [64, 64], strides = [1, 1]} : vector<64x320xf32> to vector<64x64xf32>
    %166 = vector.broadcast %59 : vector<1x64xf32> to vector<64x64xf32>
    %167 = arith.mulf %165, %166 : vector<64x64xf32>
    %168 = vector.extract_strided_slice %151 {offsets = [0, 135], sizes = [64, 64], strides = [1, 1]} : vector<64x320xf32> to vector<64x64xf32>
    %169 = vector.broadcast %62 : vector<1x64xf32> to vector<64x64xf32>
    %170 = arith.mulf %168, %169 : vector<64x64xf32>
    %171 = vector.extract_strided_slice %151 {offsets = [0, 136], sizes = [64, 64], strides = [1, 1]} : vector<64x320xf32> to vector<64x64xf32>
    %172 = vector.broadcast %64 : vector<1x64xf32> to vector<64x64xf32>
    %173 = arith.mulf %171, %172 : vector<64x64xf32>
    %174 = vector.extract_strided_slice %151 {offsets = [0, 137], sizes = [64, 64], strides = [1, 1]} : vector<64x320xf32> to vector<64x64xf32>
    %175 = vector.broadcast %67 : vector<1x64xf32> to vector<64x64xf32>
    %176 = arith.mulf %174, %175 : vector<64x64xf32>
    %177 = tpu.concatenate %154, %157, %160, %163, %164, %167, %170, %173, %176 in 0 : vector<64x64xf32>, vector<64x64xf32>, vector<64x64xf32>, vector<64x64xf32>, vector<64x64xf32>, vector<64x64xf32>, vector<64x64xf32>, vector<64x64xf32>, vector<64x64xf32> -> vector<576x64xf32>
    %178 = arith.truncf %177 : vector<576x64xf32> to vector<576x64xbf16>
    %c0_35 = arith.constant 0 : index
    %c0_36 = arith.constant 0 : index
    %179 = vector.load %arg4[%c0_35, %c0_36] : memref<16x576xbf16, #tpu.memory_space<vmem>>, vector<16x576xbf16>
    %cst_37 = arith.constant dense<0.000000e+00> : vector<16x64xf32>
    %180 = tpu.matmul %179, %178, %cst_37 {dimension_numbers = #tpu.dot_dimension_numbers<[1], [0], [0], [1], [0, 0, 1, 1], [], []>} : vector<16x576xbf16>, vector<576x64xbf16>, vector<16x64xf32> -> vector<16x64xf32>
    %c0_38 = arith.constant 0 : index
    %c0_39 = arith.constant 0 : index
    %181 = vector.load %arg5[%c0_38, %c0_39] : memref<16x1xf32, #tpu.memory_space<vmem>>, vector<16x1xf32>
    %182 = vector.broadcast %181 : vector<16x1xf32> to vector<16x64xf32>
    %183 = arith.addf %180, %182 : vector<16x64xf32>
    %cst_40 = arith.constant 0.000000e+00 : f32
    %184 = vector.broadcast %cst_40 : f32 to vector<16x64xf32>
    %185 = arith.maximumf %183, %184 : vector<16x64xf32>
    %c0_41 = arith.constant 0 : index
    %c128_42 = arith.constant 128 : index
    %186 = vector.load %arg19[%c0_41, %c128_42] : memref<64x512xf32, #tpu.memory_space<vmem>>, vector<16x64xf32>
    tpu.vector_store %arg19[%c0_41, %c128_42], %185 {strides = array<i32>} : memref<64x512xf32, #tpu.memory_space<vmem>>, vector<16x64xf32>,
    %c0_43 = arith.constant 0 : index
    %c0_44 = arith.constant 0 : index
    %187 = vector.load %arg19[%c0_43, %c0_44] : memref<64x512xf32, #tpu.memory_space<vmem>>, vector<16x320xf32>
    %188 = vector.extract_strided_slice %187 {offsets = [0, 128], sizes = [16, 64], strides = [1, 1]} : vector<16x320xf32> to vector<16x64xf32>
    %189 = vector.extract_strided_slice %187 {offsets = [0, 129], sizes = [16, 64], strides = [1, 1]} : vector<16x320xf32> to vector<16x64xf32>
    %190 = arith.maximumf %188, %189 : vector<16x64xf32>
    %191 = vector.extract_strided_slice %187 {offsets = [0, 136], sizes = [16, 64], strides = [1, 1]} : vector<16x320xf32> to vector<16x64xf32>
    %192 = vector.extract_strided_slice %187 {offsets = [0, 137], sizes = [16, 64], strides = [1, 1]} : vector<16x320xf32> to vector<16x64xf32>
    %193 = arith.maximumf %191, %192 : vector<16x64xf32>
    %194 = arith.maximumf %190, %193 : vector<16x64xf32>
    %c0_45 = arith.constant 0 : index
    %c0_46 = arith.constant 0 : index
    %195 = vector.load %arg15[%c0_45, %c0_46] : memref<64x16xbf16, #tpu.memory_space<vmem>>, vector<64x16xbf16>
    %196 = arith.extf %195 : vector<64x16xbf16> to vector<64x16xf32>
    %cst_47 = arith.constant dense<0.000000e+00> : vector<16x16xf32>
    %197 = tpu.matmul %194, %196, %cst_47 {dimension_numbers = #tpu.dot_dimension_numbers<[1], [0], [0], [1], [0, 0, 1, 1], [], []>} : vector<16x64xf32>, vector<64x16xf32>, vector<16x16xf32> -> vector<16x16xf32>
    %c0_48 = arith.constant 0 : index
    %c128_49 = arith.constant 128 : index
    %198 = vector.load %arg19[%c0_48, %c128_49] : memref<64x512xf32, #tpu.memory_space<vmem>>, vector<16x16xf32>
    tpu.vector_store %arg19[%c0_48, %c128_49], %197 {strides = array<i32>} : memref<64x512xf32, #tpu.memory_space<vmem>>, vector<16x16xf32>,
    %c0_50 = arith.constant 0 : index
    %c0_51 = arith.constant 0 : index
    %199 = vector.load %arg19[%c0_50, %c0_51] : memref<64x512xf32, #tpu.memory_space<vmem>>, vector<16x272xf32>
    %200 = vector.extract_strided_slice %199 {offsets = [0, 123], sizes = [16, 16], strides = [1, 1]} : vector<16x272xf32> to vector<16x16xf32>
    %201 = vector.broadcast %17 : vector<1x16xf32> to vector<16x16xf32>
    %202 = arith.mulf %200, %201 : vector<16x16xf32>
    %203 = vector.extract_strided_slice %199 {offsets = [0, 124], sizes = [16, 16], strides = [1, 1]} : vector<16x272xf32> to vector<16x16xf32>
    %204 = vector.broadcast %19 : vector<1x16xf32> to vector<16x16xf32>
    %205 = arith.mulf %203, %204 : vector<16x16xf32>
    %206 = vector.extract_strided_slice %199 {offsets = [0, 125], sizes = [16, 16], strides = [1, 1]} : vector<16x272xf32> to vector<16x16xf32>
    %207 = vector.broadcast %22 : vector<1x16xf32> to vector<16x16xf32>
    %208 = arith.mulf %206, %207 : vector<16x16xf32>
    %209 = vector.extract_strided_slice %199 {offsets = [0, 127], sizes = [16, 16], strides = [1, 1]} : vector<16x272xf32> to vector<16x16xf32>
    %210 = vector.broadcast %24 : vector<1x16xf32> to vector<16x16xf32>
    %211 = arith.mulf %209, %210 : vector<16x16xf32>
    %212 = vector.extract_strided_slice %199 {offsets = [0, 128], sizes = [16, 16], strides = [1, 1]} : vector<16x272xf32> to vector<16x16xf32>
    %213 = vector.extract_strided_slice %199 {offsets = [0, 129], sizes = [16, 16], strides = [1, 1]} : vector<16x272xf32> to vector<16x16xf32>
    %214 = vector.broadcast %26 : vector<1x16xf32> to vector<16x16xf32>
    %215 = arith.mulf %213, %214 : vector<16x16xf32>
    %216 = vector.extract_strided_slice %199 {offsets = [0, 131], sizes = [16, 16], strides = [1, 1]} : vector<16x272xf32> to vector<16x16xf32>
    %217 = vector.broadcast %29 : vector<1x16xf32> to vector<16x16xf32>
    %218 = arith.mulf %216, %217 : vector<16x16xf32>
    %219 = vector.extract_strided_slice %199 {offsets = [0, 132], sizes = [16, 16], strides = [1, 1]} : vector<16x272xf32> to vector<16x16xf32>
    %220 = vector.broadcast %31 : vector<1x16xf32> to vector<16x16xf32>
    %221 = arith.mulf %219, %220 : vector<16x16xf32>
    %222 = vector.extract_strided_slice %199 {offsets = [0, 133], sizes = [16, 16], strides = [1, 1]} : vector<16x272xf32> to vector<16x16xf32>
    %223 = vector.broadcast %34 : vector<1x16xf32> to vector<16x16xf32>
    %224 = arith.mulf %222, %223 : vector<16x16xf32>
    %225 = tpu.concatenate %202, %205, %208, %211, %212, %215, %218, %221, %224 in 0 : vector<16x16xf32>, vector<16x16xf32>, vector<16x16xf32>, vector<16x16xf32>, vector<16x16xf32>, vector<16x16xf32>, vector<16x16xf32>, vector<16x16xf32>, vector<16x16xf32> -> vector<144x16xf32>
    %226 = arith.truncf %225 : vector<144x16xf32> to vector<144x16xbf16>
    %c0_52 = arith.constant 0 : index
    %c0_53 = arith.constant 0 : index
    %227 = vector.load %arg6[%c0_52, %c0_53] : memref<16x144xbf16, #tpu.memory_space<vmem>>, vector<16x144xbf16>
    %cst_54 = arith.constant dense<0.000000e+00> : vector<16x16xf32>
    %228 = tpu.matmul %227, %226, %cst_54 {dimension_numbers = #tpu.dot_dimension_numbers<[1], [0], [0], [1], [0, 0, 1, 1], [], []>} : vector<16x144xbf16>, vector<144x16xbf16>, vector<16x16xf32> -> vector<16x16xf32>
    %c0_55 = arith.constant 0 : index
    %c0_56 = arith.constant 0 : index
    %229 = vector.load %arg7[%c0_55, %c0_56] : memref<16x1xf32, #tpu.memory_space<vmem>>, vector<16x1xf32>
    %230 = vector.broadcast %229 : vector<16x1xf32> to vector<16x16xf32>
    %231 = arith.addf %228, %230 : vector<16x16xf32>
    %cst_57 = arith.constant 0.000000e+00 : f32
    %232 = vector.broadcast %cst_57 : f32 to vector<16x16xf32>
    %233 = arith.maximumf %231, %232 : vector<16x16xf32>
    %c0_58 = arith.constant 0 : index
    %c128_59 = arith.constant 128 : index
    %234 = vector.load %arg19[%c0_58, %c128_59] : memref<64x512xf32, #tpu.memory_space<vmem>>, vector<16x16xf32>
    tpu.vector_store %arg19[%c0_58, %c128_59], %233 {strides = array<i32>} : memref<64x512xf32, #tpu.memory_space<vmem>>, vector<16x16xf32>,
    %c0_60 = arith.constant 0 : index
    %c0_61 = arith.constant 0 : index
    %235 = vector.load %arg19[%c0_60, %c0_61] : memref<64x512xf32, #tpu.memory_space<vmem>>, vector<16x272xf32>
    %236 = vector.extract_strided_slice %235 {offsets = [0, 123], sizes = [16, 16], strides = [1, 1]} : vector<16x272xf32> to vector<16x16xf32>
    %237 = vector.broadcast %17 : vector<1x16xf32> to vector<16x16xf32>
    %238 = arith.mulf %236, %237 : vector<16x16xf32>
    %239 = vector.extract_strided_slice %235 {offsets = [0, 124], sizes = [16, 16], strides = [1, 1]} : vector<16x272xf32> to vector<16x16xf32>
    %240 = vector.broadcast %19 : vector<1x16xf32> to vector<16x16xf32>
    %241 = arith.mulf %239, %240 : vector<16x16xf32>
    %242 = vector.extract_strided_slice %235 {offsets = [0, 125], sizes = [16, 16], strides = [1, 1]} : vector<16x272xf32> to vector<16x16xf32>
    %243 = vector.broadcast %22 : vector<1x16xf32> to vector<16x16xf32>
    %244 = arith.mulf %242, %243 : vector<16x16xf32>
    %245 = vector.extract_strided_slice %235 {offsets = [0, 127], sizes = [16, 16], strides = [1, 1]} : vector<16x272xf32> to vector<16x16xf32>
    %246 = vector.broadcast %24 : vector<1x16xf32> to vector<16x16xf32>
    %247 = arith.mulf %245, %246 : vector<16x16xf32>
    %248 = vector.extract_strided_slice %235 {offsets = [0, 128], sizes = [16, 16], strides = [1, 1]} : vector<16x272xf32> to vector<16x16xf32>
    %249 = vector.extract_strided_slice %235 {offsets = [0, 129], sizes = [16, 16], strides = [1, 1]} : vector<16x272xf32> to vector<16x16xf32>
    %250 = vector.broadcast %26 : vector<1x16xf32> to vector<16x16xf32>
    %251 = arith.mulf %249, %250 : vector<16x16xf32>
    %252 = vector.extract_strided_slice %235 {offsets = [0, 131], sizes = [16, 16], strides = [1, 1]} : vector<16x272xf32> to vector<16x16xf32>
    %253 = vector.broadcast %29 : vector<1x16xf32> to vector<16x16xf32>
    %254 = arith.mulf %252, %253 : vector<16x16xf32>
    %255 = vector.extract_strided_slice %235 {offsets = [0, 132], sizes = [16, 16], strides = [1, 1]} : vector<16x272xf32> to vector<16x16xf32>
    %256 = vector.broadcast %31 : vector<1x16xf32> to vector<16x16xf32>
    %257 = arith.mulf %255, %256 : vector<16x16xf32>
    %258 = vector.extract_strided_slice %235 {offsets = [0, 133], sizes = [16, 16], strides = [1, 1]} : vector<16x272xf32> to vector<16x16xf32>
    %259 = vector.broadcast %34 : vector<1x16xf32> to vector<16x16xf32>
    %260 = arith.mulf %258, %259 : vector<16x16xf32>
    %261 = tpu.concatenate %238, %241, %244, %247, %248, %251, %254, %257, %260 in 0 : vector<16x16xf32>, vector<16x16xf32>, vector<16x16xf32>, vector<16x16xf32>, vector<16x16xf32>, vector<16x16xf32>, vector<16x16xf32>, vector<16x16xf32>, vector<16x16xf32> -> vector<144x16xf32>
    %262 = arith.truncf %261 : vector<144x16xf32> to vector<144x16xbf16>
    %c0_62 = arith.constant 0 : index
    %c0_63 = arith.constant 0 : index
    %263 = vector.load %arg8[%c0_62, %c0_63] : memref<16x144xbf16, #tpu.memory_space<vmem>>, vector<16x144xbf16>
    %cst_64 = arith.constant dense<0.000000e+00> : vector<16x16xf32>
    %264 = tpu.matmul %263, %262, %cst_64 {dimension_numbers = #tpu.dot_dimension_numbers<[1], [0], [0], [1], [0, 0, 1, 1], [], []>} : vector<16x144xbf16>, vector<144x16xbf16>, vector<16x16xf32> -> vector<16x16xf32>
    %c0_65 = arith.constant 0 : index
    %c0_66 = arith.constant 0 : index
    %265 = vector.load %arg9[%c0_65, %c0_66] : memref<16x1xf32, #tpu.memory_space<vmem>>, vector<16x1xf32>
    %266 = vector.broadcast %265 : vector<16x1xf32> to vector<16x16xf32>
    %267 = arith.addf %264, %266 : vector<16x16xf32>
    %cst_67 = arith.constant 0.000000e+00 : f32
    %268 = vector.broadcast %cst_67 : f32 to vector<16x16xf32>
    %269 = arith.maximumf %267, %268 : vector<16x16xf32>
    %c0_68 = arith.constant 0 : index
    %c0_69 = arith.constant 0 : index
    %270 = vector.load %arg16[%c0_68, %c0_69] : memref<16x64xbf16, #tpu.memory_space<vmem>>, vector<16x64xbf16>
    %271 = arith.extf %270 : vector<16x64xbf16> to vector<16x64xf32>
    %cst_70 = arith.constant dense<0.000000e+00> : vector<16x64xf32>
    %272 = tpu.matmul %269, %271, %cst_70 {dimension_numbers = #tpu.dot_dimension_numbers<[1], [0], [0], [1], [0, 0, 1, 1], [], []>} : vector<16x16xf32>, vector<16x64xf32>, vector<16x64xf32> -> vector<16x64xf32>
    %c0_71 = arith.constant 0 : index
    %c128_72 = arith.constant 128 : index
    %273 = vector.load %arg19[%c0_71, %c128_72] : memref<64x512xf32, #tpu.memory_space<vmem>>, vector<16x64xf32>
    tpu.vector_store %arg19[%c0_71, %c128_72], %272 {strides = array<i32>} : memref<64x512xf32, #tpu.memory_space<vmem>>, vector<16x64xf32>,
    %c0_73 = arith.constant 0 : index
    %c0_74 = arith.constant 0 : index
    %274 = vector.load %arg19[%c0_73, %c0_74] : memref<64x512xf32, #tpu.memory_space<vmem>>, vector<16x320xf32>
    %275 = vector.extract_strided_slice %274 {offsets = [0, 119], sizes = [16, 64], strides = [1, 1]} : vector<16x320xf32> to vector<16x64xf32>
    %276 = vector.broadcast %50 : vector<1x64xf32> to vector<16x64xf32>
    %277 = arith.mulf %275, %276 : vector<16x64xf32>
    %278 = vector.extract_strided_slice %274 {offsets = [0, 120], sizes = [16, 64], strides = [1, 1]} : vector<16x320xf32> to vector<16x64xf32>
    %279 = vector.broadcast %52 : vector<1x64xf32> to vector<16x64xf32>
    %280 = arith.mulf %278, %279 : vector<16x64xf32>
    %281 = vector.extract_strided_slice %274 {offsets = [0, 121], sizes = [16, 64], strides = [1, 1]} : vector<16x320xf32> to vector<16x64xf32>
    %282 = vector.broadcast %55 : vector<1x64xf32> to vector<16x64xf32>
    %283 = arith.mulf %281, %282 : vector<16x64xf32>
    %284 = vector.extract_strided_slice %274 {offsets = [0, 127], sizes = [16, 64], strides = [1, 1]} : vector<16x320xf32> to vector<16x64xf32>
    %285 = vector.broadcast %57 : vector<1x64xf32> to vector<16x64xf32>
    %286 = arith.mulf %284, %285 : vector<16x64xf32>
    %287 = vector.extract_strided_slice %274 {offsets = [0, 128], sizes = [16, 64], strides = [1, 1]} : vector<16x320xf32> to vector<16x64xf32>
    %288 = vector.extract_strided_slice %274 {offsets = [0, 129], sizes = [16, 64], strides = [1, 1]} : vector<16x320xf32> to vector<16x64xf32>
    %289 = vector.broadcast %59 : vector<1x64xf32> to vector<16x64xf32>
    %290 = arith.mulf %288, %289 : vector<16x64xf32>
    %291 = vector.extract_strided_slice %274 {offsets = [0, 135], sizes = [16, 64], strides = [1, 1]} : vector<16x320xf32> to vector<16x64xf32>
    %292 = vector.broadcast %62 : vector<1x64xf32> to vector<16x64xf32>
    %293 = arith.mulf %291, %292 : vector<16x64xf32>
    %294 = vector.extract_strided_slice %274 {offsets = [0, 136], sizes = [16, 64], strides = [1, 1]} : vector<16x320xf32> to vector<16x64xf32>
    %295 = vector.broadcast %64 : vector<1x64xf32> to vector<16x64xf32>
    %296 = arith.mulf %294, %295 : vector<16x64xf32>
    %297 = vector.extract_strided_slice %274 {offsets = [0, 137], sizes = [16, 64], strides = [1, 1]} : vector<16x320xf32> to vector<16x64xf32>
    %298 = vector.broadcast %67 : vector<1x64xf32> to vector<16x64xf32>
    %299 = arith.mulf %297, %298 : vector<16x64xf32>
    %300 = tpu.concatenate %277, %280, %283, %286, %287, %290, %293, %296, %299 in 0 : vector<16x64xf32>, vector<16x64xf32>, vector<16x64xf32>, vector<16x64xf32>, vector<16x64xf32>, vector<16x64xf32>, vector<16x64xf32>, vector<16x64xf32>, vector<16x64xf32> -> vector<144x64xf32>
    %301 = arith.truncf %300 : vector<144x64xf32> to vector<144x64xbf16>
    %c0_75 = arith.constant 0 : index
    %c0_76 = arith.constant 0 : index
    %302 = vector.load %arg10[%c0_75, %c0_76] : memref<64x144xbf16, #tpu.memory_space<vmem>>, vector<64x144xbf16>
    %cst_77 = arith.constant dense<0.000000e+00> : vector<64x64xf32>
    %303 = tpu.matmul %302, %301, %cst_77 {dimension_numbers = #tpu.dot_dimension_numbers<[1], [0], [0], [1], [0, 0, 1, 1], [], []>} : vector<64x144xbf16>, vector<144x64xbf16>, vector<64x64xf32> -> vector<64x64xf32>
    %c0_78 = arith.constant 0 : index
    %c0_79 = arith.constant 0 : index
    %304 = vector.load %arg11[%c0_78, %c0_79] : memref<64x1xf32, #tpu.memory_space<vmem>>, vector<64x1xf32>
    %305 = vector.broadcast %304 : vector<64x1xf32> to vector<64x64xf32>
    %306 = arith.addf %303, %305 : vector<64x64xf32>
    %cst_80 = arith.constant 0.000000e+00 : f32
    %307 = vector.broadcast %cst_80 : f32 to vector<64x64xf32>
    %308 = arith.maximumf %306, %307 : vector<64x64xf32>
    %c0_81 = arith.constant 0 : index
    %c0_82 = arith.constant 0 : index
    %309 = vector.load %arg17[%c0_81, %c0_82] : memref<64x256xbf16, #tpu.memory_space<vmem>>, vector<64x256xbf16>
    %310 = arith.extf %309 : vector<64x256xbf16> to vector<64x256xf32>
    %cst_83 = arith.constant dense<0.000000e+00> : vector<64x256xf32>
    %311 = tpu.matmul %308, %310, %cst_83 {dimension_numbers = #tpu.dot_dimension_numbers<[1], [0], [0], [1], [0, 0, 1, 1], [], []>} : vector<64x64xf32>, vector<64x256xf32>, vector<64x256xf32> -> vector<64x256xf32>
    %c0_84 = arith.constant 0 : index
    %c128_85 = arith.constant 128 : index
    %312 = vector.load %arg19[%c0_84, %c128_85] : memref<64x512xf32, #tpu.memory_space<vmem>>, vector<64x256xf32>
    tpu.vector_store %arg19[%c0_84, %c128_85], %311 {strides = array<i32>} : memref<64x512xf32, #tpu.memory_space<vmem>>, vector<64x256xf32>,
    %c0_86 = arith.constant 0 : index
    %c0_87 = arith.constant 0 : index
    %313 = vector.load %arg19[%c0_86, %c0_87] : memref<64x512xf32, #tpu.memory_space<vmem>>, vector<64x512xf32>
    %314 = vector.extract_strided_slice %313 {offsets = [0, 111], sizes = [64, 256], strides = [1, 1]} : vector<64x512xf32> to vector<64x256xf32>
    %315 = vector.broadcast %83 : vector<1x256xf32> to vector<64x256xf32>
    %316 = arith.mulf %314, %315 : vector<64x256xf32>
    %317 = vector.extract_strided_slice %313 {offsets = [0, 112], sizes = [64, 256], strides = [1, 1]} : vector<64x512xf32> to vector<64x256xf32>
    %318 = vector.broadcast %85 : vector<1x256xf32> to vector<64x256xf32>
    %319 = arith.mulf %317, %318 : vector<64x256xf32>
    %320 = vector.extract_strided_slice %313 {offsets = [0, 113], sizes = [64, 256], strides = [1, 1]} : vector<64x512xf32> to vector<64x256xf32>
    %321 = vector.broadcast %88 : vector<1x256xf32> to vector<64x256xf32>
    %322 = arith.mulf %320, %321 : vector<64x256xf32>
    %323 = vector.extract_strided_slice %313 {offsets = [0, 127], sizes = [64, 256], strides = [1, 1]} : vector<64x512xf32> to vector<64x256xf32>
    %324 = vector.broadcast %90 : vector<1x256xf32> to vector<64x256xf32>
    %325 = arith.mulf %323, %324 : vector<64x256xf32>
    %326 = vector.extract_strided_slice %313 {offsets = [0, 128], sizes = [64, 256], strides = [1, 1]} : vector<64x512xf32> to vector<64x256xf32>
    %327 = vector.extract_strided_slice %313 {offsets = [0, 129], sizes = [64, 256], strides = [1, 1]} : vector<64x512xf32> to vector<64x256xf32>
    %328 = vector.broadcast %92 : vector<1x256xf32> to vector<64x256xf32>
    %329 = arith.mulf %327, %328 : vector<64x256xf32>
    %330 = vector.extract_strided_slice %313 {offsets = [0, 143], sizes = [64, 256], strides = [1, 1]} : vector<64x512xf32> to vector<64x256xf32>
    %331 = vector.broadcast %95 : vector<1x256xf32> to vector<64x256xf32>
    %332 = arith.mulf %330, %331 : vector<64x256xf32>
    %333 = vector.extract_strided_slice %313 {offsets = [0, 144], sizes = [64, 256], strides = [1, 1]} : vector<64x512xf32> to vector<64x256xf32>
    %334 = vector.broadcast %97 : vector<1x256xf32> to vector<64x256xf32>
    %335 = arith.mulf %333, %334 : vector<64x256xf32>
    %336 = vector.extract_strided_slice %313 {offsets = [0, 145], sizes = [64, 256], strides = [1, 1]} : vector<64x512xf32> to vector<64x256xf32>
    %337 = vector.broadcast %100 : vector<1x256xf32> to vector<64x256xf32>
    %338 = arith.mulf %336, %337 : vector<64x256xf32>
    %339 = tpu.concatenate %316, %319, %322, %325, %326, %329, %332, %335, %338 in 0 : vector<64x256xf32>, vector<64x256xf32>, vector<64x256xf32>, vector<64x256xf32>, vector<64x256xf32>, vector<64x256xf32>, vector<64x256xf32>, vector<64x256xf32>, vector<64x256xf32> -> vector<576x256xf32>
    %340 = arith.truncf %339 : vector<576x256xf32> to vector<576x256xbf16>
    %c0_88 = arith.constant 0 : index
    %c0_89 = arith.constant 0 : index
    %341 = vector.load %arg12[%c0_88, %c0_89] : memref<8x576xbf16, #tpu.memory_space<vmem>>, vector<8x576xbf16>
    %cst_90 = arith.constant dense<0.000000e+00> : vector<8x256xf32>
    %342 = tpu.matmul %341, %340, %cst_90 {dimension_numbers = #tpu.dot_dimension_numbers<[1], [0], [0], [1], [0, 0, 1, 1], [], []>} : vector<8x576xbf16>, vector<576x256xbf16>, vector<8x256xf32> -> vector<8x256xf32>
    %c0_91 = arith.constant 0 : index
    %c0_92 = arith.constant 0 : index
    %343 = vector.load %arg13[%c0_91, %c0_92] : memref<8x1xf32, #tpu.memory_space<vmem>>, vector<8x1xf32>
    %344 = vector.broadcast %343 : vector<8x1xf32> to vector<8x256xf32>
    %345 = arith.addf %342, %344 : vector<8x256xf32>
    %cst_93 = arith.constant 0.000000e+00 : f32
    %346 = vector.broadcast %cst_93 : f32 to vector<8x256xf32>
    %347 = arith.maximumf %345, %346 : vector<8x256xf32>
    %c0_94 = arith.constant 0 : index
    %c0_95 = arith.constant 0 : index
    %348 = vector.load %arg18[%c0_94, %c0_95] : memref<8x256xf32, #tpu.memory_space<vmem>>, vector<8x256xf32>
    tpu.vector_store %arg18[%c0_94, %c0_95], %347 {strides = array<i32>} : memref<8x256xf32, #tpu.memory_space<vmem>>, vector<8x256xf32>,
    return
  }
  func.func @transform_0(%arg0: i32) -> (i32, i32) {
    %c0_i32 = arith.constant 0 : i32
    %c0_i32_0 = arith.constant 0 : i32
    %c0_i32_1 = arith.constant 0 : i32
    return %c0_i32, %c0_i32_0 : i32, i32
  }
  func.func @transform_1(%arg0: i32) -> (i32, i32) {
    %c0_i32 = arith.constant 0 : i32
    %c0_i32_0 = arith.constant 0 : i32
    %c0_i32_1 = arith.constant 0 : i32
    return %c0_i32, %c0_i32_0 : i32, i32
  }
  func.func @transform_2(%arg0: i32) -> (i32, i32) {
    %c0_i32 = arith.constant 0 : i32
    %c0_i32_0 = arith.constant 0 : i32
    %c0_i32_1 = arith.constant 0 : i32
    return %c0_i32, %c0_i32_0 : i32, i32
  }
  func.func @transform_3(%arg0: i32) -> (i32, i32) {
    %c0_i32 = arith.constant 0 : i32
    %c0_i32_0 = arith.constant 0 : i32
    %c0_i32_1 = arith.constant 0 : i32
    return %c0_i32, %c0_i32_0 : i32, i32
  }
  func.func @transform_4(%arg0: i32) -> (i32, i32) {
    %c0_i32 = arith.constant 0 : i32
    %c0_i32_0 = arith.constant 0 : i32
    %c0_i32_1 = arith.constant 0 : i32
    return %c0_i32, %c0_i32_0 : i32, i32
  }
  func.func @transform_5(%arg0: i32) -> (i32, i32) {
    %c0_i32 = arith.constant 0 : i32
    %c0_i32_0 = arith.constant 0 : i32
    %c0_i32_1 = arith.constant 0 : i32
    return %c0_i32, %c0_i32_0 : i32, i32
  }
  func.func @transform_6(%arg0: i32) -> (i32, i32) {
    %c0_i32 = arith.constant 0 : i32
    %c0_i32_0 = arith.constant 0 : i32
    %c0_i32_1 = arith.constant 0 : i32
    return %c0_i32, %c0_i32_0 : i32, i32
  }
  func.func @transform_7(%arg0: i32) -> (i32, i32) {
    %c0_i32 = arith.constant 0 : i32
    %c0_i32_0 = arith.constant 0 : i32
    %c0_i32_1 = arith.constant 0 : i32
    return %c0_i32, %c0_i32_0 : i32, i32
  }
  func.func @transform_8(%arg0: i32) -> (i32, i32) {
    %c0_i32 = arith.constant 0 : i32
    %c0_i32_0 = arith.constant 0 : i32
    %c0_i32_1 = arith.constant 0 : i32
    return %c0_i32, %c0_i32_0 : i32, i32
  }
  func.func @transform_9(%arg0: i32) -> (i32, i32) {
    %c0_i32 = arith.constant 0 : i32
    %c0_i32_0 = arith.constant 0 : i32
    %c0_i32_1 = arith.constant 0 : i32
    return %c0_i32, %c0_i32_0 : i32, i32
  }
  func.func @transform_10(%arg0: i32) -> (i32, i32) {
    %c0_i32 = arith.constant 0 : i32
    %c0_i32_0 = arith.constant 0 : i32
    %c0_i32_1 = arith.constant 0 : i32
    return %c0_i32, %c0_i32_0 : i32, i32
  }
  func.func @transform_11(%arg0: i32) -> (i32, i32) {
    %c0_i32 = arith.constant 0 : i32
    %c0_i32_0 = arith.constant 0 : i32
    %c0_i32_1 = arith.constant 0 : i32
    return %c0_i32, %c0_i32_0 : i32, i32
  }
  func.func @transform_12(%arg0: i32) -> (i32, i32) {
    %c0_i32 = arith.constant 0 : i32
    %c0_i32_0 = arith.constant 0 : i32
    %c0_i32_1 = arith.constant 0 : i32
    return %c0_i32, %c0_i32_0 : i32, i32
  }
  func.func @transform_13(%arg0: i32) -> (i32, i32) {
    %c0_i32 = arith.constant 0 : i32
    %c0_i32_0 = arith.constant 0 : i32
    %c0_i32_1 = arith.constant 0 : i32
    return %c0_i32, %c0_i32_0 : i32, i32
  }
  func.func @transform_14(%arg0: i32) -> (i32, i32) {
    %c0_i32 = arith.constant 0 : i32
    %c0_i32_0 = arith.constant 0 : i32
    %c0_i32_1 = arith.constant 0 : i32
    return %c0_i32, %c0_i32_0 : i32, i32
  }
  func.func @transform_15(%arg0: i32) -> (i32, i32) {
    %c0_i32 = arith.constant 0 : i32
    %c0_i32_0 = arith.constant 0 : i32
    %c0_i32_1 = arith.constant 0 : i32
    return %c0_i32, %c0_i32_0 : i32, i32
  }
  func.func @transform_16(%arg0: i32) -> (i32, i32) {
    %c0_i32 = arith.constant 0 : i32
    %c0_i32_0 = arith.constant 0 : i32
    %c0_i32_1 = arith.constant 0 : i32
    return %c0_i32, %c0_i32_0 : i32, i32
  }
  func.func @transform_17(%arg0: i32) -> (i32, i32) {
    %c0_i32 = arith.constant 0 : i32
    %c0_i32_0 = arith.constant 0 : i32
    %c0_i32_1 = arith.constant 0 : i32
    return %c0_i32, %c0_i32_0 : i32, i32
  }
}

</mosaic_0001>

<llo_original>
// kernel: my_conv_autoencoder1.1
$region0: #{my_conv_autoencoder1.1}
  #allocation0 [shape = 'u32[]', space=smem, size = 0x4, offset = 0x4, fixed_abs, tag = 'smem constant byte address 0x4 - core index']
  #allocation1 [shape = 'u32[144,128]{1,0:T(1,128)}', space=vmem, size = 0x12000, scoped, tag = 'internal scratch']
  #allocation2 [shape = 'f32[64,512]{1,0:T(8,128)}', space=vmem, size = 0x20000, scoped, tag = 'scratch operand']
  %s0 = inlined_call_operand.vmem [shape: f32[8,256], index: 0, kind: input, shape index: {}]
  %s1 = inlined_call_operand.vmem [shape: bf16[64,72], index: 1, kind: input, shape index: {}]
  %s2 = inlined_call_operand.vmem [shape: f32[64,1], index: 2, kind: input, shape index: {}]
  %s3 = inlined_call_operand.vmem [shape: bf16[16,576], index: 3, kind: input, shape index: {}]
  %s4 = inlined_call_operand.vmem [shape: f32[16,1], index: 4, kind: input, shape index: {}]
  %s5 = inlined_call_operand.vmem [shape: bf16[16,144], index: 5, kind: input, shape index: {}]
  %s6 = inlined_call_operand.vmem [shape: f32[16,1], index: 6, kind: input, shape index: {}]
  %s7 = inlined_call_operand.vmem [shape: bf16[16,144], index: 7, kind: input, shape index: {}]
  %s8 = inlined_call_operand.vmem [shape: f32[16,1], index: 8, kind: input, shape index: {}]
  %s9 = inlined_call_operand.vmem [shape: bf16[64,144], index: 9, kind: input, shape index: {}]
  %s10 = inlined_call_operand.vmem [shape: f32[64,1], index: 10, kind: input, shape index: {}]
  %s11 = inlined_call_operand.vmem [shape: bf16[8,576], index: 11, kind: input, shape index: {}]
  %s12 = inlined_call_operand.hbm [shape: f32[8,1], index: 12, kind: input, shape index: {}]
  %s13 = inlined_call_operand.vmem [shape: bf16[256,64], index: 13, kind: input, shape index: {}]
  %s14 = inlined_call_operand.vmem [shape: bf16[64,16], index: 14, kind: input, shape index: {}]
  %s15 = inlined_call_operand.vmem [shape: bf16[16,64], index: 15, kind: input, shape index: {}]
  %s16 = inlined_call_operand.vmem [shape: bf16[64,256], index: 16, kind: input, shape index: {}]
  %s17 = inlined_call_operand.vmem [shape: f32[8,256], index: 17, kind: output, shape index: {}]
  %s18 = sld [smem:[#allocation0]]
  $region82: #{my_conv_autoencoder1.1} parent=0
    _
  %s20 = ssub.s32 1, %s18
  %s21 = scalar_select 0, %s20, %s18
  $region1: #{my_conv_autoencoder1.1} parent=0
    #allocation3 [shape = 'u8[4096]{0}', space=vmem, size = 0x1000, scoped, tag = 'input window, operand 12, single buffered']
    #allocation4 [shape = 's32[1]{0}', space=sflag, size = 0x4, scoped, tag = 'scoped memory for my_conv_autoencoder1.1']
    %22 = vsyncpa [#allocation4], 0
    // Predicated region
    $region2: #{my_conv_autoencoder1.1} parent=1 // pred_check
      _
    $region3: #{my_conv_autoencoder1.1} parent=1 // pred_check_branch
      %24 = sbr.rel (0) target = $region5
    $region4: #{my_conv_autoencoder1.1} parent=1 // pred_region
      _
    $region5: #{my_conv_autoencoder1.1} parent=1 // pred_fallthru
      _
    // Predicated region
    $region6: #{my_conv_autoencoder1.1} parent=1 // pred_check
      _
    $region7: #{my_conv_autoencoder1.1} parent=1 // pred_check_branch
      %26 = sbr.rel (0) target = $region9
    $region8: #{my_conv_autoencoder1.1} parent=1 // pred_region
      _
    $region9: #{my_conv_autoencoder1.1} parent=1 // pred_fallthru
      _
    // Predicated region
    $region10: #{my_conv_autoencoder1.1} parent=1 // pred_check
      _
    $region11: #{my_conv_autoencoder1.1} parent=1 // pred_check_branch
      %28 = sbr.rel (0) target = $region13
    $region12: #{my_conv_autoencoder1.1} parent=1 // pred_region
      _
    $region13: #{my_conv_autoencoder1.1} parent=1 // pred_fallthru
      _
    // Predicated region
    $region14: #{my_conv_autoencoder1.1} parent=1 // pred_check
      _
    $region15: #{my_conv_autoencoder1.1} parent=1 // pred_check_branch
      %30 = sbr.rel (0) target = $region17
    $region16: #{my_conv_autoencoder1.1} parent=1 // pred_region
      _
    $region17: #{my_conv_autoencoder1.1} parent=1 // pred_fallthru
      _
    // Predicated region
    $region18: #{my_conv_autoencoder1.1} parent=1 // pred_check
      _
    $region19: #{my_conv_autoencoder1.1} parent=1 // pred_check_branch
      %32 = sbr.rel (0) target = $region21
    $region20: #{my_conv_autoencoder1.1} parent=1 // pred_region
      _
    $region21: #{my_conv_autoencoder1.1} parent=1 // pred_fallthru
      _
    // Predicated region
    $region22: #{my_conv_autoencoder1.1} parent=1 // pred_check
      _
    $region23: #{my_conv_autoencoder1.1} parent=1 // pred_check_branch
      %34 = sbr.rel (0) target = $region25
    $region24: #{my_conv_autoencoder1.1} parent=1 // pred_region
      _
    $region25: #{my_conv_autoencoder1.1} parent=1 // pred_fallthru
      _
    // Predicated region
    $region26: #{my_conv_autoencoder1.1} parent=1 // pred_check
      _
    $region27: #{my_conv_autoencoder1.1} parent=1 // pred_check_branch
      %36 = sbr.rel (0) target = $region29
    $region28: #{my_conv_autoencoder1.1} parent=1 // pred_region
      _
    $region29: #{my_conv_autoencoder1.1} parent=1 // pred_fallthru
      _
    // Predicated region
    $region30: #{my_conv_autoencoder1.1} parent=1 // pred_check
      _
    $region31: #{my_conv_autoencoder1.1} parent=1 // pred_check_branch
      %38 = sbr.rel (0) target = $region33
    $region32: #{my_conv_autoencoder1.1} parent=1 // pred_region
      _
    $region33: #{my_conv_autoencoder1.1} parent=1 // pred_fallthru
      _
    // Predicated region
    $region34: #{my_conv_autoencoder1.1} parent=1 // pred_check
      _
    $region35: #{my_conv_autoencoder1.1} parent=1 // pred_check_branch
      %40 = sbr.rel (0) target = $region37
    $region36: #{my_conv_autoencoder1.1} parent=1 // pred_region
      _
    $region37: #{my_conv_autoencoder1.1} parent=1 // pred_fallthru
      _
    // Predicated region
    $region38: #{my_conv_autoencoder1.1} parent=1 // pred_check
      _
    $region39: #{my_conv_autoencoder1.1} parent=1 // pred_check_branch
      %42 = sbr.rel (0) target = $region41
    $region40: #{my_conv_autoencoder1.1} parent=1 // pred_region
      _
    $region41: #{my_conv_autoencoder1.1} parent=1 // pred_fallthru
      _
    // Predicated region
    $region42: #{my_conv_autoencoder1.1} parent=1 // pred_check
      _
    $region43: #{my_conv_autoencoder1.1} parent=1 // pred_check_branch
      %44 = sbr.rel (0) target = $region45
    $region44: #{my_conv_autoencoder1.1} parent=1 // pred_region
      _
    $region45: #{my_conv_autoencoder1.1} parent=1 // pred_fallthru
      _
    // Predicated region
    $region46: #{my_conv_autoencoder1.1} parent=1 // pred_check
      _
    $region47: #{my_conv_autoencoder1.1} parent=1 // pred_check_branch
      %46 = sbr.rel (0) target = $region49
    $region48: #{my_conv_autoencoder1.1} parent=1 // pred_region
      _
    $region49: #{my_conv_autoencoder1.1} parent=1 // pred_fallthru
      _
    // Predicated region
    $region50: #{my_conv_autoencoder1.1} parent=1 // pred_check
      _
    $region51: #{my_conv_autoencoder1.1} parent=1 // pred_check_branch
      %48 = sbr.rel (0) target = $region53
    $region52: #{my_conv_autoencoder1.1} parent=1 // pred_region
      %s50 = ssub.s32 128, 128
      %51 = vsyncadd [#allocation4], %s50
      %s53 = sshll.u32 [#allocation3], 4
      %s54 = int_to_ptr.vmem [resolvable:$true] %s53
      %56 = dma.hbm_to_vmem [thread:$0]  %s12, 128, %s54, [#allocation4]
    $region53: #{my_conv_autoencoder1.1} parent=1 // pred_fallthru
      _
    // Predicated region
    $region54: #{my_conv_autoencoder1.1} parent=1 // pred_check
      _
    $region55: #{my_conv_autoencoder1.1} parent=1 // pred_check_branch
      %58 = sbr.rel (0) target = $region57
    $region56: #{my_conv_autoencoder1.1} parent=1 // pred_region
      _
    $region57: #{my_conv_autoencoder1.1} parent=1 // pred_fallthru
      _
    // Predicated region
    $region58: #{my_conv_autoencoder1.1} parent=1 // pred_check
      _
    $region59: #{my_conv_autoencoder1.1} parent=1 // pred_check_branch
      %60 = sbr.rel (0) target = $region61
    $region60: #{my_conv_autoencoder1.1} parent=1 // pred_region
      _
    $region61: #{my_conv_autoencoder1.1} parent=1 // pred_fallthru
      _
    // Predicated region
    $region62: #{my_conv_autoencoder1.1} parent=1 // pred_check
      _
    $region63: #{my_conv_autoencoder1.1} parent=1 // pred_check_branch
      %62 = sbr.rel (0) target = $region65
    $region64: #{my_conv_autoencoder1.1} parent=1 // pred_region
      _
    $region65: #{my_conv_autoencoder1.1} parent=1 // pred_fallthru
      _
    // Predicated region
    $region66: #{my_conv_autoencoder1.1} parent=1 // pred_check
      _
    $region67: #{my_conv_autoencoder1.1} parent=1 // pred_check_branch
      %64 = sbr.rel (0) target = $region69
    $region68: #{my_conv_autoencoder1.1} parent=1 // pred_region
      _
    $region69: #{my_conv_autoencoder1.1} parent=1 // pred_fallthru
      _
    // Predicated region
    $region70: #{my_conv_autoencoder1.1} parent=1 // pred_check
      _
    $region71: #{my_conv_autoencoder1.1} parent=1 // pred_check_branch
      %66 = sbr.rel (0) target = $region73
    $region72: #{my_conv_autoencoder1.1} parent=1 // pred_region
      %67 = dma.done [#allocation4], 128
    $region73: #{my_conv_autoencoder1.1} parent=1 // pred_fallthru
      _
    %69 = vst [vmem:[#allocation2] sm:$0xff] 0.0
    %70 = vst [vmem:[#allocation2 + $0x8] sm:$0xff] 0.0
    %71 = vst [vmem:[#allocation2 + $0x10] sm:$0xff] 0.0
    %72 = vst [vmem:[#allocation2 + $0x18] sm:$0xff] 0.0
    %73 = vst [vmem:[#allocation2 + $0x20] sm:$0xff] 0.0
    %74 = vst [vmem:[#allocation2 + $0x28] sm:$0xff] 0.0
    %75 = vst [vmem:[#allocation2 + $0x30] sm:$0xff] 0.0
    %76 = vst [vmem:[#allocation2 + $0x38] sm:$0xff] 0.0
    %77 = vst [vmem:[#allocation2 + $0x40] sm:$0xff] 0.0
    %78 = vst [vmem:[#allocation2 + $0x48] sm:$0xff] 0.0
    %79 = vst [vmem:[#allocation2 + $0x50] sm:$0xff] 0.0
    %80 = vst [vmem:[#allocation2 + $0x58] sm:$0xff] 0.0
    %81 = vst [vmem:[#allocation2 + $0x60] sm:$0xff] 0.0
    %82 = vst [vmem:[#allocation2 + $0x68] sm:$0xff] 0.0
    %83 = vst [vmem:[#allocation2 + $0x70] sm:$0xff] 0.0
    %84 = vst [vmem:[#allocation2 + $0x78] sm:$0xff] 0.0
    %85 = vst [vmem:[#allocation2 + $0x80] sm:$0xff] 0.0
    %86 = vst [vmem:[#allocation2 + $0x88] sm:$0xff] 0.0
    %87 = vst [vmem:[#allocation2 + $0x90] sm:$0xff] 0.0
    %88 = vst [vmem:[#allocation2 + $0x98] sm:$0xff] 0.0
    %89 = vst [vmem:[#allocation2 + $0xa0] sm:$0xff] 0.0
    %90 = vst [vmem:[#allocation2 + $0xa8] sm:$0xff] 0.0
    %91 = vst [vmem:[#allocation2 + $0xb0] sm:$0xff] 0.0
    %92 = vst [vmem:[#allocation2 + $0xb8] sm:$0xff] 0.0
    %93 = vst [vmem:[#allocation2 + $0xc0] sm:$0xff] 0.0
    %94 = vst [vmem:[#allocation2 + $0xc8] sm:$0xff] 0.0
    %95 = vst [vmem:[#allocation2 + $0xd0] sm:$0xff] 0.0
    %96 = vst [vmem:[#allocation2 + $0xd8] sm:$0xff] 0.0
    %97 = vst [vmem:[#allocation2 + $0xe0] sm:$0xff] 0.0
    %98 = vst [vmem:[#allocation2 + $0xe8] sm:$0xff] 0.0
    %99 = vst [vmem:[#allocation2 + $0xf0] sm:$0xff] 0.0
    %100 = vst [vmem:[#allocation2 + $0xf8] sm:$0xff] 0.0
    %v101 = vlaneseq
    %v102 = vand.u32 %v101, 127
    %v103 = vand.u32 %v102, 3
    %v104 = vshra.s32 %v102, 2
    %vm105 = vcmp.gt.s32.totalorder %v103, 0
    %vm106 = vcmp.lt.s32.totalorder %v103, 3
    %vm107 = vcmp.gt.s32.totalorder %v104, 0
    %vm108 = vcmp.lt.s32.totalorder %v104, 3
    %vm109 = vmand %vm107, %vm105
    %v110 = vsel %vm109, 1, 0
    %v111 = vcvt.s32.f32 %v110
    %v112 = vsel %vm107, 1, 0
    %v113 = vcvt.s32.f32 %v112
    %vm114 = vmand %vm107, %vm106
    %v115 = vsel %vm114, 1, 0
    %v116 = vcvt.s32.f32 %v115
    %v117 = vsel %vm105, 1, 0
    %v118 = vcvt.s32.f32 %v117
    %v119 = vsel %vm106, 1, 0
    %v120 = vcvt.s32.f32 %v119
    %vm121 = vmand %vm108, %vm105
    %v122 = vsel %vm121, 1, 0
    %v123 = vcvt.s32.f32 %v122
    %v124 = vsel %vm108, 1, 0
    %v125 = vcvt.s32.f32 %v124
    %vm126 = vmand %vm108, %vm106
    %v127 = vsel %vm126, 1, 0
    %v128 = vcvt.s32.f32 %v127
    %v129 = vand.u32 %v102, 7
    %v130 = vshra.s32 %v102, 3
    %vm131 = vcmp.gt.s32.totalorder %v129, 0
    %vm132 = vcmp.lt.s32.totalorder %v129, 7
    %vm133 = vcmp.gt.s32.totalorder %v130, 0
    %vm134 = vcmp.lt.s32.totalorder %v130, 7
    %vm135 = vmand %vm133, %vm131
    %v136 = vsel %vm135, 1, 0
    %v137 = vcvt.s32.f32 %v136
    %v138 = vsel %vm133, 1, 0
    %v139 = vcvt.s32.f32 %v138
    %vm140 = vmand %vm133, %vm132
    %v141 = vsel %vm140, 1, 0
    %v142 = vcvt.s32.f32 %v141
    %v143 = vsel %vm131, 1, 0
    %v144 = vcvt.s32.f32 %v143
    %v145 = vsel %vm132, 1, 0
    %v146 = vcvt.s32.f32 %v145
    %vm147 = vmand %vm134, %vm131
    %v148 = vsel %vm147, 1, 0
    %v149 = vcvt.s32.f32 %v148
    %v150 = vsel %vm134, 1, 0
    %v151 = vcvt.s32.f32 %v150
    %vm152 = vmand %vm134, %vm132
    %v153 = vsel %vm152, 1, 0
    %v154 = vcvt.s32.f32 %v153
    %v155 = vadd.s32 %v102, 128
    %v156 = vand.u32 %v102, 15
    %v157 = vand.u32 %v155, 15
    %v158 = vshra.s32 %v102, 4
    %v159 = vshra.s32 %v155, 4
    %vm160 = vcmp.gt.s32.totalorder %v156, 0
    %vm161 = vcmp.gt.s32.totalorder %v157, 0
    %vm162 = vcmp.lt.s32.totalorder %v156, 15
    %vm163 = vcmp.lt.s32.totalorder %v157, 15
    %vm164 = vcmp.gt.s32.totalorder %v158, 0
    %vm165 = vcmp.gt.s32.totalorder %v159, 0
    %vm166 = vcmp.lt.s32.totalorder %v158, 15
    %vm167 = vcmp.lt.s32.totalorder %v159, 15
    %vm168 = vmand %vm164, %vm160
    %vm169 = vmand %vm165, %vm161
    %v170 = vsel %vm168, 1, 0
    %v171 = vsel %vm169, 1, 0
    %v172 = vcvt.s32.f32 %v170
    %v173 = vcvt.s32.f32 %v171
    %v174 = vsel %vm164, 1, 0
    %v175 = vsel %vm165, 1, 0
    %v176 = vcvt.s32.f32 %v174
    %v177 = vcvt.s32.f32 %v175
    %vm178 = vmand %vm164, %vm162
    %vm179 = vmand %vm165, %vm163
    %v180 = vsel %vm178, 1, 0
    %v181 = vsel %vm179, 1, 0
    %v182 = vcvt.s32.f32 %v180
    %v183 = vcvt.s32.f32 %v181
    %v184 = vsel %vm160, 1, 0
    %v185 = vsel %vm161, 1, 0
    %v186 = vcvt.s32.f32 %v184
    %v187 = vcvt.s32.f32 %v185
    %v188 = vsel %vm162, 1, 0
    %v189 = vsel %vm163, 1, 0
    %v190 = vcvt.s32.f32 %v188
    %v191 = vcvt.s32.f32 %v189
    %vm192 = vmand %vm166, %vm160
    %vm193 = vmand %vm167, %vm161
    %v194 = vsel %vm192, 1, 0
    %v195 = vsel %vm193, 1, 0
    %v196 = vcvt.s32.f32 %v194
    %v197 = vcvt.s32.f32 %v195
    %v198 = vsel %vm166, 1, 0
    %v199 = vsel %vm167, 1, 0
    %v200 = vcvt.s32.f32 %v198
    %v201 = vcvt.s32.f32 %v199
    %vm202 = vmand %vm166, %vm162
    %vm203 = vmand %vm167, %vm163
    %v204 = vsel %vm202, 1, 0
    %v205 = vsel %vm203, 1, 0
    %v206 = vcvt.s32.f32 %v204
    %v207 = vcvt.s32.f32 %v205
    %v208 = vld [vmem:[%s0] sm:$0xff]
    %v209 = vld [vmem:[%s0 + $0x8] sm:$0xff]
    %210 = vst [vmem:[#allocation2 + $0x8] sm:$0xff] %v208
    %211 = vst [vmem:[#allocation2 + $0x10] sm:$0xff] %v209
    %v212 = vld [vmem:[#allocation2] sm:$0xff]
    %v213 = vld [vmem:[#allocation2 + $0x8] sm:$0xff]
    %v214 = vld [vmem:[#allocation2 + $0x10] sm:$0xff]
    %v215 = vld [vmem:[#allocation2 + $0x18] sm:$0xff]
    %218 = vrot.lane.b32.xlu0 %v172, 111
    %v219 = vpop.permute.xlu0 %218
    %220 = vrot.lane.b32.xlu0 %v173, 111
    %v221 = vpop.permute.xlu0 %220
    %vm222 = vcmask 908288
    %v223 = vsel %vm222, %v219, %v221
    %v227 = vmul.f32 %v212, %v219
    %v228 = vmul.f32 %v213, %v223
    %v229 = vmul.f32 %v214, %v221
    %232 = vrot.lane.b32.xlu0 %v176, 112
    %v233 = vpop.permute.xlu0 %232
    %234 = vrot.lane.b32.xlu0 %v177, 112
    %v235 = vpop.permute.xlu0 %234
    %vm236 = vcmask 916480
    %v237 = vsel %vm236, %v233, %v235
    %v241 = vmul.f32 %v212, %v233
    %v242 = vmul.f32 %v213, %v237
    %v243 = vmul.f32 %v214, %v235
    %246 = vrot.lane.b32.xlu0 %v182, 113
    %v247 = vpop.permute.xlu0 %246
    %248 = vrot.lane.b32.xlu0 %v183, 113
    %v249 = vpop.permute.xlu0 %248
    %vm250 = vcmask 924672
    %v251 = vsel %vm250, %v247, %v249
    %v255 = vmul.f32 %v212, %v247
    %v256 = vmul.f32 %v213, %v251
    %v257 = vmul.f32 %v214, %v249
    %260 = vrot.lane.b32.xlu0 %v186, 127
    %v261 = vpop.permute.xlu0 %260
    %262 = vrot.lane.b32.xlu0 %v187, 127
    %v263 = vpop.permute.xlu0 %262
    %vm264 = vcmask 1039360
    %v265 = vsel %vm264, %v261, %v263
    %v269 = vmul.f32 %v212, %v261
    %v270 = vmul.f32 %v213, %v265
    %v271 = vmul.f32 %v214, %v263
    %274 = vrot.lane.b32.xlu0 %v190, 1
    %v275 = vpop.permute.xlu0 %274
    %276 = vrot.lane.b32.xlu0 %v191, 1
    %v277 = vpop.permute.xlu0 %276
    %vm278 = vcmask 7168
    %v279 = vsel %vm278, %v275, %v277
    %v283 = vmul.f32 %v213, %v275
    %v284 = vmul.f32 %v214, %v279
    %v285 = vmul.f32 %v215, %v277
    %288 = vrot.lane.b32.xlu0 %v196, 15
    %v289 = vpop.permute.xlu0 %288
    %290 = vrot.lane.b32.xlu0 %v197, 15
    %v291 = vpop.permute.xlu0 %290
    %vm292 = vcmask 121856
    %v293 = vsel %vm292, %v289, %v291
    %v297 = vmul.f32 %v213, %v289
    %v298 = vmul.f32 %v214, %v293
    %v299 = vmul.f32 %v215, %v291
    %302 = vrot.lane.b32.xlu0 %v200, 16
    %v303 = vpop.permute.xlu0 %302
    %304 = vrot.lane.b32.xlu0 %v201, 16
    %v305 = vpop.permute.xlu0 %304
    %vm306 = vcmask 130048
    %v307 = vsel %vm306, %v303, %v305
    %v311 = vmul.f32 %v213, %v303
    %v312 = vmul.f32 %v214, %v307
    %v313 = vmul.f32 %v215, %v305
    %316 = vrot.lane.b32.xlu0 %v206, 17
    %v317 = vpop.permute.xlu0 %316
    %318 = vrot.lane.b32.xlu0 %v207, 17
    %v319 = vpop.permute.xlu0 %318
    %vm320 = vcmask 138240
    %v321 = vsel %vm320, %v317, %v319
    %v325 = vmul.f32 %v213, %v317
    %v326 = vmul.f32 %v214, %v321
    %v327 = vmul.f32 %v215, %v319
    %331 = vrot.lane.b32.xlu0 %v241, 127
    %v332 = vpop.permute.xlu0 %331
    %333 = vrot.lane.b32.xlu0 %v242, 127
    %v334 = vpop.permute.xlu0 %333
    %335 = vrot.lane.b32.xlu0 %v243, 127
    %v336 = vpop.permute.xlu0 %335
    %v337 = vsel %vm264, %v332, %v334
    %v338 = vsel %vm264, %v334, %v336
    %345 = vrot.lane.b32.xlu0 %v255, 126
    %v346 = vpop.permute.xlu0 %345
    %347 = vrot.lane.b32.xlu0 %v256, 126
    %v348 = vpop.permute.xlu0 %347
    %349 = vrot.lane.b32.xlu0 %v257, 126
    %v350 = vpop.permute.xlu0 %349
    %vm351 = vcmask 1031168
    %v352 = vsel %vm351, %v346, %v348
    %v353 = vsel %vm351, %v348, %v350
    %360 = vrot.lane.b32.xlu0 %v269, 112
    %v361 = vpop.permute.xlu0 %360
    %362 = vrot.lane.b32.xlu0 %v270, 112
    %v363 = vpop.permute.xlu0 %362
    %364 = vrot.lane.b32.xlu0 %v271, 112
    %v365 = vpop.permute.xlu0 %364
    %v366 = vsel %vm236, %v361, %v363
    %v367 = vsel %vm236, %v363, %v365
    %373 = vrot.lane.b32.xlu0 %v213, 111
    %v374 = vpop.permute.xlu0 %373
    %375 = vrot.lane.b32.xlu0 %v214, 111
    %v376 = vpop.permute.xlu0 %375
    %v377 = vsel %vm222, %v374, %v376
    %384 = vrot.lane.b32.xlu0 %v283, 110
    %v385 = vpop.permute.xlu0 %384
    %386 = vrot.lane.b32.xlu0 %v284, 110
    %v387 = vpop.permute.xlu0 %386
    %388 = vrot.lane.b32.xlu0 %v285, 110
    %v389 = vpop.permute.xlu0 %388
    %vm390 = vcmask 900096
    %v391 = vsel %vm390, %v385, %v387
    %v392 = vsel %vm390, %v387, %v389
    %399 = vrot.lane.b32.xlu0 %v297, 96
    %v400 = vpop.permute.xlu0 %399
    %401 = vrot.lane.b32.xlu0 %v298, 96
    %v402 = vpop.permute.xlu0 %401
    %403 = vrot.lane.b32.xlu0 %v299, 96
    %v404 = vpop.permute.xlu0 %403
    %vm405 = vcmask 785408
    %v406 = vsel %vm405, %v400, %v402
    %v407 = vsel %vm405, %v402, %v404
    %414 = vrot.lane.b32.xlu0 %v311, 95
    %v415 = vpop.permute.xlu0 %414
    %416 = vrot.lane.b32.xlu0 %v312, 95
    %v417 = vpop.permute.xlu0 %416
    %418 = vrot.lane.b32.xlu0 %v313, 95
    %v419 = vpop.permute.xlu0 %418
    %vm420 = vcmask 777216
    %v421 = vsel %vm420, %v415, %v417
    %v422 = vsel %vm420, %v417, %v419
    %429 = vrot.lane.b32.xlu0 %v325, 94
    %v430 = vpop.permute.xlu0 %429
    %431 = vrot.lane.b32.xlu0 %v326, 94
    %v432 = vpop.permute.xlu0 %431
    %433 = vrot.lane.b32.xlu0 %v327, 94
    %v434 = vpop.permute.xlu0 %433
    %vm435 = vcmask 769024
    %v436 = vsel %vm435, %v430, %v432
    %v437 = vsel %vm435, %v432, %v434
    %v441 = vpack.c.bf16 %v337, %v227
    %v442 = vpack.c.bf16 %v338, %v228
    %v443 = vpack.c.bf16 %v336, %v229
    %v444 = vpack.c.bf16 %v366, %v352
    %v445 = vpack.c.bf16 %v367, %v353
    %v446 = vpack.c.bf16 %v365, %v350
    %v447 = vpack.c.bf16 %v385, %v374
    %v448 = vpack.c.bf16 %v391, %v377
    %v449 = vpack.c.bf16 %v392, %v376
    %v450 = vpack.c.bf16 %v415, %v400
    %v451 = vpack.c.bf16 %v421, %v406
    %v452 = vpack.c.bf16 %v422, %v407
    %v453 = vpack.c.bf16 %v430, %v430
    %v454 = vpack.c.bf16 %v436, %v436
    %v455 = vpack.c.bf16 %v437, %v437
    %v456 = vld [vmem:[%s1] sm:$0xf]
    %v457 = vld [vmem:[%s1 + $0x4] sm:$0xf]
    %v458 = vld [vmem:[%s1 + $0x8] sm:$0xf]
    %v459 = vld [vmem:[%s1 + $0xc] sm:$0xf]
    %v460 = vld [vmem:[%s1 + $0x10] sm:$0xf]
    %v461 = vld [vmem:[%s1 + $0x14] sm:$0xf]
    %v462 = vld [vmem:[%s1 + $0x18] sm:$0xf]
    %v463 = vld [vmem:[%s1 + $0x1c] sm:$0xf]
    %v464 = vld [vmem:[%s2] sm:$0xff]
    %v465 = vld [vmem:[%s2 + $0x8] sm:$0xff]
    %v466 = vld [vmem:[%s2 + $0x10] sm:$0xff]
    %v467 = vld [vmem:[%s2 + $0x18] sm:$0xff]
    %v468 = vld [vmem:[%s2 + $0x20] sm:$0xff]
    %v469 = vld [vmem:[%s2 + $0x28] sm:$0xff]
    %v470 = vld [vmem:[%s2 + $0x30] sm:$0xff]
    %v471 = vld [vmem:[%s2 + $0x38] sm:$0xff]
    %473 = vset.pattern.permute.xlu0 0
    %474 = vperm.xlu0 %473, %v464
    %v475 = vpop.permute.xlu0 %474
    %478 = vset.pattern.permute.xlu0 0
    %479 = vperm.xlu0 %478, %v465
    %v480 = vpop.permute.xlu0 %479
    %483 = vset.pattern.permute.xlu0 0
    %484 = vperm.xlu0 %483, %v466
    %v485 = vpop.permute.xlu0 %484
    %488 = vset.pattern.permute.xlu0 0
    %489 = vperm.xlu0 %488, %v467
    %v490 = vpop.permute.xlu0 %489
    %493 = vset.pattern.permute.xlu0 0
    %494 = vperm.xlu0 %493, %v468
    %v495 = vpop.permute.xlu0 %494
    %498 = vset.pattern.permute.xlu0 0
    %499 = vperm.xlu0 %498, %v469
    %v500 = vpop.permute.xlu0 %499
    %503 = vset.pattern.permute.xlu0 0
    %504 = vperm.xlu0 %503, %v470
    %v505 = vpop.permute.xlu0 %504
    %508 = vset.pattern.permute.xlu0 0
    %509 = vperm.xlu0 %508, %v471
    %v510 = vpop.permute.xlu0 %509
    %v520 = vunpack.c.l.b16 %v456
    %v521 = vunpack.c.l.b16 %v457
    %v522 = vunpack.c.l.b16 %v458
    %v523 = vunpack.c.l.b16 %v459
    %v524 = vunpack.c.l.b16 %v460
    %v525 = vunpack.c.l.b16 %v461
    %v526 = vunpack.c.l.b16 %v462
    %v527 = vunpack.c.l.b16 %v463
    %v528 = vpack.c.b16 %v521, %v520
    %v529 = vpack.c.b16 %v523, %v522
    %v530 = vpack.c.b16 %v525, %v524
    %v531 = vpack.c.b16 %v527, %v526
    %547 = vrot.lane.b32.xlu0 %v441, 17
    %v548 = vpop.permute.xlu0 %547
    %549 = vrot.lane.b32.xlu0 %v442, 17
    %v550 = vpop.permute.xlu0 %549
    %551 = vrot.lane.b32.xlu0 %v443, 17
    %v552 = vpop.permute.xlu0 %551
    %553 = vrot.lane.b32.xlu0 %v444, 17
    %v554 = vpop.permute.xlu0 %553
    %555 = vrot.lane.b32.xlu0 %v445, 17
    %v556 = vpop.permute.xlu0 %555
    %557 = vrot.lane.b32.xlu0 %v446, 17
    %v558 = vpop.permute.xlu0 %557
    %559 = vrot.lane.b32.xlu0 %v447, 17
    %v560 = vpop.permute.xlu0 %559
    %561 = vrot.lane.b32.xlu0 %v448, 17
    %v562 = vpop.permute.xlu0 %561
    %563 = vrot.lane.b32.xlu0 %v449, 17
    %v564 = vpop.permute.xlu0 %563
    %565 = vrot.lane.b32.xlu0 %v450, 17
    %v566 = vpop.permute.xlu0 %565
    %567 = vrot.lane.b32.xlu0 %v451, 17
    %v568 = vpop.permute.xlu0 %567
    %569 = vrot.lane.b32.xlu0 %v452, 17
    %v570 = vpop.permute.xlu0 %569
    %571 = vrot.lane.b32.xlu0 %v453, 17
    %v572 = vpop.permute.xlu0 %571
    %573 = vrot.lane.b32.xlu0 %v454, 17
    %v574 = vpop.permute.xlu0 %573
    %575 = vrot.lane.b32.xlu0 %v455, 17
    %v576 = vpop.permute.xlu0 %575
    %vm577 = vcmask 138240
    %v578 = vsel %vm577, %v548, %v550
    %v579 = vsel %vm577, %v550, %v552
    %v580 = vsel %vm577, %v554, %v556
    %v581 = vsel %vm577, %v556, %v558
    %v582 = vsel %vm577, %v560, %v562
    %v583 = vsel %vm577, %v562, %v564
    %v584 = vsel %vm577, %v566, %v568
    %v585 = vsel %vm577, %v568, %v570
    %v586 = vsel %vm577, %v572, %v574
    %v587 = vsel %vm577, %v574, %v576
    %vm596 = vcmask 588800
    %v598 = vsel %vm596, %v528, 0
    %v601 = vsel %vm596, %v529, 0
    %v604 = vsel %vm596, %v530, 0
    %v607 = vsel %vm596, %v531, 0
    %vm609 = vcmask 1043456
    %v611 = vsel %vm609, %v586, 0
    %v614 = vsel %vm609, %v587, 0
    %616 = vmatprep.subr.bf16.mxu0 %v579
    %617 = vmatpush1.bf16.msra.mxu0 %v578
    %618 = vmatprep.subr.bf16.mxu0 %v581
    %619 = vmatpush1.bf16.msra.mxu0 %v580
    %620 = vmatprep.subr.bf16.mxu0 %v583
    %621 = vmatpush1.bf16.msra.mxu0 %v582
    %622 = vmatprep.subr.bf16.mxu0 %v585
    %623 = vmatpush1.bf16.msra.mxu0 %v584
    %624 = vmatprep.subr.bf16.mxu0 %v614
    %625 = vmatpush1.bf16.msra.mxu0 %v611
    %626 = vmatprep.subr.bf16.mxu0 0
    %627 = vmatpush1.bf16.msra.mxu0 0
    %628 = vmatprep.subr.bf16.mxu0 0
    %629 = vmatpush1.bf16.msra.mxu0 0
    %630 = vmatprep.subr.bf16.mxu0 0
    %631 = vmatpush1.bf16.msra.mxu0 0
    %632 = vmatprep.subr.bf16.mxu0 0
    %633 = vmatpush1.bf16.msra.mxu0 0
    %634 = vmatprep.subr.bf16.mxu0 0
    %635 = vmatpush1.bf16.msra.mxu0 0
    %636 = vmatprep.subr.bf16.mxu0 0
    %637 = vmatpush1.bf16.msra.mxu0 0
    %638 = vmatprep.subr.bf16.mxu0 0
    %639 = vmatpush1.bf16.msra.mxu0 0
    %640 = vmatprep.subr.bf16.mxu0 0
    %641 = vmatpush1.bf16.msra.mxu0 0
    %642 = vmatprep.subr.bf16.mxu0 0
    %643 = vmatpush1.bf16.msra.mxu0 0
    %644 = vmatprep.subr.bf16.mxu0 0
    %645 = vmatpush1.bf16.msra.mxu0 0
    %646 = vmatprep.subr.bf16.mxu0 0
    %647 = vmatpush1.bf16.msra.mxu0 0
    %648 = vmatprep.mubr.bf16.mxu0 0
    %649 = vmatmul.mubr.bf16.gmra.mrb[0].mxu0 %v598
    %v650 = vpop.f32.mrb[0].mxu0
    %v651 = vadd.f32 %v475, %v650
    %v652 = vpop.f32.mrb[0].mxu0
    %v653 = vadd.f32 %v475, %v652
    %v654 = vpop.f32.mrb[0].mxu0
    %v655 = vadd.f32 %v480, %v654
    %v656 = vpop.f32.mrb[0].mxu0
    %v657 = vadd.f32 %v480, %v656
    %658 = vmatprep.mubr.bf16.mxu0 0
    %659 = vmatmul.mubr.bf16.gmra.mrb[0].mxu0 %v601
    %v660 = vpop.f32.mrb[0].mxu0
    %v661 = vadd.f32 %v485, %v660
    %v662 = vpop.f32.mrb[0].mxu0
    %v663 = vadd.f32 %v485, %v662
    %v664 = vpop.f32.mrb[0].mxu0
    %v665 = vadd.f32 %v490, %v664
    %v666 = vpop.f32.mrb[0].mxu0
    %v667 = vadd.f32 %v490, %v666
    %668 = vmatprep.mubr.bf16.mxu0 0
    %669 = vmatmul.mubr.bf16.gmra.mrb[0].mxu0 %v604
    %v670 = vpop.f32.mrb[0].mxu0
    %v671 = vadd.f32 %v495, %v670
    %v672 = vpop.f32.mrb[0].mxu0
    %v673 = vadd.f32 %v495, %v672
    %v674 = vpop.f32.mrb[0].mxu0
    %v675 = vadd.f32 %v500, %v674
    %v676 = vpop.f32.mrb[0].mxu0
    %v677 = vadd.f32 %v500, %v676
    %678 = vmatprep.mubr.bf16.mxu0 0
    %679 = vmatmul.mubr.bf16.gmra.mrb[0].mxu0 %v607
    %v680 = vpop.f32.mrb[0].mxu0
    %v681 = vadd.f32 %v505, %v680
    %v682 = vpop.f32.mrb[0].mxu0
    %v683 = vadd.f32 %v505, %v682
    %v684 = vpop.f32.mrb[0].mxu0
    %v685 = vadd.f32 %v510, %v684
    %v686 = vpop.f32.mrb[0].mxu0
    %v687 = vadd.f32 %v510, %v686
    %688 = vdwg.mxu0
    %v689 = vmax.f32 %v651, 0.0
    %v690 = vmax.f32 %v653, 0.0
    %v691 = vmax.f32 %v655, 0.0
    %v692 = vmax.f32 %v657, 0.0
    %v693 = vmax.f32 %v661, 0.0
    %v694 = vmax.f32 %v663, 0.0
    %v695 = vmax.f32 %v665, 0.0
    %v696 = vmax.f32 %v667, 0.0
    %v697 = vmax.f32 %v671, 0.0
    %v698 = vmax.f32 %v673, 0.0
    %v699 = vmax.f32 %v675, 0.0
    %v700 = vmax.f32 %v677, 0.0
    %v701 = vmax.f32 %v681, 0.0
    %v702 = vmax.f32 %v683, 0.0
    %v703 = vmax.f32 %v685, 0.0
    %v704 = vmax.f32 %v687, 0.0
    %705 = vst [vmem:[#allocation2 + $0x8] sm:$0xff] %v689
    %706 = vst [vmem:[#allocation2 + $0x10] sm:$0xff] %v690
    %707 = vst [vmem:[#allocation2 + $0x28] sm:$0xff] %v691
    %708 = vst [vmem:[#allocation2 + $0x30] sm:$0xff] %v692
    %709 = vst [vmem:[#allocation2 + $0x48] sm:$0xff] %v693
    %710 = vst [vmem:[#allocation2 + $0x50] sm:$0xff] %v694
    %711 = vst [vmem:[#allocation2 + $0x68] sm:$0xff] %v695
    %712 = vst [vmem:[#allocation2 + $0x70] sm:$0xff] %v696
    %713 = vst [vmem:[#allocation2 + $0x88] sm:$0xff] %v697
    %714 = vst [vmem:[#allocation2 + $0x90] sm:$0xff] %v698
    %715 = vst [vmem:[#allocation2 + $0xa8] sm:$0xff] %v699
    %716 = vst [vmem:[#allocation2 + $0xb0] sm:$0xff] %v700
    %717 = vst [vmem:[#allocation2 + $0xc8] sm:$0xff] %v701
    %718 = vst [vmem:[#allocation2 + $0xd0] sm:$0xff] %v702
    %719 = vst [vmem:[#allocation2 + $0xe8] sm:$0xff] %v703
    %720 = vst [vmem:[#allocation2 + $0xf0] sm:$0xff] %v704
    %v721 = vld [vmem:[#allocation2 + $0x8] sm:$0xff]
    %v722 = vld [vmem:[#allocation2 + $0x10] sm:$0xff]
    %v723 = vld [vmem:[#allocation2 + $0x18] sm:$0xff]
    %v724 = vld [vmem:[#allocation2 + $0x28] sm:$0xff]
    %v725 = vld [vmem:[#allocation2 + $0x30] sm:$0xff]
    %v726 = vld [vmem:[#allocation2 + $0x38] sm:$0xff]
    %v727 = vld [vmem:[#allocation2 + $0x48] sm:$0xff]
    %v728 = vld [vmem:[#allocation2 + $0x50] sm:$0xff]
    %v729 = vld [vmem:[#allocation2 + $0x58] sm:$0xff]
    %v730 = vld [vmem:[#allocation2 + $0x68] sm:$0xff]
    %v731 = vld [vmem:[#allocation2 + $0x70] sm:$0xff]
    %v732 = vld [vmem:[#allocation2 + $0x78] sm:$0xff]
    %v733 = vld [vmem:[#allocation2 + $0x88] sm:$0xff]
    %v734 = vld [vmem:[#allocation2 + $0x90] sm:$0xff]
    %v735 = vld [vmem:[#allocation2 + $0x98] sm:$0xff]
    %v736 = vld [vmem:[#allocation2 + $0xa8] sm:$0xff]
    %v737 = vld [vmem:[#allocation2 + $0xb0] sm:$0xff]
    %v738 = vld [vmem:[#allocation2 + $0xb8] sm:$0xff]
    %v739 = vld [vmem:[#allocation2 + $0xc8] sm:$0xff]
    %v740 = vld [vmem:[#allocation2 + $0xd0] sm:$0xff]
    %v741 = vld [vmem:[#allocation2 + $0xd8] sm:$0xff]
    %v742 = vld [vmem:[#allocation2 + $0xe8] sm:$0xff]
    %v743 = vld [vmem:[#allocation2 + $0xf0] sm:$0xff]
    %v744 = vld [vmem:[#allocation2 + $0xf8] sm:$0xff]
    %769 = vrot.lane.b32.xlu0 %v721, 127
    %v770 = vpop.permute.xlu0 %769
    %771 = vrot.lane.b32.xlu0 %v722, 127
    %v772 = vpop.permute.xlu0 %771
    %773 = vrot.lane.b32.xlu0 %v723, 127
    %v774 = vpop.permute.xlu0 %773
    %775 = vrot.lane.b32.xlu0 %v724, 127
    %v776 = vpop.permute.xlu0 %775
    %777 = vrot.lane.b32.xlu0 %v725, 127
    %v778 = vpop.permute.xlu0 %777
    %779 = vrot.lane.b32.xlu0 %v726, 127
    %v780 = vpop.permute.xlu0 %779
    %781 = vrot.lane.b32.xlu0 %v727, 127
    %v782 = vpop.permute.xlu0 %781
    %783 = vrot.lane.b32.xlu0 %v728, 127
    %v784 = vpop.permute.xlu0 %783
    %785 = vrot.lane.b32.xlu0 %v729, 127
    %v786 = vpop.permute.xlu0 %785
    %787 = vrot.lane.b32.xlu0 %v730, 127
    %v788 = vpop.permute.xlu0 %787
    %789 = vrot.lane.b32.xlu0 %v731, 127
    %v790 = vpop.permute.xlu0 %789
    %791 = vrot.lane.b32.xlu0 %v732, 127
    %v792 = vpop.permute.xlu0 %791
    %793 = vrot.lane.b32.xlu0 %v733, 127
    %v794 = vpop.permute.xlu0 %793
    %795 = vrot.lane.b32.xlu0 %v734, 127
    %v796 = vpop.permute.xlu0 %795
    %797 = vrot.lane.b32.xlu0 %v735, 127
    %v798 = vpop.permute.xlu0 %797
    %799 = vrot.lane.b32.xlu0 %v736, 127
    %v800 = vpop.permute.xlu0 %799
    %801 = vrot.lane.b32.xlu0 %v737, 127
    %v802 = vpop.permute.xlu0 %801
    %803 = vrot.lane.b32.xlu0 %v738, 127
    %v804 = vpop.permute.xlu0 %803
    %805 = vrot.lane.b32.xlu0 %v739, 127
    %v806 = vpop.permute.xlu0 %805
    %807 = vrot.lane.b32.xlu0 %v740, 127
    %v808 = vpop.permute.xlu0 %807
    %809 = vrot.lane.b32.xlu0 %v741, 127
    %v810 = vpop.permute.xlu0 %809
    %811 = vrot.lane.b32.xlu0 %v742, 127
    %v812 = vpop.permute.xlu0 %811
    %813 = vrot.lane.b32.xlu0 %v743, 127
    %v814 = vpop.permute.xlu0 %813
    %815 = vrot.lane.b32.xlu0 %v744, 127
    %v816 = vpop.permute.xlu0 %815
    %v817 = vsel %vm264, %v770, %v772
    %v818 = vsel %vm264, %v772, %v774
    %v819 = vsel %vm264, %v776, %v778
    %v820 = vsel %vm264, %v778, %v780
    %v821 = vsel %vm264, %v782, %v784
    %v822 = vsel %vm264, %v784, %v786
    %v823 = vsel %vm264, %v788, %v790
    %v824 = vsel %vm264, %v790, %v792
    %v825 = vsel %vm264, %v794, %v796
    %v826 = vsel %vm264, %v796, %v798
    %v827 = vsel %vm264, %v800, %v802
    %v828 = vsel %vm264, %v802, %v804
    %v829 = vsel %vm264, %v806, %v808
    %v830 = vsel %vm264, %v808, %v810
    %v831 = vsel %vm264, %v812, %v814
    %v832 = vsel %vm264, %v814, %v816
    %v849 = vmax.f32 %v721, %v817
    %v850 = vmax.f32 %v722, %v818
    %v851 = vmax.f32 %v724, %v819
    %v852 = vmax.f32 %v725, %v820
    %v853 = vmax.f32 %v727, %v821
    %v854 = vmax.f32 %v728, %v822
    %v855 = vmax.f32 %v730, %v823
    %v856 = vmax.f32 %v731, %v824
    %v857 = vmax.f32 %v733, %v825
    %v858 = vmax.f32 %v734, %v826
    %v859 = vmax.f32 %v736, %v827
    %v860 = vmax.f32 %v737, %v828
    %v861 = vmax.f32 %v739, %v829
    %v862 = vmax.f32 %v740, %v830
    %v863 = vmax.f32 %v742, %v831
    %v864 = vmax.f32 %v743, %v832
    %v873 = vmax.f32 %v723, %v774
    %v874 = vmax.f32 %v726, %v780
    %v875 = vmax.f32 %v729, %v786
    %v876 = vmax.f32 %v732, %v792
    %v877 = vmax.f32 %v735, %v798
    %v878 = vmax.f32 %v738, %v804
    %v879 = vmax.f32 %v741, %v810
    %v880 = vmax.f32 %v744, %v816
    %905 = vrot.lane.b32.xlu0 %v849, 112
    %v906 = vpop.permute.xlu0 %905
    %907 = vrot.lane.b32.xlu0 %v850, 112
    %v908 = vpop.permute.xlu0 %907
    %909 = vrot.lane.b32.xlu0 %v873, 112
    %v910 = vpop.permute.xlu0 %909
    %911 = vrot.lane.b32.xlu0 %v851, 112
    %v912 = vpop.permute.xlu0 %911
    %913 = vrot.lane.b32.xlu0 %v852, 112
    %v914 = vpop.permute.xlu0 %913
    %915 = vrot.lane.b32.xlu0 %v874, 112
    %v916 = vpop.permute.xlu0 %915
    %917 = vrot.lane.b32.xlu0 %v853, 112
    %v918 = vpop.permute.xlu0 %917
    %919 = vrot.lane.b32.xlu0 %v854, 112
    %v920 = vpop.permute.xlu0 %919
    %921 = vrot.lane.b32.xlu0 %v875, 112
    %v922 = vpop.permute.xlu0 %921
    %923 = vrot.lane.b32.xlu0 %v855, 112
    %v924 = vpop.permute.xlu0 %923
    %925 = vrot.lane.b32.xlu0 %v856, 112
    %v926 = vpop.permute.xlu0 %925
    %927 = vrot.lane.b32.xlu0 %v876, 112
    %v928 = vpop.permute.xlu0 %927
    %929 = vrot.lane.b32.xlu0 %v857, 112
    %v930 = vpop.permute.xlu0 %929
    %931 = vrot.lane.b32.xlu0 %v858, 112
    %v932 = vpop.permute.xlu0 %931
    %933 = vrot.lane.b32.xlu0 %v877, 112
    %v934 = vpop.permute.xlu0 %933
    %935 = vrot.lane.b32.xlu0 %v859, 112
    %v936 = vpop.permute.xlu0 %935
    %937 = vrot.lane.b32.xlu0 %v860, 112
    %v938 = vpop.permute.xlu0 %937
    %939 = vrot.lane.b32.xlu0 %v878, 112
    %v940 = vpop.permute.xlu0 %939
    %941 = vrot.lane.b32.xlu0 %v861, 112
    %v942 = vpop.permute.xlu0 %941
    %943 = vrot.lane.b32.xlu0 %v862, 112
    %v944 = vpop.permute.xlu0 %943
    %945 = vrot.lane.b32.xlu0 %v879, 112
    %v946 = vpop.permute.xlu0 %945
    %947 = vrot.lane.b32.xlu0 %v863, 112
    %v948 = vpop.permute.xlu0 %947
    %949 = vrot.lane.b32.xlu0 %v864, 112
    %v950 = vpop.permute.xlu0 %949
    %951 = vrot.lane.b32.xlu0 %v880, 112
    %v952 = vpop.permute.xlu0 %951
    %v953 = vsel %vm236, %v906, %v908
    %v954 = vsel %vm236, %v908, %v910
    %v955 = vsel %vm236, %v912, %v914
    %v956 = vsel %vm236, %v914, %v916
    %v957 = vsel %vm236, %v918, %v920
    %v958 = vsel %vm236, %v920, %v922
    %v959 = vsel %vm236, %v924, %v926
    %v960 = vsel %vm236, %v926, %v928
    %v961 = vsel %vm236, %v930, %v932
    %v962 = vsel %vm236, %v932, %v934
    %v963 = vsel %vm236, %v936, %v938
    %v964 = vsel %vm236, %v938, %v940
    %v965 = vsel %vm236, %v942, %v944
    %v966 = vsel %vm236, %v944, %v946
    %v967 = vsel %vm236, %v948, %v950
    %v968 = vsel %vm236, %v950, %v952
    %v985 = vmax.f32 %v849, %v953
    %v986 = vmax.f32 %v850, %v954
    %v987 = vmax.f32 %v851, %v955
    %v988 = vmax.f32 %v852, %v956
    %v989 = vmax.f32 %v853, %v957
    %v990 = vmax.f32 %v854, %v958
    %v991 = vmax.f32 %v855, %v959
    %v992 = vmax.f32 %v856, %v960
    %v993 = vmax.f32 %v857, %v961
    %v994 = vmax.f32 %v858, %v962
    %v995 = vmax.f32 %v859, %v963
    %v996 = vmax.f32 %v860, %v964
    %v997 = vmax.f32 %v861, %v965
    %v998 = vmax.f32 %v862, %v966
    %v999 = vmax.f32 %v863, %v967
    %v1000 = vmax.f32 %v864, %v968
    %v1001 = vld [vmem:[%s13] sm:$0xf]
    %v1002 = vld [vmem:[%s13 + $0x4] sm:$0xf]
    %v1003 = vld [vmem:[%s13 + $0x8] sm:$0xf]
    %v1004 = vld [vmem:[%s13 + $0xc] sm:$0xf]
    %v1005 = vld [vmem:[%s13 + $0x10] sm:$0xf]
    %v1006 = vld [vmem:[%s13 + $0x14] sm:$0xf]
    %v1007 = vld [vmem:[%s13 + $0x18] sm:$0xf]
    %v1008 = vld [vmem:[%s13 + $0x1c] sm:$0xf]
    %v1009 = vld [vmem:[%s13 + $0x20] sm:$0xf]
    %v1010 = vld [vmem:[%s13 + $0x24] sm:$0xf]
    %v1011 = vld [vmem:[%s13 + $0x28] sm:$0xf]
    %v1012 = vld [vmem:[%s13 + $0x2c] sm:$0xf]
    %v1013 = vld [vmem:[%s13 + $0x30] sm:$0xf]
    %v1014 = vld [vmem:[%s13 + $0x34] sm:$0xf]
    %v1015 = vld [vmem:[%s13 + $0x38] sm:$0xf]
    %v1016 = vld [vmem:[%s13 + $0x3c] sm:$0xf]
    %v1017 = vld [vmem:[%s13 + $0x40] sm:$0xf]
    %v1018 = vld [vmem:[%s13 + $0x44] sm:$0xf]
    %v1019 = vld [vmem:[%s13 + $0x48] sm:$0xf]
    %v1020 = vld [vmem:[%s13 + $0x4c] sm:$0xf]
    %v1021 = vld [vmem:[%s13 + $0x50] sm:$0xf]
    %v1022 = vld [vmem:[%s13 + $0x54] sm:$0xf]
    %v1023 = vld [vmem:[%s13 + $0x58] sm:$0xf]
    %v1024 = vld [vmem:[%s13 + $0x5c] sm:$0xf]
    %v1025 = vld [vmem:[%s13 + $0x60] sm:$0xf]
    %v1026 = vld [vmem:[%s13 + $0x64] sm:$0xf]
    %v1027 = vld [vmem:[%s13 + $0x68] sm:$0xf]
    %v1028 = vld [vmem:[%s13 + $0x6c] sm:$0xf]
    %v1029 = vld [vmem:[%s13 + $0x70] sm:$0xf]
    %v1030 = vld [vmem:[%s13 + $0x74] sm:$0xf]
    %v1031 = vld [vmem:[%s13 + $0x78] sm:$0xf]
    %v1032 = vld [vmem:[%s13 + $0x7c] sm:$0xf]
    %v1033 = vunpack.c.l.bf16 %v1001
    %v1034 = vunpack.c.l.bf16 %v1002
    %v1035 = vunpack.c.l.bf16 %v1003
    %v1036 = vunpack.c.l.bf16 %v1004
    %v1037 = vunpack.c.l.bf16 %v1005
    %v1038 = vunpack.c.l.bf16 %v1006
    %v1039 = vunpack.c.l.bf16 %v1007
    %v1040 = vunpack.c.l.bf16 %v1008
    %v1041 = vunpack.c.l.bf16 %v1009
    %v1042 = vunpack.c.l.bf16 %v1010
    %v1043 = vunpack.c.l.bf16 %v1011
    %v1044 = vunpack.c.l.bf16 %v1012
    %v1045 = vunpack.c.l.bf16 %v1013
    %v1046 = vunpack.c.l.bf16 %v1014
    %v1047 = vunpack.c.l.bf16 %v1015
    %v1048 = vunpack.c.l.bf16 %v1016
    %v1049 = vunpack.c.l.bf16 %v1017
    %v1050 = vunpack.c.l.bf16 %v1018
    %v1051 = vunpack.c.l.bf16 %v1019
    %v1052 = vunpack.c.l.bf16 %v1020
    %v1053 = vunpack.c.l.bf16 %v1021
    %v1054 = vunpack.c.l.bf16 %v1022
    %v1055 = vunpack.c.l.bf16 %v1023
    %v1056 = vunpack.c.l.bf16 %v1024
    %v1057 = vunpack.c.l.bf16 %v1025
    %v1058 = vunpack.c.l.bf16 %v1026
    %v1059 = vunpack.c.l.bf16 %v1027
    %v1060 = vunpack.c.l.bf16 %v1028
    %v1061 = vunpack.c.l.bf16 %v1029
    %v1062 = vunpack.c.l.bf16 %v1030
    %v1063 = vunpack.c.l.bf16 %v1031
    %v1064 = vunpack.c.l.bf16 %v1032
    %1065 = vmatprep.subr.mxu0 0.0
    %1066 = vmatpush1.msra.mxu0 %v1033
    %1067 = vmatprep.subr.mxu0 0.0
    %1068 = vmatpush1.msra.mxu0 %v1034
    %1069 = vmatprep.subr.mxu0 0.0
    %1070 = vmatpush1.msra.mxu0 %v1035
    %1071 = vmatprep.subr.mxu0 0.0
    %1072 = vmatpush1.msra.mxu0 %v1036
    %1073 = vmatprep.subr.mxu0 0.0
    %1074 = vmatpush1.msra.mxu0 %v1037
    %1075 = vmatprep.subr.mxu0 0.0
    %1076 = vmatpush1.msra.mxu0 %v1038
    %1077 = vmatprep.subr.mxu0 0.0
    %1078 = vmatpush1.msra.mxu0 %v1039
    %1079 = vmatprep.subr.mxu0 0.0
    %1080 = vmatpush1.msra.mxu0 %v1040
    %1081 = vmatprep.subr.mxu0 0.0
    %1082 = vmatpush1.msra.mxu0 %v1041
    %1083 = vmatprep.subr.mxu0 0.0
    %1084 = vmatpush1.msra.mxu0 %v1042
    %1085 = vmatprep.subr.mxu0 0.0
    %1086 = vmatpush1.msra.mxu0 %v1043
    %1087 = vmatprep.subr.mxu0 0.0
    %1088 = vmatpush1.msra.mxu0 %v1044
    %1089 = vmatprep.subr.mxu0 0.0
    %1090 = vmatpush1.msra.mxu0 %v1045
    %1091 = vmatprep.subr.mxu0 0.0
    %1092 = vmatpush1.msra.mxu0 %v1046
    %1093 = vmatprep.subr.mxu0 0.0
    %1094 = vmatpush1.msra.mxu0 %v1047
    %1095 = vmatprep.subr.mxu0 0.0
    %1096 = vmatpush1.msra.mxu0 %v1048
    %1097 = vmatprep.subr.mxu0 0.0
    %1098 = vmatpush1.msra.mxu0 %v1049
    %1099 = vmatprep.subr.mxu0 0.0
    %1100 = vmatpush1.msra.mxu0 %v1050
    %1101 = vmatprep.subr.mxu0 0.0
    %1102 = vmatpush1.msra.mxu0 %v1051
    %1103 = vmatprep.subr.mxu0 0.0
    %1104 = vmatpush1.msra.mxu0 %v1052
    %1105 = vmatprep.subr.mxu0 0.0
    %1106 = vmatpush1.msra.mxu0 %v1053
    %1107 = vmatprep.subr.mxu0 0.0
    %1108 = vmatpush1.msra.mxu0 %v1054
    %1109 = vmatprep.subr.mxu0 0.0
    %1110 = vmatpush1.msra.mxu0 %v1055
    %1111 = vmatprep.subr.mxu0 0.0
    %1112 = vmatpush1.msra.mxu0 %v1056
    %1113 = vmatprep.subr.mxu0 0.0
    %1114 = vmatpush1.msra.mxu0 %v1057
    %1115 = vmatprep.subr.mxu0 0.0
    %1116 = vmatpush1.msra.mxu0 %v1058
    %1117 = vmatprep.subr.mxu0 0.0
    %1118 = vmatpush1.msra.mxu0 %v1059
    %1119 = vmatprep.subr.mxu0 0.0
    %1120 = vmatpush1.msra.mxu0 %v1060
    %1121 = vmatprep.subr.mxu0 0.0
    %1122 = vmatpush1.msra.mxu0 %v1061
    %1123 = vmatprep.subr.mxu0 0.0
    %1124 = vmatpush1.msra.mxu0 %v1062
    %1125 = vmatprep.subr.mxu0 0.0
    %1126 = vmatpush1.msra.mxu0 %v1063
    %1127 = vmatprep.subr.mxu0 0.0
    %1128 = vmatpush1.msra.mxu0 %v1064
    %1129 = vmatprep.mubr.f32.mxu0 %v986
    %1130 = vmatmul.mubr.f32.gmra.mrb[0].mxu0 %v985
    %v1131 = vpop.f32.mrb[0].mxu0
    %v1132 = vadd.f32 0.0, %v1131
    %v1133 = vpop.f32.mrb[0].mxu0
    %1134 = vmatprep.mubr.f32.mxu0 %v988
    %1135 = vmatmul.mubr.f32.gmra.mrb[0].mxu0 %v987
    %v1136 = vpop.f32.mrb[0].mxu0
    %v1137 = vadd.f32 0.0, %v1136
    %v1138 = vpop.f32.mrb[0].mxu0
    %1139 = vmatprep.mubr.f32.mxu0 %v990
    %1140 = vmatmul.mubr.f32.gmra.mrb[0].mxu0 %v989
    %v1141 = vpop.f32.mrb[0].mxu0
    %v1142 = vadd.f32 0.0, %v1141
    %v1143 = vpop.f32.mrb[0].mxu0
    %1144 = vmatprep.mubr.f32.mxu0 %v992
    %1145 = vmatmul.mubr.f32.gmra.mrb[0].mxu0 %v991
    %v1146 = vpop.f32.mrb[0].mxu0
    %v1147 = vadd.f32 0.0, %v1146
    %v1148 = vpop.f32.mrb[0].mxu0
    %1149 = vmatprep.mubr.f32.mxu0 %v994
    %1150 = vmatmul.mubr.f32.gmra.mrb[0].mxu0 %v993
    %v1151 = vpop.f32.mrb[0].mxu0
    %v1152 = vadd.f32 0.0, %v1151
    %v1153 = vpop.f32.mrb[0].mxu0
    %1154 = vmatprep.mubr.f32.mxu0 %v996
    %1155 = vmatmul.mubr.f32.gmra.mrb[0].mxu0 %v995
    %v1156 = vpop.f32.mrb[0].mxu0
    %v1157 = vadd.f32 0.0, %v1156
    %v1158 = vpop.f32.mrb[0].mxu0
    %1159 = vmatprep.mubr.f32.mxu0 %v998
    %1160 = vmatmul.mubr.f32.gmra.mrb[0].mxu0 %v997
    %v1161 = vpop.f32.mrb[0].mxu0
    %v1162 = vadd.f32 0.0, %v1161
    %v1163 = vpop.f32.mrb[0].mxu0
    %1164 = vmatprep.mubr.f32.mxu0 %v1000
    %1165 = vmatmul.mubr.f32.gmra.mrb[0].mxu0 %v999
    %v1166 = vpop.f32.mrb[0].mxu0
    %v1167 = vadd.f32 0.0, %v1166
    %v1168 = vpop.f32.mrb[0].mxu0
    %1169 = vdwg.mxu0
    %vm1170 = vcmask 523264
    %1171 = vst.msk [vmem:[#allocation2 + $0x8] sm:$0xff] %vm1170, %v1132
    %1172 = vst.msk [vmem:[#allocation2 + $0x28] sm:$0xff] %vm1170, %v1137
    %1173 = vst.msk [vmem:[#allocation2 + $0x48] sm:$0xff] %vm1170, %v1142
    %1174 = vst.msk [vmem:[#allocation2 + $0x68] sm:$0xff] %vm1170, %v1147
    %1175 = vst.msk [vmem:[#allocation2 + $0x88] sm:$0xff] %vm1170, %v1152
    %1176 = vst.msk [vmem:[#allocation2 + $0xa8] sm:$0xff] %vm1170, %v1157
    %1177 = vst.msk [vmem:[#allocation2 + $0xc8] sm:$0xff] %vm1170, %v1162
    %1178 = vst.msk [vmem:[#allocation2 + $0xe8] sm:$0xff] %vm1170, %v1167
    %v1179 = vld [vmem:[#allocation2] sm:$0xff]
    %v1180 = vld [vmem:[#allocation2 + $0x8] sm:$0xff]
    %v1181 = vld [vmem:[#allocation2 + $0x20] sm:$0xff]
    %v1182 = vld [vmem:[#allocation2 + $0x28] sm:$0xff]
    %v1183 = vld [vmem:[#allocation2 + $0x40] sm:$0xff]
    %v1184 = vld [vmem:[#allocation2 + $0x48] sm:$0xff]
    %v1185 = vld [vmem:[#allocation2 + $0x60] sm:$0xff]
    %v1186 = vld [vmem:[#allocation2 + $0x68] sm:$0xff]
    %v1187 = vld [vmem:[#allocation2 + $0x80] sm:$0xff]
    %v1188 = vld [vmem:[#allocation2 + $0x88] sm:$0xff]
    %v1189 = vld [vmem:[#allocation2 + $0xa0] sm:$0xff]
    %v1190 = vld [vmem:[#allocation2 + $0xa8] sm:$0xff]
    %v1191 = vld [vmem:[#allocation2 + $0xc0] sm:$0xff]
    %v1192 = vld [vmem:[#allocation2 + $0xc8] sm:$0xff]
    %v1193 = vld [vmem:[#allocation2 + $0xe0] sm:$0xff]
    %v1194 = vld [vmem:[#allocation2 + $0xe8] sm:$0xff]
    %1196 = vrot.lane.b32.xlu0 %v137, 119
    %v1197 = vpop.permute.xlu0 %1196
    %v1199 = vmul.f32 %v1179, %v1197
    %v1200 = vmul.f32 %v1180, %v1197
    %v1201 = vmul.f32 %v1181, %v1197
    %v1202 = vmul.f32 %v1182, %v1197
    %v1203 = vmul.f32 %v1183, %v1197
    %v1204 = vmul.f32 %v1184, %v1197
    %v1205 = vmul.f32 %v1185, %v1197
    %v1206 = vmul.f32 %v1186, %v1197
    %v1207 = vmul.f32 %v1187, %v1197
    %v1208 = vmul.f32 %v1188, %v1197
    %v1209 = vmul.f32 %v1189, %v1197
    %v1210 = vmul.f32 %v1190, %v1197
    %v1211 = vmul.f32 %v1191, %v1197
    %v1212 = vmul.f32 %v1192, %v1197
    %v1213 = vmul.f32 %v1193, %v1197
    %v1214 = vmul.f32 %v1194, %v1197
    %1216 = vrot.lane.b32.xlu0 %v139, 120
    %v1217 = vpop.permute.xlu0 %1216
    %v1219 = vmul.f32 %v1179, %v1217
    %v1220 = vmul.f32 %v1180, %v1217
    %v1221 = vmul.f32 %v1181, %v1217
    %v1222 = vmul.f32 %v1182, %v1217
    %v1223 = vmul.f32 %v1183, %v1217
    %v1224 = vmul.f32 %v1184, %v1217
    %v1225 = vmul.f32 %v1185, %v1217
    %v1226 = vmul.f32 %v1186, %v1217
    %v1227 = vmul.f32 %v1187, %v1217
    %v1228 = vmul.f32 %v1188, %v1217
    %v1229 = vmul.f32 %v1189, %v1217
    %v1230 = vmul.f32 %v1190, %v1217
    %v1231 = vmul.f32 %v1191, %v1217
    %v1232 = vmul.f32 %v1192, %v1217
    %v1233 = vmul.f32 %v1193, %v1217
    %v1234 = vmul.f32 %v1194, %v1217
    %1236 = vrot.lane.b32.xlu0 %v142, 121
    %v1237 = vpop.permute.xlu0 %1236
    %v1239 = vmul.f32 %v1179, %v1237
    %v1240 = vmul.f32 %v1180, %v1237
    %v1241 = vmul.f32 %v1181, %v1237
    %v1242 = vmul.f32 %v1182, %v1237
    %v1243 = vmul.f32 %v1183, %v1237
    %v1244 = vmul.f32 %v1184, %v1237
    %v1245 = vmul.f32 %v1185, %v1237
    %v1246 = vmul.f32 %v1186, %v1237
    %v1247 = vmul.f32 %v1187, %v1237
    %v1248 = vmul.f32 %v1188, %v1237
    %v1249 = vmul.f32 %v1189, %v1237
    %v1250 = vmul.f32 %v1190, %v1237
    %v1251 = vmul.f32 %v1191, %v1237
    %v1252 = vmul.f32 %v1192, %v1237
    %v1253 = vmul.f32 %v1193, %v1237
    %v1254 = vmul.f32 %v1194, %v1237
    %1256 = vrot.lane.b32.xlu0 %v144, 127
    %v1257 = vpop.permute.xlu0 %1256
    %v1259 = vmul.f32 %v1179, %v1257
    %v1260 = vmul.f32 %v1180, %v1257
    %v1261 = vmul.f32 %v1181, %v1257
    %v1262 = vmul.f32 %v1182, %v1257
    %v1263 = vmul.f32 %v1183, %v1257
    %v1264 = vmul.f32 %v1184, %v1257
    %v1265 = vmul.f32 %v1185, %v1257
    %v1266 = vmul.f32 %v1186, %v1257
    %v1267 = vmul.f32 %v1187, %v1257
    %v1268 = vmul.f32 %v1188, %v1257
    %v1269 = vmul.f32 %v1189, %v1257
    %v1270 = vmul.f32 %v1190, %v1257
    %v1271 = vmul.f32 %v1191, %v1257
    %v1272 = vmul.f32 %v1192, %v1257
    %v1273 = vmul.f32 %v1193, %v1257
    %v1274 = vmul.f32 %v1194, %v1257
    %1276 = vrot.lane.b32.xlu0 %v146, 1
    %v1277 = vpop.permute.xlu0 %1276
    %v1279 = vmul.f32 %v1180, %v1277
    %v1280 = vmul.f32 %v1182, %v1277
    %v1281 = vmul.f32 %v1184, %v1277
    %v1282 = vmul.f32 %v1186, %v1277
    %v1283 = vmul.f32 %v1188, %v1277
    %v1284 = vmul.f32 %v1190, %v1277
    %v1285 = vmul.f32 %v1192, %v1277
    %v1286 = vmul.f32 %v1194, %v1277
    %1288 = vrot.lane.b32.xlu0 %v149, 7
    %v1289 = vpop.permute.xlu0 %1288
    %v1291 = vmul.f32 %v1180, %v1289
    %v1292 = vmul.f32 %v1182, %v1289
    %v1293 = vmul.f32 %v1184, %v1289
    %v1294 = vmul.f32 %v1186, %v1289
    %v1295 = vmul.f32 %v1188, %v1289
    %v1296 = vmul.f32 %v1190, %v1289
    %v1297 = vmul.f32 %v1192, %v1289
    %v1298 = vmul.f32 %v1194, %v1289
    %1300 = vrot.lane.b32.xlu0 %v151, 8
    %v1301 = vpop.permute.xlu0 %1300
    %v1303 = vmul.f32 %v1180, %v1301
    %v1304 = vmul.f32 %v1182, %v1301
    %v1305 = vmul.f32 %v1184, %v1301
    %v1306 = vmul.f32 %v1186, %v1301
    %v1307 = vmul.f32 %v1188, %v1301
    %v1308 = vmul.f32 %v1190, %v1301
    %v1309 = vmul.f32 %v1192, %v1301
    %v1310 = vmul.f32 %v1194, %v1301
    %1312 = vrot.lane.b32.xlu0 %v154, 9
    %v1313 = vpop.permute.xlu0 %1312
    %v1315 = vmul.f32 %v1180, %v1313
    %v1316 = vmul.f32 %v1182, %v1313
    %v1317 = vmul.f32 %v1184, %v1313
    %v1318 = vmul.f32 %v1186, %v1313
    %v1319 = vmul.f32 %v1188, %v1313
    %v1320 = vmul.f32 %v1190, %v1313
    %v1321 = vmul.f32 %v1192, %v1313
    %v1322 = vmul.f32 %v1194, %v1313
    %1339 = vrot.lane.b32.xlu0 %v1219, 127
    %v1340 = vpop.permute.xlu0 %1339
    %1341 = vrot.lane.b32.xlu0 %v1220, 127
    %v1342 = vpop.permute.xlu0 %1341
    %1343 = vrot.lane.b32.xlu0 %v1221, 127
    %v1344 = vpop.permute.xlu0 %1343
    %1345 = vrot.lane.b32.xlu0 %v1222, 127
    %v1346 = vpop.permute.xlu0 %1345
    %1347 = vrot.lane.b32.xlu0 %v1223, 127
    %v1348 = vpop.permute.xlu0 %1347
    %1349 = vrot.lane.b32.xlu0 %v1224, 127
    %v1350 = vpop.permute.xlu0 %1349
    %1351 = vrot.lane.b32.xlu0 %v1225, 127
    %v1352 = vpop.permute.xlu0 %1351
    %1353 = vrot.lane.b32.xlu0 %v1226, 127
    %v1354 = vpop.permute.xlu0 %1353
    %1355 = vrot.lane.b32.xlu0 %v1227, 127
    %v1356 = vpop.permute.xlu0 %1355
    %1357 = vrot.lane.b32.xlu0 %v1228, 127
    %v1358 = vpop.permute.xlu0 %1357
    %1359 = vrot.lane.b32.xlu0 %v1229, 127
    %v1360 = vpop.permute.xlu0 %1359
    %1361 = vrot.lane.b32.xlu0 %v1230, 127
    %v1362 = vpop.permute.xlu0 %1361
    %1363 = vrot.lane.b32.xlu0 %v1231, 127
    %v1364 = vpop.permute.xlu0 %1363
    %1365 = vrot.lane.b32.xlu0 %v1232, 127
    %v1366 = vpop.permute.xlu0 %1365
    %1367 = vrot.lane.b32.xlu0 %v1233, 127
    %v1368 = vpop.permute.xlu0 %1367
    %1369 = vrot.lane.b32.xlu0 %v1234, 127
    %v1370 = vpop.permute.xlu0 %1369
    %v1371 = vsel %vm264, %v1340, %v1342
    %v1372 = vsel %vm264, %v1344, %v1346
    %v1373 = vsel %vm264, %v1348, %v1350
    %v1374 = vsel %vm264, %v1352, %v1354
    %v1375 = vsel %vm264, %v1356, %v1358
    %v1376 = vsel %vm264, %v1360, %v1362
    %v1377 = vsel %vm264, %v1364, %v1366
    %v1378 = vsel %vm264, %v1368, %v1370
    %1411 = vrot.lane.b32.xlu0 %v1239, 126
    %v1412 = vpop.permute.xlu0 %1411
    %1413 = vrot.lane.b32.xlu0 %v1240, 126
    %v1414 = vpop.permute.xlu0 %1413
    %1415 = vrot.lane.b32.xlu0 %v1241, 126
    %v1416 = vpop.permute.xlu0 %1415
    %1417 = vrot.lane.b32.xlu0 %v1242, 126
    %v1418 = vpop.permute.xlu0 %1417
    %1419 = vrot.lane.b32.xlu0 %v1243, 126
    %v1420 = vpop.permute.xlu0 %1419
    %1421 = vrot.lane.b32.xlu0 %v1244, 126
    %v1422 = vpop.permute.xlu0 %1421
    %1423 = vrot.lane.b32.xlu0 %v1245, 126
    %v1424 = vpop.permute.xlu0 %1423
    %1425 = vrot.lane.b32.xlu0 %v1246, 126
    %v1426 = vpop.permute.xlu0 %1425
    %1427 = vrot.lane.b32.xlu0 %v1247, 126
    %v1428 = vpop.permute.xlu0 %1427
    %1429 = vrot.lane.b32.xlu0 %v1248, 126
    %v1430 = vpop.permute.xlu0 %1429
    %1431 = vrot.lane.b32.xlu0 %v1249, 126
    %v1432 = vpop.permute.xlu0 %1431
    %1433 = vrot.lane.b32.xlu0 %v1250, 126
    %v1434 = vpop.permute.xlu0 %1433
    %1435 = vrot.lane.b32.xlu0 %v1251, 126
    %v1436 = vpop.permute.xlu0 %1435
    %1437 = vrot.lane.b32.xlu0 %v1252, 126
    %v1438 = vpop.permute.xlu0 %1437
    %1439 = vrot.lane.b32.xlu0 %v1253, 126
    %v1440 = vpop.permute.xlu0 %1439
    %1441 = vrot.lane.b32.xlu0 %v1254, 126
    %v1442 = vpop.permute.xlu0 %1441
    %v1443 = vsel %vm351, %v1412, %v1414
    %v1444 = vsel %vm351, %v1416, %v1418
    %v1445 = vsel %vm351, %v1420, %v1422
    %v1446 = vsel %vm351, %v1424, %v1426
    %v1447 = vsel %vm351, %v1428, %v1430
    %v1448 = vsel %vm351, %v1432, %v1434
    %v1449 = vsel %vm351, %v1436, %v1438
    %v1450 = vsel %vm351, %v1440, %v1442
    %1483 = vrot.lane.b32.xlu0 %v1259, 120
    %v1484 = vpop.permute.xlu0 %1483
    %1485 = vrot.lane.b32.xlu0 %v1260, 120
    %v1486 = vpop.permute.xlu0 %1485
    %1487 = vrot.lane.b32.xlu0 %v1261, 120
    %v1488 = vpop.permute.xlu0 %1487
    %1489 = vrot.lane.b32.xlu0 %v1262, 120
    %v1490 = vpop.permute.xlu0 %1489
    %1491 = vrot.lane.b32.xlu0 %v1263, 120
    %v1492 = vpop.permute.xlu0 %1491
    %1493 = vrot.lane.b32.xlu0 %v1264, 120
    %v1494 = vpop.permute.xlu0 %1493
    %1495 = vrot.lane.b32.xlu0 %v1265, 120
    %v1496 = vpop.permute.xlu0 %1495
    %1497 = vrot.lane.b32.xlu0 %v1266, 120
    %v1498 = vpop.permute.xlu0 %1497
    %1499 = vrot.lane.b32.xlu0 %v1267, 120
    %v1500 = vpop.permute.xlu0 %1499
    %1501 = vrot.lane.b32.xlu0 %v1268, 120
    %v1502 = vpop.permute.xlu0 %1501
    %1503 = vrot.lane.b32.xlu0 %v1269, 120
    %v1504 = vpop.permute.xlu0 %1503
    %1505 = vrot.lane.b32.xlu0 %v1270, 120
    %v1506 = vpop.permute.xlu0 %1505
    %1507 = vrot.lane.b32.xlu0 %v1271, 120
    %v1508 = vpop.permute.xlu0 %1507
    %1509 = vrot.lane.b32.xlu0 %v1272, 120
    %v1510 = vpop.permute.xlu0 %1509
    %1511 = vrot.lane.b32.xlu0 %v1273, 120
    %v1512 = vpop.permute.xlu0 %1511
    %1513 = vrot.lane.b32.xlu0 %v1274, 120
    %v1514 = vpop.permute.xlu0 %1513
    %vm1515 = vcmask 982016
    %v1516 = vsel %vm1515, %v1484, %v1486
    %v1517 = vsel %vm1515, %v1488, %v1490
    %v1518 = vsel %vm1515, %v1492, %v1494
    %v1519 = vsel %vm1515, %v1496, %v1498
    %v1520 = vsel %vm1515, %v1500, %v1502
    %v1521 = vsel %vm1515, %v1504, %v1506
    %v1522 = vsel %vm1515, %v1508, %v1510
    %v1523 = vsel %vm1515, %v1512, %v1514
    %1548 = vrot.lane.b32.xlu0 %v1180, 119
    %v1549 = vpop.permute.xlu0 %1548
    %1550 = vrot.lane.b32.xlu0 %v1182, 119
    %v1551 = vpop.permute.xlu0 %1550
    %1552 = vrot.lane.b32.xlu0 %v1184, 119
    %v1553 = vpop.permute.xlu0 %1552
    %1554 = vrot.lane.b32.xlu0 %v1186, 119
    %v1555 = vpop.permute.xlu0 %1554
    %1556 = vrot.lane.b32.xlu0 %v1188, 119
    %v1557 = vpop.permute.xlu0 %1556
    %1558 = vrot.lane.b32.xlu0 %v1190, 119
    %v1559 = vpop.permute.xlu0 %1558
    %1560 = vrot.lane.b32.xlu0 %v1192, 119
    %v1561 = vpop.permute.xlu0 %1560
    %1562 = vrot.lane.b32.xlu0 %v1194, 119
    %v1563 = vpop.permute.xlu0 %1562
    %1580 = vrot.lane.b32.xlu0 %v1279, 118
    %v1581 = vpop.permute.xlu0 %1580
    %1582 = vrot.lane.b32.xlu0 %v1280, 118
    %v1583 = vpop.permute.xlu0 %1582
    %1584 = vrot.lane.b32.xlu0 %v1281, 118
    %v1585 = vpop.permute.xlu0 %1584
    %1586 = vrot.lane.b32.xlu0 %v1282, 118
    %v1587 = vpop.permute.xlu0 %1586
    %1588 = vrot.lane.b32.xlu0 %v1283, 118
    %v1589 = vpop.permute.xlu0 %1588
    %1590 = vrot.lane.b32.xlu0 %v1284, 118
    %v1591 = vpop.permute.xlu0 %1590
    %1592 = vrot.lane.b32.xlu0 %v1285, 118
    %v1593 = vpop.permute.xlu0 %1592
    %1594 = vrot.lane.b32.xlu0 %v1286, 118
    %v1595 = vpop.permute.xlu0 %1594
    %1612 = vrot.lane.b32.xlu0 %v1291, 112
    %v1613 = vpop.permute.xlu0 %1612
    %1614 = vrot.lane.b32.xlu0 %v1292, 112
    %v1615 = vpop.permute.xlu0 %1614
    %1616 = vrot.lane.b32.xlu0 %v1293, 112
    %v1617 = vpop.permute.xlu0 %1616
    %1618 = vrot.lane.b32.xlu0 %v1294, 112
    %v1619 = vpop.permute.xlu0 %1618
    %1620 = vrot.lane.b32.xlu0 %v1295, 112
    %v1621 = vpop.permute.xlu0 %1620
    %1622 = vrot.lane.b32.xlu0 %v1296, 112
    %v1623 = vpop.permute.xlu0 %1622
    %1624 = vrot.lane.b32.xlu0 %v1297, 112
    %v1625 = vpop.permute.xlu0 %1624
    %1626 = vrot.lane.b32.xlu0 %v1298, 112
    %v1627 = vpop.permute.xlu0 %1626
    %1644 = vrot.lane.b32.xlu0 %v1303, 111
    %v1645 = vpop.permute.xlu0 %1644
    %1646 = vrot.lane.b32.xlu0 %v1304, 111
    %v1647 = vpop.permute.xlu0 %1646
    %1648 = vrot.lane.b32.xlu0 %v1305, 111
    %v1649 = vpop.permute.xlu0 %1648
    %1650 = vrot.lane.b32.xlu0 %v1306, 111
    %v1651 = vpop.permute.xlu0 %1650
    %1652 = vrot.lane.b32.xlu0 %v1307, 111
    %v1653 = vpop.permute.xlu0 %1652
    %1654 = vrot.lane.b32.xlu0 %v1308, 111
    %v1655 = vpop.permute.xlu0 %1654
    %1656 = vrot.lane.b32.xlu0 %v1309, 111
    %v1657 = vpop.permute.xlu0 %1656
    %1658 = vrot.lane.b32.xlu0 %v1310, 111
    %v1659 = vpop.permute.xlu0 %1658
    %1676 = vrot.lane.b32.xlu0 %v1315, 110
    %v1677 = vpop.permute.xlu0 %1676
    %1678 = vrot.lane.b32.xlu0 %v1316, 110
    %v1679 = vpop.permute.xlu0 %1678
    %1680 = vrot.lane.b32.xlu0 %v1317, 110
    %v1681 = vpop.permute.xlu0 %1680
    %1682 = vrot.lane.b32.xlu0 %v1318, 110
    %v1683 = vpop.permute.xlu0 %1682
    %1684 = vrot.lane.b32.xlu0 %v1319, 110
    %v1685 = vpop.permute.xlu0 %1684
    %1686 = vrot.lane.b32.xlu0 %v1320, 110
    %v1687 = vpop.permute.xlu0 %1686
    %1688 = vrot.lane.b32.xlu0 %v1321, 110
    %v1689 = vpop.permute.xlu0 %1688
    %1690 = vrot.lane.b32.xlu0 %v1322, 110
    %v1691 = vpop.permute.xlu0 %1690
    %v1700 = vpack.c.bf16 %v1201, %v1199
    %v1701 = vpack.c.bf16 %v1202, %v1200
    %v1702 = vpack.c.bf16 %v1205, %v1203
    %v1703 = vpack.c.bf16 %v1206, %v1204
    %v1704 = vpack.c.bf16 %v1209, %v1207
    %v1705 = vpack.c.bf16 %v1210, %v1208
    %v1706 = vpack.c.bf16 %v1213, %v1211
    %v1707 = vpack.c.bf16 %v1214, %v1212
    %v1708 = vpack.c.bf16 %v1372, %v1371
    %v1709 = vpack.c.bf16 %v1346, %v1342
    %v1710 = vpack.c.bf16 %v1374, %v1373
    %v1711 = vpack.c.bf16 %v1354, %v1350
    %v1712 = vpack.c.bf16 %v1376, %v1375
    %v1713 = vpack.c.bf16 %v1362, %v1358
    %v1714 = vpack.c.bf16 %v1378, %v1377
    %v1715 = vpack.c.bf16 %v1370, %v1366
    %v1716 = vpack.c.bf16 %v1444, %v1443
    %v1717 = vpack.c.bf16 %v1418, %v1414
    %v1718 = vpack.c.bf16 %v1446, %v1445
    %v1719 = vpack.c.bf16 %v1426, %v1422
    %v1720 = vpack.c.bf16 %v1448, %v1447
    %v1721 = vpack.c.bf16 %v1434, %v1430
    %v1722 = vpack.c.bf16 %v1450, %v1449
    %v1723 = vpack.c.bf16 %v1442, %v1438
    %v1724 = vpack.c.bf16 %v1517, %v1516
    %v1725 = vpack.c.bf16 %v1490, %v1486
    %v1726 = vpack.c.bf16 %v1519, %v1518
    %v1727 = vpack.c.bf16 %v1498, %v1494
    %v1728 = vpack.c.bf16 %v1521, %v1520
    %v1729 = vpack.c.bf16 %v1506, %v1502
    %v1730 = vpack.c.bf16 %v1523, %v1522
    %v1731 = vpack.c.bf16 %v1514, %v1510
    %v1732 = vpack.c.bf16 %v1551, %v1549
    %v1733 = vpack.c.bf16 %v1555, %v1553
    %v1734 = vpack.c.bf16 %v1559, %v1557
    %v1735 = vpack.c.bf16 %v1563, %v1561
    %v1736 = vpack.c.bf16 %v1583, %v1581
    %v1737 = vpack.c.bf16 %v1587, %v1585
    %v1738 = vpack.c.bf16 %v1591, %v1589
    %v1739 = vpack.c.bf16 %v1595, %v1593
    %v1740 = vpack.c.bf16 %v1615, %v1613
    %v1741 = vpack.c.bf16 %v1619, %v1617
    %v1742 = vpack.c.bf16 %v1623, %v1621
    %v1743 = vpack.c.bf16 %v1627, %v1625
    %v1744 = vpack.c.bf16 %v1647, %v1645
    %v1745 = vpack.c.bf16 %v1651, %v1649
    %v1746 = vpack.c.bf16 %v1655, %v1653
    %v1747 = vpack.c.bf16 %v1659, %v1657
    %v1748 = vpack.c.bf16 %v1679, %v1677
    %v1749 = vpack.c.bf16 %v1683, %v1681
    %v1750 = vpack.c.bf16 %v1687, %v1685
    %v1751 = vpack.c.bf16 %v1691, %v1689
    %v1752 = vld [vmem:[%s3] sm:$0xff]
    %v1753 = vld [vmem:[%s3 + $0x8] sm:$0xff]
    %v1754 = vld [vmem:[%s3 + $0x10] sm:$0xf]
    %v1755 = vld [vmem:[%s3 + $0x14] sm:$0xff]
    %v1756 = vld [vmem:[%s3 + $0x1c] sm:$0xff]
    %v1757 = vld [vmem:[%s3 + $0x24] sm:$0xf]
    %v1758 = vld [vmem:[%s4] sm:$0xff]
    %v1759 = vld [vmem:[%s4 + $0x8] sm:$0xff]
    %1761 = vset.pattern.permute.xlu0 0
    %1762 = vperm.xlu0 %1761, %v1758
    %v1763 = vpop.permute.xlu0 %1762
    %1766 = vset.pattern.permute.xlu0 0
    %1767 = vperm.xlu0 %1766, %v1759
    %v1768 = vpop.permute.xlu0 %1767
    %v1776 = vunpack.c.l.b16 %v1752
    %v1777 = vunpack.c.h.b16 %v1752
    %v1778 = vunpack.c.l.b16 %v1753
    %v1779 = vunpack.c.h.b16 %v1753
    %v1780 = vunpack.c.l.b16 %v1754
    %v1781 = vunpack.c.l.b16 %v1755
    %v1782 = vunpack.c.h.b16 %v1755
    %v1783 = vunpack.c.l.b16 %v1756
    %v1784 = vunpack.c.h.b16 %v1756
    %v1785 = vunpack.c.l.b16 %v1757
    %v1786 = vpack.c.b16 %v1781, %v1776
    %v1787 = vpack.c.b16 %v1782, %v1777
    %v1788 = vpack.c.b16 %v1783, %v1778
    %v1789 = vpack.c.b16 %v1784, %v1779
    %v1790 = vpack.c.b16 %v1785, %v1780
    %1847 = vrot.lane.b32.xlu0 %v1700, 9
    %v1848 = vpop.permute.xlu0 %1847
    %1849 = vrot.lane.b32.xlu0 %v1701, 9
    %v1850 = vpop.permute.xlu0 %1849
    %1851 = vrot.lane.b32.xlu0 %v1702, 9
    %v1852 = vpop.permute.xlu0 %1851
    %1853 = vrot.lane.b32.xlu0 %v1703, 9
    %v1854 = vpop.permute.xlu0 %1853
    %1855 = vrot.lane.b32.xlu0 %v1704, 9
    %v1856 = vpop.permute.xlu0 %1855
    %1857 = vrot.lane.b32.xlu0 %v1705, 9
    %v1858 = vpop.permute.xlu0 %1857
    %1859 = vrot.lane.b32.xlu0 %v1706, 9
    %v1860 = vpop.permute.xlu0 %1859
    %1861 = vrot.lane.b32.xlu0 %v1707, 9
    %v1862 = vpop.permute.xlu0 %1861
    %1863 = vrot.lane.b32.xlu0 %v1708, 9
    %v1864 = vpop.permute.xlu0 %1863
    %1865 = vrot.lane.b32.xlu0 %v1709, 9
    %v1866 = vpop.permute.xlu0 %1865
    %1867 = vrot.lane.b32.xlu0 %v1710, 9
    %v1868 = vpop.permute.xlu0 %1867
    %1869 = vrot.lane.b32.xlu0 %v1711, 9
    %v1870 = vpop.permute.xlu0 %1869
    %1871 = vrot.lane.b32.xlu0 %v1712, 9
    %v1872 = vpop.permute.xlu0 %1871
    %1873 = vrot.lane.b32.xlu0 %v1713, 9
    %v1874 = vpop.permute.xlu0 %1873
    %1875 = vrot.lane.b32.xlu0 %v1714, 9
    %v1876 = vpop.permute.xlu0 %1875
    %1877 = vrot.lane.b32.xlu0 %v1715, 9
    %v1878 = vpop.permute.xlu0 %1877
    %1879 = vrot.lane.b32.xlu0 %v1716, 9
    %v1880 = vpop.permute.xlu0 %1879
    %1881 = vrot.lane.b32.xlu0 %v1717, 9
    %v1882 = vpop.permute.xlu0 %1881
    %1883 = vrot.lane.b32.xlu0 %v1718, 9
    %v1884 = vpop.permute.xlu0 %1883
    %1885 = vrot.lane.b32.xlu0 %v1719, 9
    %v1886 = vpop.permute.xlu0 %1885
    %1887 = vrot.lane.b32.xlu0 %v1720, 9
    %v1888 = vpop.permute.xlu0 %1887
    %1889 = vrot.lane.b32.xlu0 %v1721, 9
    %v1890 = vpop.permute.xlu0 %1889
    %1891 = vrot.lane.b32.xlu0 %v1722, 9
    %v1892 = vpop.permute.xlu0 %1891
    %1893 = vrot.lane.b32.xlu0 %v1723, 9
    %v1894 = vpop.permute.xlu0 %1893
    %1895 = vrot.lane.b32.xlu0 %v1724, 9
    %v1896 = vpop.permute.xlu0 %1895
    %1897 = vrot.lane.b32.xlu0 %v1725, 9
    %v1898 = vpop.permute.xlu0 %1897
    %1899 = vrot.lane.b32.xlu0 %v1726, 9
    %v1900 = vpop.permute.xlu0 %1899
    %1901 = vrot.lane.b32.xlu0 %v1727, 9
    %v1902 = vpop.permute.xlu0 %1901
    %1903 = vrot.lane.b32.xlu0 %v1728, 9
    %v1904 = vpop.permute.xlu0 %1903
    %1905 = vrot.lane.b32.xlu0 %v1729, 9
    %v1906 = vpop.permute.xlu0 %1905
    %1907 = vrot.lane.b32.xlu0 %v1730, 9
    %v1908 = vpop.permute.xlu0 %1907
    %1909 = vrot.lane.b32.xlu0 %v1731, 9
    %v1910 = vpop.permute.xlu0 %1909
    %1911 = vrot.lane.b32.xlu0 %v1732, 9
    %v1912 = vpop.permute.xlu0 %1911
    %1913 = vrot.lane.b32.xlu0 %v1733, 9
    %v1914 = vpop.permute.xlu0 %1913
    %1915 = vrot.lane.b32.xlu0 %v1734, 9
    %v1916 = vpop.permute.xlu0 %1915
    %1917 = vrot.lane.b32.xlu0 %v1735, 9
    %v1918 = vpop.permute.xlu0 %1917
    %1919 = vrot.lane.b32.xlu0 %v1736, 9
    %v1920 = vpop.permute.xlu0 %1919
    %1921 = vrot.lane.b32.xlu0 %v1737, 9
    %v1922 = vpop.permute.xlu0 %1921
    %1923 = vrot.lane.b32.xlu0 %v1738, 9
    %v1924 = vpop.permute.xlu0 %1923
    %1925 = vrot.lane.b32.xlu0 %v1739, 9
    %v1926 = vpop.permute.xlu0 %1925
    %1927 = vrot.lane.b32.xlu0 %v1740, 9
    %v1928 = vpop.permute.xlu0 %1927
    %1929 = vrot.lane.b32.xlu0 %v1741, 9
    %v1930 = vpop.permute.xlu0 %1929
    %1931 = vrot.lane.b32.xlu0 %v1742, 9
    %v1932 = vpop.permute.xlu0 %1931
    %1933 = vrot.lane.b32.xlu0 %v1743, 9
    %v1934 = vpop.permute.xlu0 %1933
    %1935 = vrot.lane.b32.xlu0 %v1744, 9
    %v1936 = vpop.permute.xlu0 %1935
    %1937 = vrot.lane.b32.xlu0 %v1745, 9
    %v1938 = vpop.permute.xlu0 %1937
    %1939 = vrot.lane.b32.xlu0 %v1746, 9
    %v1940 = vpop.permute.xlu0 %1939
    %1941 = vrot.lane.b32.xlu0 %v1747, 9
    %v1942 = vpop.permute.xlu0 %1941
    %1943 = vrot.lane.b32.xlu0 %v1748, 9
    %v1944 = vpop.permute.xlu0 %1943
    %1945 = vrot.lane.b32.xlu0 %v1749, 9
    %v1946 = vpop.permute.xlu0 %1945
    %1947 = vrot.lane.b32.xlu0 %v1750, 9
    %v1948 = vpop.permute.xlu0 %1947
    %1949 = vrot.lane.b32.xlu0 %v1751, 9
    %v1950 = vpop.permute.xlu0 %1949
    %vm1951 = vcmask 72704
    %v1952 = vsel %vm1951, %v1848, %v1850
    %v1953 = vsel %vm1951, %v1852, %v1854
    %v1954 = vsel %vm1951, %v1856, %v1858
    %v1955 = vsel %vm1951, %v1860, %v1862
    %v1956 = vsel %vm1951, %v1864, %v1866
    %v1957 = vsel %vm1951, %v1868, %v1870
    %v1958 = vsel %vm1951, %v1872, %v1874
    %v1959 = vsel %vm1951, %v1876, %v1878
    %v1960 = vsel %vm1951, %v1880, %v1882
    %v1961 = vsel %vm1951, %v1884, %v1886
    %v1962 = vsel %vm1951, %v1888, %v1890
    %v1963 = vsel %vm1951, %v1892, %v1894
    %v1964 = vsel %vm1951, %v1896, %v1898
    %v1965 = vsel %vm1951, %v1900, %v1902
    %v1966 = vsel %vm1951, %v1904, %v1906
    %v1967 = vsel %vm1951, %v1908, %v1910
    %v2005 = vsel %vm1170, %v1790, 0
    %2007 = vmatprep.subr.bf16.mxu0 0
    %2008 = vmatpush1.bf16.msra.mxu0 %v1952
    %2009 = vmatprep.subr.bf16.mxu0 0
    %2010 = vmatpush1.bf16.msra.mxu0 %v1953
    %2011 = vmatprep.subr.bf16.mxu0 0
    %2012 = vmatpush1.bf16.msra.mxu0 %v1954
    %2013 = vmatprep.subr.bf16.mxu0 0
    %2014 = vmatpush1.bf16.msra.mxu0 %v1955
    %2015 = vmatprep.subr.bf16.mxu0 0
    %2016 = vmatpush1.bf16.msra.mxu0 %v1956
    %2017 = vmatprep.subr.bf16.mxu0 0
    %2018 = vmatpush1.bf16.msra.mxu0 %v1957
    %2019 = vmatprep.subr.bf16.mxu0 0
    %2020 = vmatpush1.bf16.msra.mxu0 %v1958
    %2021 = vmatprep.subr.bf16.mxu0 0
    %2022 = vmatpush1.bf16.msra.mxu0 %v1959
    %2023 = vmatprep.subr.bf16.mxu0 0
    %2024 = vmatpush1.bf16.msra.mxu0 %v1960
    %2025 = vmatprep.subr.bf16.mxu0 0
    %2026 = vmatpush1.bf16.msra.mxu0 %v1961
    %2027 = vmatprep.subr.bf16.mxu0 0
    %2028 = vmatpush1.bf16.msra.mxu0 %v1962
    %2029 = vmatprep.subr.bf16.mxu0 0
    %2030 = vmatpush1.bf16.msra.mxu0 %v1963
    %2031 = vmatprep.subr.bf16.mxu0 0
    %2032 = vmatpush1.bf16.msra.mxu0 %v1964
    %2033 = vmatprep.subr.bf16.mxu0 0
    %2034 = vmatpush1.bf16.msra.mxu0 %v1965
    %2035 = vmatprep.subr.bf16.mxu0 0
    %2036 = vmatpush1.bf16.msra.mxu0 %v1966
    %2037 = vmatprep.subr.bf16.mxu0 0
    %2038 = vmatpush1.bf16.msra.mxu0 %v1967
    %2039 = vmatprep.mubr.bf16.mxu0 %v1787
    %2040 = vmatmul.mubr.bf16.gmra.mrb[0].mxu0 %v1786
    %v2041 = vpop.f32.mrb[0].mxu0
    %v2042 = vadd.f32 %v1763, %v2041
    %v2043 = vpop.f32.mrb[0].mxu0
    %v2044 = vpop.f32.mrb[0].mxu0
    %v2045 = vadd.f32 %v1768, %v2044
    %v2046 = vpop.f32.mrb[0].mxu0
    %2047 = vdwg.mxu0
    %2048 = vmatprep.subr.bf16.mxu0 0
    %2049 = vmatpush1.bf16.msra.mxu0 %v1912
    %2050 = vmatprep.subr.bf16.mxu0 0
    %2051 = vmatpush1.bf16.msra.mxu0 %v1914
    %2052 = vmatprep.subr.bf16.mxu0 0
    %2053 = vmatpush1.bf16.msra.mxu0 %v1916
    %2054 = vmatprep.subr.bf16.mxu0 0
    %2055 = vmatpush1.bf16.msra.mxu0 %v1918
    %2056 = vmatprep.subr.bf16.mxu0 0
    %2057 = vmatpush1.bf16.msra.mxu0 %v1920
    %2058 = vmatprep.subr.bf16.mxu0 0
    %2059 = vmatpush1.bf16.msra.mxu0 %v1922
    %2060 = vmatprep.subr.bf16.mxu0 0
    %2061 = vmatpush1.bf16.msra.mxu0 %v1924
    %2062 = vmatprep.subr.bf16.mxu0 0
    %2063 = vmatpush1.bf16.msra.mxu0 %v1926
    %2064 = vmatprep.subr.bf16.mxu0 0
    %2065 = vmatpush1.bf16.msra.mxu0 %v1928
    %2066 = vmatprep.subr.bf16.mxu0 0
    %2067 = vmatpush1.bf16.msra.mxu0 %v1930
    %2068 = vmatprep.subr.bf16.mxu0 0
    %2069 = vmatpush1.bf16.msra.mxu0 %v1932
    %2070 = vmatprep.subr.bf16.mxu0 0
    %2071 = vmatpush1.bf16.msra.mxu0 %v1934
    %2072 = vmatprep.subr.bf16.mxu0 0
    %2073 = vmatpush1.bf16.msra.mxu0 %v1936
    %2074 = vmatprep.subr.bf16.mxu0 0
    %2075 = vmatpush1.bf16.msra.mxu0 %v1938
    %2076 = vmatprep.subr.bf16.mxu0 0
    %2077 = vmatpush1.bf16.msra.mxu0 %v1940
    %2078 = vmatprep.subr.bf16.mxu0 0
    %2079 = vmatpush1.bf16.msra.mxu0 %v1942
    %2080 = vmatprep.mubr.bf16.mxu0 %v1789
    %2081 = vmatmul.mubr.bf16.gmra.mrb[0].mxu0 %v1788
    %v2082 = vpop.f32.mrb[0].mxu0
    %v2083 = vadd.f32 %v2042, %v2082
    %v2084 = vpop.f32.mrb[0].mxu0
    %v2085 = vpop.f32.mrb[0].mxu0
    %v2086 = vadd.f32 %v2045, %v2085
    %v2087 = vpop.f32.mrb[0].mxu0
    %2088 = vdwg.mxu0
    %2089 = vmatprep.subr.bf16.mxu0 0
    %2090 = vmatpush1.bf16.msra.mxu0 %v1944
    %2091 = vmatprep.subr.bf16.mxu0 0
    %2092 = vmatpush1.bf16.msra.mxu0 %v1946
    %2093 = vmatprep.subr.bf16.mxu0 0
    %2094 = vmatpush1.bf16.msra.mxu0 %v1948
    %2095 = vmatprep.subr.bf16.mxu0 0
    %2096 = vmatpush1.bf16.msra.mxu0 %v1950
    %2097 = vmatprep.subr.bf16.mxu0 0
    %2098 = vmatpush1.bf16.msra.mxu0 0
    %2099 = vmatprep.subr.bf16.mxu0 0
    %2100 = vmatpush1.bf16.msra.mxu0 0
    %2101 = vmatprep.subr.bf16.mxu0 0
    %2102 = vmatpush1.bf16.msra.mxu0 0
    %2103 = vmatprep.subr.bf16.mxu0 0
    %2104 = vmatpush1.bf16.msra.mxu0 0
    %2105 = vmatprep.subr.bf16.mxu0 0
    %2106 = vmatpush1.bf16.msra.mxu0 0
    %2107 = vmatprep.subr.bf16.mxu0 0
    %2108 = vmatpush1.bf16.msra.mxu0 0
    %2109 = vmatprep.subr.bf16.mxu0 0
    %2110 = vmatpush1.bf16.msra.mxu0 0
    %2111 = vmatprep.subr.bf16.mxu0 0
    %2112 = vmatpush1.bf16.msra.mxu0 0
    %2113 = vmatprep.subr.bf16.mxu0 0
    %2114 = vmatpush1.bf16.msra.mxu0 0
    %2115 = vmatprep.subr.bf16.mxu0 0
    %2116 = vmatpush1.bf16.msra.mxu0 0
    %2117 = vmatprep.subr.bf16.mxu0 0
    %2118 = vmatpush1.bf16.msra.mxu0 0
    %2119 = vmatprep.subr.bf16.mxu0 0
    %2120 = vmatpush1.bf16.msra.mxu0 0
    %2121 = vmatprep.mubr.bf16.mxu0 0
    %2122 = vmatmul.mubr.bf16.gmra.mrb[0].mxu0 %v2005
    %v2123 = vpop.f32.mrb[0].mxu0
    %v2124 = vadd.f32 %v2083, %v2123
    %v2125 = vpop.f32.mrb[0].mxu0
    %v2126 = vpop.f32.mrb[0].mxu0
    %v2127 = vadd.f32 %v2086, %v2126
    %v2128 = vpop.f32.mrb[0].mxu0
    %2129 = vdwg.mxu0
    %v2130 = vmax.f32 %v2124, 0.0
    %v2131 = vmax.f32 %v2127, 0.0
    %2132 = vst.msk [vmem:[#allocation2 + $0x8] sm:$0xff] %vm1170, %v2130
    %2133 = vst.msk [vmem:[#allocation2 + $0x28] sm:$0xff] %vm1170, %v2131
    %v2134 = vld [vmem:[#allocation2 + $0x8] sm:$0xff]
    %v2135 = vld [vmem:[#allocation2 + $0x28] sm:$0xff]
    %2138 = vrot.lane.b32.xlu0 %v2134, 127
    %v2139 = vpop.permute.xlu0 %2138
    %2140 = vrot.lane.b32.xlu0 %v2135, 127
    %v2141 = vpop.permute.xlu0 %2140
    %v2144 = vmax.f32 %v2134, %v2139
    %v2145 = vmax.f32 %v2135, %v2141
    %2148 = vrot.lane.b32.xlu0 %v2144, 120
    %v2149 = vpop.permute.xlu0 %2148
    %2150 = vrot.lane.b32.xlu0 %v2145, 120
    %v2151 = vpop.permute.xlu0 %2150
    %v2154 = vmax.f32 %v2144, %v2149
    %v2155 = vmax.f32 %v2145, %v2151
    %v2156 = vld [vmem:[%s14] sm:$0xf]
    %v2157 = vld [vmem:[%s14 + $0x4] sm:$0xf]
    %v2158 = vld [vmem:[%s14 + $0x8] sm:$0xf]
    %v2159 = vld [vmem:[%s14 + $0xc] sm:$0xf]
    %v2160 = vld [vmem:[%s14 + $0x10] sm:$0xf]
    %v2161 = vld [vmem:[%s14 + $0x14] sm:$0xf]
    %v2162 = vld [vmem:[%s14 + $0x18] sm:$0xf]
    %v2163 = vld [vmem:[%s14 + $0x1c] sm:$0xf]
    %v2164 = vunpack.c.l.bf16 %v2156
    %v2165 = vunpack.c.l.bf16 %v2157
    %v2166 = vunpack.c.l.bf16 %v2158
    %v2167 = vunpack.c.l.bf16 %v2159
    %v2168 = vunpack.c.l.bf16 %v2160
    %v2169 = vunpack.c.l.bf16 %v2161
    %v2170 = vunpack.c.l.bf16 %v2162
    %v2171 = vunpack.c.l.bf16 %v2163
    %v2173 = vsel %vm1170, %v2154, 0
    %v2176 = vsel %vm1170, %v2155, 0
    %2178 = vmatprep.subr.mxu0 0.0
    %2179 = vmatpush1.msra.mxu0 %v2164
    %2180 = vmatprep.subr.mxu0 0.0
    %2181 = vmatpush1.msra.mxu0 %v2165
    %2182 = vmatprep.subr.mxu0 0.0
    %2183 = vmatpush1.msra.mxu0 %v2166
    %2184 = vmatprep.subr.mxu0 0.0
    %2185 = vmatpush1.msra.mxu0 %v2167
    %2186 = vmatprep.subr.mxu0 0.0
    %2187 = vmatpush1.msra.mxu0 %v2168
    %2188 = vmatprep.subr.mxu0 0.0
    %2189 = vmatpush1.msra.mxu0 %v2169
    %2190 = vmatprep.subr.mxu0 0.0
    %2191 = vmatpush1.msra.mxu0 %v2170
    %2192 = vmatprep.subr.mxu0 0.0
    %2193 = vmatpush1.msra.mxu0 %v2171
    %2194 = vmatprep.subr.mxu0 0.0
    %2195 = vmatpush1.msra.mxu0 0.0
    %2196 = vmatprep.subr.mxu0 0.0
    %2197 = vmatpush1.msra.mxu0 0.0
    %2198 = vmatprep.subr.mxu0 0.0
    %2199 = vmatpush1.msra.mxu0 0.0
    %2200 = vmatprep.subr.mxu0 0.0
    %2201 = vmatpush1.msra.mxu0 0.0
    %2202 = vmatprep.subr.mxu0 0.0
    %2203 = vmatpush1.msra.mxu0 0.0
    %2204 = vmatprep.subr.mxu0 0.0
    %2205 = vmatpush1.msra.mxu0 0.0
    %2206 = vmatprep.subr.mxu0 0.0
    %2207 = vmatpush1.msra.mxu0 0.0
    %2208 = vmatprep.subr.mxu0 0.0
    %2209 = vmatpush1.msra.mxu0 0.0
    %2210 = vmatprep.subr.mxu0 0.0
    %2211 = vmatpush1.msra.mxu0 0.0
    %2212 = vmatprep.subr.mxu0 0.0
    %2213 = vmatpush1.msra.mxu0 0.0
    %2214 = vmatprep.subr.mxu0 0.0
    %2215 = vmatpush1.msra.mxu0 0.0
    %2216 = vmatprep.subr.mxu0 0.0
    %2217 = vmatpush1.msra.mxu0 0.0
    %2218 = vmatprep.subr.mxu0 0.0
    %2219 = vmatpush1.msra.mxu0 0.0
    %2220 = vmatprep.subr.mxu0 0.0
    %2221 = vmatpush1.msra.mxu0 0.0
    %2222 = vmatprep.subr.mxu0 0.0
    %2223 = vmatpush1.msra.mxu0 0.0
    %2224 = vmatprep.subr.mxu0 0.0
    %2225 = vmatpush1.msra.mxu0 0.0
    %2226 = vmatprep.subr.mxu0 0.0
    %2227 = vmatpush1.msra.mxu0 0.0
    %2228 = vmatprep.subr.mxu0 0.0
    %2229 = vmatpush1.msra.mxu0 0.0
    %2230 = vmatprep.subr.mxu0 0.0
    %2231 = vmatpush1.msra.mxu0 0.0
    %2232 = vmatprep.subr.mxu0 0.0
    %2233 = vmatpush1.msra.mxu0 0.0
    %2234 = vmatprep.subr.mxu0 0.0
    %2235 = vmatpush1.msra.mxu0 0.0
    %2236 = vmatprep.subr.mxu0 0.0
    %2237 = vmatpush1.msra.mxu0 0.0
    %2238 = vmatprep.subr.mxu0 0.0
    %2239 = vmatpush1.msra.mxu0 0.0
    %2240 = vmatprep.subr.mxu0 0.0
    %2241 = vmatpush1.msra.mxu0 0.0
    %2242 = vmatprep.mubr.f32.mxu0 0.0
    %2243 = vmatmul.mubr.f32.gmra.mrb[0].mxu0 %v2173
    %v2244 = vpop.f32.mrb[0].mxu0
    %v2245 = vadd.f32 0.0, %v2244
    %v2246 = vpop.f32.mrb[0].mxu0
    %2247 = vmatprep.mubr.f32.mxu0 0.0
    %2248 = vmatmul.mubr.f32.gmra.mrb[0].mxu0 %v2176
    %v2249 = vpop.f32.mrb[0].mxu0
    %v2250 = vadd.f32 0.0, %v2249
    %v2251 = vpop.f32.mrb[0].mxu0
    %2252 = vdwg.mxu0
    %2253 = vst.msk [vmem:[#allocation2 + $0x8] sm:$0xff] %vm306, %v2245
    %2254 = vst.msk [vmem:[#allocation2 + $0x28] sm:$0xff] %vm306, %v2250
    %v2255 = vld [vmem:[#allocation2] sm:$0xff]
    %v2256 = vld [vmem:[#allocation2 + $0x8] sm:$0xff]
    %v2257 = vld [vmem:[#allocation2 + $0x20] sm:$0xff]
    %v2258 = vld [vmem:[#allocation2 + $0x28] sm:$0xff]
    %2260 = vrot.lane.b32.xlu0 %v111, 123
    %v2261 = vpop.permute.xlu0 %2260
    %v2263 = vmul.f32 %v2255, %v2261
    %v2264 = vmul.f32 %v2256, %v2261
    %v2265 = vmul.f32 %v2257, %v2261
    %v2266 = vmul.f32 %v2258, %v2261
    %2268 = vrot.lane.b32.xlu0 %v113, 124
    %v2269 = vpop.permute.xlu0 %2268
    %v2271 = vmul.f32 %v2255, %v2269
    %v2272 = vmul.f32 %v2256, %v2269
    %v2273 = vmul.f32 %v2257, %v2269
    %v2274 = vmul.f32 %v2258, %v2269
    %2276 = vrot.lane.b32.xlu0 %v116, 125
    %v2277 = vpop.permute.xlu0 %2276
    %v2279 = vmul.f32 %v2255, %v2277
    %v2280 = vmul.f32 %v2256, %v2277
    %v2281 = vmul.f32 %v2257, %v2277
    %v2282 = vmul.f32 %v2258, %v2277
    %2284 = vrot.lane.b32.xlu0 %v118, 127
    %v2285 = vpop.permute.xlu0 %2284
    %v2287 = vmul.f32 %v2255, %v2285
    %v2288 = vmul.f32 %v2256, %v2285
    %v2289 = vmul.f32 %v2257, %v2285
    %v2290 = vmul.f32 %v2258, %v2285
    %2292 = vrot.lane.b32.xlu0 %v120, 1
    %v2293 = vpop.permute.xlu0 %2292
    %v2295 = vmul.f32 %v2256, %v2293
    %v2296 = vmul.f32 %v2258, %v2293
    %2298 = vrot.lane.b32.xlu0 %v123, 3
    %v2299 = vpop.permute.xlu0 %2298
    %v2301 = vmul.f32 %v2256, %v2299
    %v2302 = vmul.f32 %v2258, %v2299
    %2304 = vrot.lane.b32.xlu0 %v125, 4
    %v2305 = vpop.permute.xlu0 %2304
    %v2307 = vmul.f32 %v2256, %v2305
    %v2308 = vmul.f32 %v2258, %v2305
    %2310 = vrot.lane.b32.xlu0 %v128, 5
    %v2311 = vpop.permute.xlu0 %2310
    %v2313 = vmul.f32 %v2256, %v2311
    %v2314 = vmul.f32 %v2258, %v2311
    %2319 = vrot.lane.b32.xlu0 %v2271, 127
    %v2320 = vpop.permute.xlu0 %2319
    %2321 = vrot.lane.b32.xlu0 %v2272, 127
    %v2322 = vpop.permute.xlu0 %2321
    %2323 = vrot.lane.b32.xlu0 %v2273, 127
    %v2324 = vpop.permute.xlu0 %2323
    %2325 = vrot.lane.b32.xlu0 %v2274, 127
    %v2326 = vpop.permute.xlu0 %2325
    %v2327 = vsel %vm264, %v2320, %v2322
    %v2328 = vsel %vm264, %v2324, %v2326
    %2337 = vrot.lane.b32.xlu0 %v2279, 126
    %v2338 = vpop.permute.xlu0 %2337
    %2339 = vrot.lane.b32.xlu0 %v2280, 126
    %v2340 = vpop.permute.xlu0 %2339
    %2341 = vrot.lane.b32.xlu0 %v2281, 126
    %v2342 = vpop.permute.xlu0 %2341
    %2343 = vrot.lane.b32.xlu0 %v2282, 126
    %v2344 = vpop.permute.xlu0 %2343
    %v2345 = vsel %vm351, %v2338, %v2340
    %v2346 = vsel %vm351, %v2342, %v2344
    %2355 = vrot.lane.b32.xlu0 %v2287, 124
    %v2356 = vpop.permute.xlu0 %2355
    %2357 = vrot.lane.b32.xlu0 %v2288, 124
    %v2358 = vpop.permute.xlu0 %2357
    %2359 = vrot.lane.b32.xlu0 %v2289, 124
    %v2360 = vpop.permute.xlu0 %2359
    %2361 = vrot.lane.b32.xlu0 %v2290, 124
    %v2362 = vpop.permute.xlu0 %2361
    %vm2363 = vcmask 1014784
    %v2364 = vsel %vm2363, %v2356, %v2358
    %v2365 = vsel %vm2363, %v2360, %v2362
    %2372 = vrot.lane.b32.xlu0 %v2256, 123
    %v2373 = vpop.permute.xlu0 %2372
    %2374 = vrot.lane.b32.xlu0 %v2258, 123
    %v2375 = vpop.permute.xlu0 %2374
    %2380 = vrot.lane.b32.xlu0 %v2295, 122
    %v2381 = vpop.permute.xlu0 %2380
    %2382 = vrot.lane.b32.xlu0 %v2296, 122
    %v2383 = vpop.permute.xlu0 %2382
    %2388 = vrot.lane.b32.xlu0 %v2301, 120
    %v2389 = vpop.permute.xlu0 %2388
    %2390 = vrot.lane.b32.xlu0 %v2302, 120
    %v2391 = vpop.permute.xlu0 %2390
    %2396 = vrot.lane.b32.xlu0 %v2307, 119
    %v2397 = vpop.permute.xlu0 %2396
    %2398 = vrot.lane.b32.xlu0 %v2308, 119
    %v2399 = vpop.permute.xlu0 %2398
    %2404 = vrot.lane.b32.xlu0 %v2313, 118
    %v2405 = vpop.permute.xlu0 %2404
    %2406 = vrot.lane.b32.xlu0 %v2314, 118
    %v2407 = vpop.permute.xlu0 %2406
    %v2410 = vpack.c.bf16 %v2265, %v2263
    %v2411 = vpack.c.bf16 %v2266, %v2264
    %v2412 = vpack.c.bf16 %v2328, %v2327
    %v2413 = vpack.c.bf16 %v2326, %v2322
    %v2414 = vpack.c.bf16 %v2346, %v2345
    %v2415 = vpack.c.bf16 %v2344, %v2340
    %v2416 = vpack.c.bf16 %v2365, %v2364
    %v2417 = vpack.c.bf16 %v2362, %v2358
    %v2418 = vpack.c.bf16 %v2375, %v2373
    %v2419 = vpack.c.bf16 %v2383, %v2381
    %v2420 = vpack.c.bf16 %v2391, %v2389
    %v2421 = vpack.c.bf16 %v2399, %v2397
    %v2422 = vpack.c.bf16 %v2407, %v2405
    %v2423 = vld [vmem:[%s5] sm:$0xff]
    %v2424 = vld [vmem:[%s5 + $0x8] sm:$0xff]
    %v2425 = vld [vmem:[%s6] sm:$0xff]
    %v2426 = vld [vmem:[%s6 + $0x8] sm:$0xff]
    %2428 = vset.pattern.permute.xlu0 0
    %2429 = vperm.xlu0 %2428, %v2425
    %v2430 = vpop.permute.xlu0 %2429
    %2433 = vset.pattern.permute.xlu0 0
    %2434 = vperm.xlu0 %2433, %v2426
    %v2435 = vpop.permute.xlu0 %2434
    %v2439 = vunpack.c.l.b16 %v2423
    %v2440 = vunpack.c.h.b16 %v2423
    %v2441 = vunpack.c.l.b16 %v2424
    %v2442 = vunpack.c.h.b16 %v2424
    %v2443 = vpack.c.b16 %v2441, %v2439
    %v2444 = vpack.c.b16 %v2442, %v2440
    %2459 = vrot.lane.b32.xlu0 %v2410, 5
    %v2460 = vpop.permute.xlu0 %2459
    %2461 = vrot.lane.b32.xlu0 %v2411, 5
    %v2462 = vpop.permute.xlu0 %2461
    %2463 = vrot.lane.b32.xlu0 %v2412, 5
    %v2464 = vpop.permute.xlu0 %2463
    %2465 = vrot.lane.b32.xlu0 %v2413, 5
    %v2466 = vpop.permute.xlu0 %2465
    %2467 = vrot.lane.b32.xlu0 %v2414, 5
    %v2468 = vpop.permute.xlu0 %2467
    %2469 = vrot.lane.b32.xlu0 %v2415, 5
    %v2470 = vpop.permute.xlu0 %2469
    %2471 = vrot.lane.b32.xlu0 %v2416, 5
    %v2472 = vpop.permute.xlu0 %2471
    %2473 = vrot.lane.b32.xlu0 %v2417, 5
    %v2474 = vpop.permute.xlu0 %2473
    %2475 = vrot.lane.b32.xlu0 %v2418, 5
    %v2476 = vpop.permute.xlu0 %2475
    %2477 = vrot.lane.b32.xlu0 %v2419, 5
    %v2478 = vpop.permute.xlu0 %2477
    %2479 = vrot.lane.b32.xlu0 %v2420, 5
    %v2480 = vpop.permute.xlu0 %2479
    %2481 = vrot.lane.b32.xlu0 %v2421, 5
    %v2482 = vpop.permute.xlu0 %2481
    %2483 = vrot.lane.b32.xlu0 %v2422, 5
    %v2484 = vpop.permute.xlu0 %2483
    %vm2485 = vcmask 39936
    %v2486 = vsel %vm2485, %v2460, %v2462
    %v2487 = vsel %vm2485, %v2464, %v2466
    %v2488 = vsel %vm2485, %v2468, %v2470
    %v2489 = vsel %vm2485, %v2472, %v2474
    %v2500 = vsel %vm306, %v2444, 0
    %2502 = vmatprep.subr.bf16.mxu0 0
    %2503 = vmatpush1.bf16.msra.mxu0 %v2486
    %2504 = vmatprep.subr.bf16.mxu0 0
    %2505 = vmatpush1.bf16.msra.mxu0 %v2487
    %2506 = vmatprep.subr.bf16.mxu0 0
    %2507 = vmatpush1.bf16.msra.mxu0 %v2488
    %2508 = vmatprep.subr.bf16.mxu0 0
    %2509 = vmatpush1.bf16.msra.mxu0 %v2489
    %2510 = vmatprep.subr.bf16.mxu0 0
    %2511 = vmatpush1.bf16.msra.mxu0 %v2476
    %2512 = vmatprep.subr.bf16.mxu0 0
    %2513 = vmatpush1.bf16.msra.mxu0 %v2478
    %2514 = vmatprep.subr.bf16.mxu0 0
    %2515 = vmatpush1.bf16.msra.mxu0 %v2480
    %2516 = vmatprep.subr.bf16.mxu0 0
    %2517 = vmatpush1.bf16.msra.mxu0 %v2482
    %2518 = vmatprep.subr.bf16.mxu0 0
    %2519 = vmatpush1.bf16.msra.mxu0 %v2484
    %2520 = vmatprep.subr.bf16.mxu0 0
    %2521 = vmatpush1.bf16.msra.mxu0 0
    %2522 = vmatprep.subr.bf16.mxu0 0
    %2523 = vmatpush1.bf16.msra.mxu0 0
    %2524 = vmatprep.subr.bf16.mxu0 0
    %2525 = vmatpush1.bf16.msra.mxu0 0
    %2526 = vmatprep.subr.bf16.mxu0 0
    %2527 = vmatpush1.bf16.msra.mxu0 0
    %2528 = vmatprep.subr.bf16.mxu0 0
    %2529 = vmatpush1.bf16.msra.mxu0 0
    %2530 = vmatprep.subr.bf16.mxu0 0
    %2531 = vmatpush1.bf16.msra.mxu0 0
    %2532 = vmatprep.subr.bf16.mxu0 0
    %2533 = vmatpush1.bf16.msra.mxu0 0
    %2534 = vmatprep.mubr.bf16.mxu0 %v2500
    %2535 = vmatmul.mubr.bf16.gmra.mrb[0].mxu0 %v2443
    %v2536 = vpop.f32.mrb[0].mxu0
    %v2537 = vadd.f32 %v2430, %v2536
    %v2538 = vpop.f32.mrb[0].mxu0
    %v2539 = vpop.f32.mrb[0].mxu0
    %v2540 = vadd.f32 %v2435, %v2539
    %v2541 = vpop.f32.mrb[0].mxu0
    %2542 = vdwg.mxu0
    %v2543 = vmax.f32 %v2537, 0.0
    %v2544 = vmax.f32 %v2540, 0.0
    %2545 = vst.msk [vmem:[#allocation2 + $0x8] sm:$0xff] %vm306, %v2543
    %2546 = vst.msk [vmem:[#allocation2 + $0x28] sm:$0xff] %vm306, %v2544
    %v2547 = vld [vmem:[#allocation2] sm:$0xff]
    %v2548 = vld [vmem:[#allocation2 + $0x8] sm:$0xff]
    %v2549 = vld [vmem:[#allocation2 + $0x20] sm:$0xff]
    %v2550 = vld [vmem:[#allocation2 + $0x28] sm:$0xff]
    %v2551 = vmul.f32 %v2547, %v2261
    %v2552 = vmul.f32 %v2548, %v2261
    %v2553 = vmul.f32 %v2549, %v2261
    %v2554 = vmul.f32 %v2550, %v2261
    %v2555 = vmul.f32 %v2547, %v2269
    %v2556 = vmul.f32 %v2548, %v2269
    %v2557 = vmul.f32 %v2549, %v2269
    %v2558 = vmul.f32 %v2550, %v2269
    %v2559 = vmul.f32 %v2547, %v2277
    %v2560 = vmul.f32 %v2548, %v2277
    %v2561 = vmul.f32 %v2549, %v2277
    %v2562 = vmul.f32 %v2550, %v2277
    %v2563 = vmul.f32 %v2547, %v2285
    %v2564 = vmul.f32 %v2548, %v2285
    %v2565 = vmul.f32 %v2549, %v2285
    %v2566 = vmul.f32 %v2550, %v2285
    %v2567 = vmul.f32 %v2548, %v2293
    %v2568 = vmul.f32 %v2550, %v2293
    %v2569 = vmul.f32 %v2548, %v2299
    %v2570 = vmul.f32 %v2550, %v2299
    %v2571 = vmul.f32 %v2548, %v2305
    %v2572 = vmul.f32 %v2550, %v2305
    %v2573 = vmul.f32 %v2548, %v2311
    %v2574 = vmul.f32 %v2550, %v2311
    %2579 = vrot.lane.b32.xlu0 %v2555, 127
    %v2580 = vpop.permute.xlu0 %2579
    %2581 = vrot.lane.b32.xlu0 %v2556, 127
    %v2582 = vpop.permute.xlu0 %2581
    %2583 = vrot.lane.b32.xlu0 %v2557, 127
    %v2584 = vpop.permute.xlu0 %2583
    %2585 = vrot.lane.b32.xlu0 %v2558, 127
    %v2586 = vpop.permute.xlu0 %2585
    %v2587 = vsel %vm264, %v2580, %v2582
    %v2588 = vsel %vm264, %v2584, %v2586
    %2597 = vrot.lane.b32.xlu0 %v2559, 126
    %v2598 = vpop.permute.xlu0 %2597
    %2599 = vrot.lane.b32.xlu0 %v2560, 126
    %v2600 = vpop.permute.xlu0 %2599
    %2601 = vrot.lane.b32.xlu0 %v2561, 126
    %v2602 = vpop.permute.xlu0 %2601
    %2603 = vrot.lane.b32.xlu0 %v2562, 126
    %v2604 = vpop.permute.xlu0 %2603
    %v2605 = vsel %vm351, %v2598, %v2600
    %v2606 = vsel %vm351, %v2602, %v2604
    %2615 = vrot.lane.b32.xlu0 %v2563, 124
    %v2616 = vpop.permute.xlu0 %2615
    %2617 = vrot.lane.b32.xlu0 %v2564, 124
    %v2618 = vpop.permute.xlu0 %2617
    %2619 = vrot.lane.b32.xlu0 %v2565, 124
    %v2620 = vpop.permute.xlu0 %2619
    %2621 = vrot.lane.b32.xlu0 %v2566, 124
    %v2622 = vpop.permute.xlu0 %2621
    %v2623 = vsel %vm2363, %v2616, %v2618
    %v2624 = vsel %vm2363, %v2620, %v2622
    %2631 = vrot.lane.b32.xlu0 %v2548, 123
    %v2632 = vpop.permute.xlu0 %2631
    %2633 = vrot.lane.b32.xlu0 %v2550, 123
    %v2634 = vpop.permute.xlu0 %2633
    %2639 = vrot.lane.b32.xlu0 %v2567, 122
    %v2640 = vpop.permute.xlu0 %2639
    %2641 = vrot.lane.b32.xlu0 %v2568, 122
    %v2642 = vpop.permute.xlu0 %2641
    %2647 = vrot.lane.b32.xlu0 %v2569, 120
    %v2648 = vpop.permute.xlu0 %2647
    %2649 = vrot.lane.b32.xlu0 %v2570, 120
    %v2650 = vpop.permute.xlu0 %2649
    %2655 = vrot.lane.b32.xlu0 %v2571, 119
    %v2656 = vpop.permute.xlu0 %2655
    %2657 = vrot.lane.b32.xlu0 %v2572, 119
    %v2658 = vpop.permute.xlu0 %2657
    %2663 = vrot.lane.b32.xlu0 %v2573, 118
    %v2664 = vpop.permute.xlu0 %2663
    %2665 = vrot.lane.b32.xlu0 %v2574, 118
    %v2666 = vpop.permute.xlu0 %2665
    %v2669 = vpack.c.bf16 %v2553, %v2551
    %v2670 = vpack.c.bf16 %v2554, %v2552
    %v2671 = vpack.c.bf16 %v2588, %v2587
    %v2672 = vpack.c.bf16 %v2586, %v2582
    %v2673 = vpack.c.bf16 %v2606, %v2605
    %v2674 = vpack.c.bf16 %v2604, %v2600
    %v2675 = vpack.c.bf16 %v2624, %v2623
    %v2676 = vpack.c.bf16 %v2622, %v2618
    %v2677 = vpack.c.bf16 %v2634, %v2632
    %v2678 = vpack.c.bf16 %v2642, %v2640
    %v2679 = vpack.c.bf16 %v2650, %v2648
    %v2680 = vpack.c.bf16 %v2658, %v2656
    %v2681 = vpack.c.bf16 %v2666, %v2664
    %v2682 = vld [vmem:[%s7] sm:$0xff]
    %v2683 = vld [vmem:[%s7 + $0x8] sm:$0xff]
    %v2684 = vld [vmem:[%s8] sm:$0xff]
    %v2685 = vld [vmem:[%s8 + $0x8] sm:$0xff]
    %2687 = vset.pattern.permute.xlu0 0
    %2688 = vperm.xlu0 %2687, %v2684
    %v2689 = vpop.permute.xlu0 %2688
    %2692 = vset.pattern.permute.xlu0 0
    %2693 = vperm.xlu0 %2692, %v2685
    %v2694 = vpop.permute.xlu0 %2693
    %v2698 = vunpack.c.l.b16 %v2682
    %v2699 = vunpack.c.h.b16 %v2682
    %v2700 = vunpack.c.l.b16 %v2683
    %v2701 = vunpack.c.h.b16 %v2683
    %v2702 = vpack.c.b16 %v2700, %v2698
    %v2703 = vpack.c.b16 %v2701, %v2699
    %2718 = vrot.lane.b32.xlu0 %v2669, 5
    %v2719 = vpop.permute.xlu0 %2718
    %2720 = vrot.lane.b32.xlu0 %v2670, 5
    %v2721 = vpop.permute.xlu0 %2720
    %2722 = vrot.lane.b32.xlu0 %v2671, 5
    %v2723 = vpop.permute.xlu0 %2722
    %2724 = vrot.lane.b32.xlu0 %v2672, 5
    %v2725 = vpop.permute.xlu0 %2724
    %2726 = vrot.lane.b32.xlu0 %v2673, 5
    %v2727 = vpop.permute.xlu0 %2726
    %2728 = vrot.lane.b32.xlu0 %v2674, 5
    %v2729 = vpop.permute.xlu0 %2728
    %2730 = vrot.lane.b32.xlu0 %v2675, 5
    %v2731 = vpop.permute.xlu0 %2730
    %2732 = vrot.lane.b32.xlu0 %v2676, 5
    %v2733 = vpop.permute.xlu0 %2732
    %2734 = vrot.lane.b32.xlu0 %v2677, 5
    %v2735 = vpop.permute.xlu0 %2734
    %2736 = vrot.lane.b32.xlu0 %v2678, 5
    %v2737 = vpop.permute.xlu0 %2736
    %2738 = vrot.lane.b32.xlu0 %v2679, 5
    %v2739 = vpop.permute.xlu0 %2738
    %2740 = vrot.lane.b32.xlu0 %v2680, 5
    %v2741 = vpop.permute.xlu0 %2740
    %2742 = vrot.lane.b32.xlu0 %v2681, 5
    %v2743 = vpop.permute.xlu0 %2742
    %v2744 = vsel %vm2485, %v2719, %v2721
    %v2745 = vsel %vm2485, %v2723, %v2725
    %v2746 = vsel %vm2485, %v2727, %v2729
    %v2747 = vsel %vm2485, %v2731, %v2733
    %v2758 = vsel %vm306, %v2703, 0
    %2760 = vmatprep.subr.bf16.mxu0 0
    %2761 = vmatpush1.bf16.msra.mxu0 %v2744
    %2762 = vmatprep.subr.bf16.mxu0 0
    %2763 = vmatpush1.bf16.msra.mxu0 %v2745
    %2764 = vmatprep.subr.bf16.mxu0 0
    %2765 = vmatpush1.bf16.msra.mxu0 %v2746
    %2766 = vmatprep.subr.bf16.mxu0 0
    %2767 = vmatpush1.bf16.msra.mxu0 %v2747
    %2768 = vmatprep.subr.bf16.mxu0 0
    %2769 = vmatpush1.bf16.msra.mxu0 %v2735
    %2770 = vmatprep.subr.bf16.mxu0 0
    %2771 = vmatpush1.bf16.msra.mxu0 %v2737
    %2772 = vmatprep.subr.bf16.mxu0 0
    %2773 = vmatpush1.bf16.msra.mxu0 %v2739
    %2774 = vmatprep.subr.bf16.mxu0 0
    %2775 = vmatpush1.bf16.msra.mxu0 %v2741
    %2776 = vmatprep.subr.bf16.mxu0 0
    %2777 = vmatpush1.bf16.msra.mxu0 %v2743
    %2778 = vmatprep.subr.bf16.mxu0 0
    %2779 = vmatpush1.bf16.msra.mxu0 0
    %2780 = vmatprep.subr.bf16.mxu0 0
    %2781 = vmatpush1.bf16.msra.mxu0 0
    %2782 = vmatprep.subr.bf16.mxu0 0
    %2783 = vmatpush1.bf16.msra.mxu0 0
    %2784 = vmatprep.subr.bf16.mxu0 0
    %2785 = vmatpush1.bf16.msra.mxu0 0
    %2786 = vmatprep.subr.bf16.mxu0 0
    %2787 = vmatpush1.bf16.msra.mxu0 0
    %2788 = vmatprep.subr.bf16.mxu0 0
    %2789 = vmatpush1.bf16.msra.mxu0 0
    %2790 = vmatprep.subr.bf16.mxu0 0
    %2791 = vmatpush1.bf16.msra.mxu0 0
    %2792 = vmatprep.mubr.bf16.mxu0 %v2758
    %2793 = vmatmul.mubr.bf16.gmra.mrb[0].mxu0 %v2702
    %v2794 = vpop.f32.mrb[0].mxu0
    %v2795 = vadd.f32 %v2689, %v2794
    %v2796 = vpop.f32.mrb[0].mxu0
    %v2797 = vpop.f32.mrb[0].mxu0
    %v2798 = vadd.f32 %v2694, %v2797
    %v2799 = vpop.f32.mrb[0].mxu0
    %2800 = vdwg.mxu0
    %v2801 = vmax.f32 %v2795, 0.0
    %v2802 = vmax.f32 %v2798, 0.0
    %v2803 = vld [vmem:[%s15] sm:$0xf]
    %v2804 = vld [vmem:[%s15 + $0x4] sm:$0xf]
    %v2805 = vunpack.c.l.bf16 %v2803
    %v2806 = vunpack.c.l.bf16 %v2804
    %v2808 = vsel %vm306, %v2801, 0
    %v2811 = vsel %vm306, %v2802, 0
    %2813 = vmatprep.subr.mxu0 0.0
    %2814 = vmatpush1.msra.mxu0 %v2805
    %2815 = vmatprep.subr.mxu0 0.0
    %2816 = vmatpush1.msra.mxu0 %v2806
    %2817 = vmatprep.subr.mxu0 0.0
    %2818 = vmatpush1.msra.mxu0 0.0
    %2819 = vmatprep.subr.mxu0 0.0
    %2820 = vmatpush1.msra.mxu0 0.0
    %2821 = vmatprep.subr.mxu0 0.0
    %2822 = vmatpush1.msra.mxu0 0.0
    %2823 = vmatprep.subr.mxu0 0.0
    %2824 = vmatpush1.msra.mxu0 0.0
    %2825 = vmatprep.subr.mxu0 0.0
    %2826 = vmatpush1.msra.mxu0 0.0
    %2827 = vmatprep.subr.mxu0 0.0
    %2828 = vmatpush1.msra.mxu0 0.0
    %2829 = vmatprep.subr.mxu0 0.0
    %2830 = vmatpush1.msra.mxu0 0.0
    %2831 = vmatprep.subr.mxu0 0.0
    %2832 = vmatpush1.msra.mxu0 0.0
    %2833 = vmatprep.subr.mxu0 0.0
    %2834 = vmatpush1.msra.mxu0 0.0
    %2835 = vmatprep.subr.mxu0 0.0
    %2836 = vmatpush1.msra.mxu0 0.0
    %2837 = vmatprep.subr.mxu0 0.0
    %2838 = vmatpush1.msra.mxu0 0.0
    %2839 = vmatprep.subr.mxu0 0.0
    %2840 = vmatpush1.msra.mxu0 0.0
    %2841 = vmatprep.subr.mxu0 0.0
    %2842 = vmatpush1.msra.mxu0 0.0
    %2843 = vmatprep.subr.mxu0 0.0
    %2844 = vmatpush1.msra.mxu0 0.0
    %2845 = vmatprep.subr.mxu0 0.0
    %2846 = vmatpush1.msra.mxu0 0.0
    %2847 = vmatprep.subr.mxu0 0.0
    %2848 = vmatpush1.msra.mxu0 0.0
    %2849 = vmatprep.subr.mxu0 0.0
    %2850 = vmatpush1.msra.mxu0 0.0
    %2851 = vmatprep.subr.mxu0 0.0
    %2852 = vmatpush1.msra.mxu0 0.0
    %2853 = vmatprep.subr.mxu0 0.0
    %2854 = vmatpush1.msra.mxu0 0.0
    %2855 = vmatprep.subr.mxu0 0.0
    %2856 = vmatpush1.msra.mxu0 0.0
    %2857 = vmatprep.subr.mxu0 0.0
    %2858 = vmatpush1.msra.mxu0 0.0
    %2859 = vmatprep.subr.mxu0 0.0
    %2860 = vmatpush1.msra.mxu0 0.0
    %2861 = vmatprep.subr.mxu0 0.0
    %2862 = vmatpush1.msra.mxu0 0.0
    %2863 = vmatprep.subr.mxu0 0.0
    %2864 = vmatpush1.msra.mxu0 0.0
    %2865 = vmatprep.subr.mxu0 0.0
    %2866 = vmatpush1.msra.mxu0 0.0
    %2867 = vmatprep.subr.mxu0 0.0
    %2868 = vmatpush1.msra.mxu0 0.0
    %2869 = vmatprep.subr.mxu0 0.0
    %2870 = vmatpush1.msra.mxu0 0.0
    %2871 = vmatprep.subr.mxu0 0.0
    %2872 = vmatpush1.msra.mxu0 0.0
    %2873 = vmatprep.subr.mxu0 0.0
    %2874 = vmatpush1.msra.mxu0 0.0
    %2875 = vmatprep.subr.mxu0 0.0
    %2876 = vmatpush1.msra.mxu0 0.0
    %2877 = vmatprep.mubr.f32.mxu0 0.0
    %2878 = vmatmul.mubr.f32.gmra.mrb[0].mxu0 %v2808
    %v2879 = vpop.f32.mrb[0].mxu0
    %v2880 = vadd.f32 0.0, %v2879
    %v2881 = vpop.f32.mrb[0].mxu0
    %2882 = vmatprep.mubr.f32.mxu0 0.0
    %2883 = vmatmul.mubr.f32.gmra.mrb[0].mxu0 %v2811
    %v2884 = vpop.f32.mrb[0].mxu0
    %v2885 = vadd.f32 0.0, %v2884
    %v2886 = vpop.f32.mrb[0].mxu0
    %2887 = vdwg.mxu0
    %2888 = vst.msk [vmem:[#allocation2 + $0x8] sm:$0xff] %vm1170, %v2880
    %2889 = vst.msk [vmem:[#allocation2 + $0x28] sm:$0xff] %vm1170, %v2885
    %v2890 = vld [vmem:[#allocation2] sm:$0xff]
    %v2891 = vld [vmem:[#allocation2 + $0x8] sm:$0xff]
    %v2892 = vld [vmem:[#allocation2 + $0x20] sm:$0xff]
    %v2893 = vld [vmem:[#allocation2 + $0x28] sm:$0xff]
    %v2894 = vmul.f32 %v2890, %v1197
    %v2895 = vmul.f32 %v2891, %v1197
    %v2896 = vmul.f32 %v2892, %v1197
    %v2897 = vmul.f32 %v2893, %v1197
    %v2898 = vmul.f32 %v2890, %v1217
    %v2899 = vmul.f32 %v2891, %v1217
    %v2900 = vmul.f32 %v2892, %v1217
    %v2901 = vmul.f32 %v2893, %v1217
    %v2902 = vmul.f32 %v2890, %v1237
    %v2903 = vmul.f32 %v2891, %v1237
    %v2904 = vmul.f32 %v2892, %v1237
    %v2905 = vmul.f32 %v2893, %v1237
    %v2906 = vmul.f32 %v2890, %v1257
    %v2907 = vmul.f32 %v2891, %v1257
    %v2908 = vmul.f32 %v2892, %v1257
    %v2909 = vmul.f32 %v2893, %v1257
    %v2910 = vmul.f32 %v2891, %v1277
    %v2911 = vmul.f32 %v2893, %v1277
    %v2912 = vmul.f32 %v2891, %v1289
    %v2913 = vmul.f32 %v2893, %v1289
    %v2914 = vmul.f32 %v2891, %v1301
    %v2915 = vmul.f32 %v2893, %v1301
    %v2916 = vmul.f32 %v2891, %v1313
    %v2917 = vmul.f32 %v2893, %v1313
    %2922 = vrot.lane.b32.xlu0 %v2898, 127
    %v2923 = vpop.permute.xlu0 %2922
    %2924 = vrot.lane.b32.xlu0 %v2899, 127
    %v2925 = vpop.permute.xlu0 %2924
    %2926 = vrot.lane.b32.xlu0 %v2900, 127
    %v2927 = vpop.permute.xlu0 %2926
    %2928 = vrot.lane.b32.xlu0 %v2901, 127
    %v2929 = vpop.permute.xlu0 %2928
    %v2930 = vsel %vm264, %v2923, %v2925
    %v2931 = vsel %vm264, %v2927, %v2929
    %2940 = vrot.lane.b32.xlu0 %v2902, 126
    %v2941 = vpop.permute.xlu0 %2940
    %2942 = vrot.lane.b32.xlu0 %v2903, 126
    %v2943 = vpop.permute.xlu0 %2942
    %2944 = vrot.lane.b32.xlu0 %v2904, 126
    %v2945 = vpop.permute.xlu0 %2944
    %2946 = vrot.lane.b32.xlu0 %v2905, 126
    %v2947 = vpop.permute.xlu0 %2946
    %v2948 = vsel %vm351, %v2941, %v2943
    %v2949 = vsel %vm351, %v2945, %v2947
    %2958 = vrot.lane.b32.xlu0 %v2906, 120
    %v2959 = vpop.permute.xlu0 %2958
    %2960 = vrot.lane.b32.xlu0 %v2907, 120
    %v2961 = vpop.permute.xlu0 %2960
    %2962 = vrot.lane.b32.xlu0 %v2908, 120
    %v2963 = vpop.permute.xlu0 %2962
    %2964 = vrot.lane.b32.xlu0 %v2909, 120
    %v2965 = vpop.permute.xlu0 %2964
    %v2966 = vsel %vm1515, %v2959, %v2961
    %v2967 = vsel %vm1515, %v2963, %v2965
    %2974 = vrot.lane.b32.xlu0 %v2891, 119
    %v2975 = vpop.permute.xlu0 %2974
    %2976 = vrot.lane.b32.xlu0 %v2893, 119
    %v2977 = vpop.permute.xlu0 %2976
    %2982 = vrot.lane.b32.xlu0 %v2910, 118
    %v2983 = vpop.permute.xlu0 %2982
    %2984 = vrot.lane.b32.xlu0 %v2911, 118
    %v2985 = vpop.permute.xlu0 %2984
    %2990 = vrot.lane.b32.xlu0 %v2912, 112
    %v2991 = vpop.permute.xlu0 %2990
    %2992 = vrot.lane.b32.xlu0 %v2913, 112
    %v2993 = vpop.permute.xlu0 %2992
    %2998 = vrot.lane.b32.xlu0 %v2914, 111
    %v2999 = vpop.permute.xlu0 %2998
    %3000 = vrot.lane.b32.xlu0 %v2915, 111
    %v3001 = vpop.permute.xlu0 %3000
    %3006 = vrot.lane.b32.xlu0 %v2916, 110
    %v3007 = vpop.permute.xlu0 %3006
    %3008 = vrot.lane.b32.xlu0 %v2917, 110
    %v3009 = vpop.permute.xlu0 %3008
    %v3012 = vpack.c.bf16 %v2896, %v2894
    %v3013 = vpack.c.bf16 %v2897, %v2895
    %v3014 = vpack.c.bf16 %v2931, %v2930
    %v3015 = vpack.c.bf16 %v2929, %v2925
    %v3016 = vpack.c.bf16 %v2949, %v2948
    %v3017 = vpack.c.bf16 %v2947, %v2943
    %v3018 = vpack.c.bf16 %v2967, %v2966
    %v3019 = vpack.c.bf16 %v2965, %v2961
    %v3020 = vpack.c.bf16 %v2977, %v2975
    %v3021 = vpack.c.bf16 %v2985, %v2983
    %v3022 = vpack.c.bf16 %v2993, %v2991
    %v3023 = vpack.c.bf16 %v3001, %v2999
    %v3024 = vpack.c.bf16 %v3009, %v3007
    %v3025 = vld [vmem:[%s9] sm:$0xff]
    %v3026 = vld [vmem:[%s9 + $0x8] sm:$0xff]
    %v3027 = vld [vmem:[%s9 + $0x10] sm:$0xff]
    %v3028 = vld [vmem:[%s9 + $0x18] sm:$0xff]
    %v3029 = vld [vmem:[%s9 + $0x20] sm:$0xff]
    %v3030 = vld [vmem:[%s9 + $0x28] sm:$0xff]
    %v3031 = vld [vmem:[%s9 + $0x30] sm:$0xff]
    %v3032 = vld [vmem:[%s9 + $0x38] sm:$0xff]
    %v3033 = vld [vmem:[%s10] sm:$0xff]
    %v3034 = vld [vmem:[%s10 + $0x8] sm:$0xff]
    %v3035 = vld [vmem:[%s10 + $0x10] sm:$0xff]
    %v3036 = vld [vmem:[%s10 + $0x18] sm:$0xff]
    %v3037 = vld [vmem:[%s10 + $0x20] sm:$0xff]
    %v3038 = vld [vmem:[%s10 + $0x28] sm:$0xff]
    %v3039 = vld [vmem:[%s10 + $0x30] sm:$0xff]
    %v3040 = vld [vmem:[%s10 + $0x38] sm:$0xff]
    %3042 = vset.pattern.permute.xlu0 0
    %3043 = vperm.xlu0 %3042, %v3033
    %v3044 = vpop.permute.xlu0 %3043
    %3047 = vset.pattern.permute.xlu0 0
    %3048 = vperm.xlu0 %3047, %v3034
    %v3049 = vpop.permute.xlu0 %3048
    %3052 = vset.pattern.permute.xlu0 0
    %3053 = vperm.xlu0 %3052, %v3035
    %v3054 = vpop.permute.xlu0 %3053
    %3057 = vset.pattern.permute.xlu0 0
    %3058 = vperm.xlu0 %3057, %v3036
    %v3059 = vpop.permute.xlu0 %3058
    %3062 = vset.pattern.permute.xlu0 0
    %3063 = vperm.xlu0 %3062, %v3037
    %v3064 = vpop.permute.xlu0 %3063
    %3067 = vset.pattern.permute.xlu0 0
    %3068 = vperm.xlu0 %3067, %v3038
    %v3069 = vpop.permute.xlu0 %3068
    %3072 = vset.pattern.permute.xlu0 0
    %3073 = vperm.xlu0 %3072, %v3039
    %v3074 = vpop.permute.xlu0 %3073
    %3077 = vset.pattern.permute.xlu0 0
    %3078 = vperm.xlu0 %3077, %v3040
    %v3079 = vpop.permute.xlu0 %3078
    %v3089 = vunpack.c.l.b16 %v3025
    %v3090 = vunpack.c.h.b16 %v3025
    %v3091 = vunpack.c.l.b16 %v3026
    %v3092 = vunpack.c.h.b16 %v3026
    %v3093 = vunpack.c.l.b16 %v3027
    %v3094 = vunpack.c.h.b16 %v3027
    %v3095 = vunpack.c.l.b16 %v3028
    %v3096 = vunpack.c.h.b16 %v3028
    %v3097 = vunpack.c.l.b16 %v3029
    %v3098 = vunpack.c.h.b16 %v3029
    %v3099 = vunpack.c.l.b16 %v3030
    %v3100 = vunpack.c.h.b16 %v3030
    %v3101 = vunpack.c.l.b16 %v3031
    %v3102 = vunpack.c.h.b16 %v3031
    %v3103 = vunpack.c.l.b16 %v3032
    %v3104 = vunpack.c.h.b16 %v3032
    %v3105 = vpack.c.b16 %v3091, %v3089
    %v3106 = vpack.c.b16 %v3092, %v3090
    %v3107 = vpack.c.b16 %v3095, %v3093
    %v3108 = vpack.c.b16 %v3096, %v3094
    %v3109 = vpack.c.b16 %v3099, %v3097
    %v3110 = vpack.c.b16 %v3100, %v3098
    %v3111 = vpack.c.b16 %v3103, %v3101
    %v3112 = vpack.c.b16 %v3104, %v3102
    %3130 = vrot.lane.b32.xlu0 %v3012, 9
    %v3131 = vpop.permute.xlu0 %3130
    %3132 = vrot.lane.b32.xlu0 %v3013, 9
    %v3133 = vpop.permute.xlu0 %3132
    %3134 = vrot.lane.b32.xlu0 %v3014, 9
    %v3135 = vpop.permute.xlu0 %3134
    %3136 = vrot.lane.b32.xlu0 %v3015, 9
    %v3137 = vpop.permute.xlu0 %3136
    %3138 = vrot.lane.b32.xlu0 %v3016, 9
    %v3139 = vpop.permute.xlu0 %3138
    %3140 = vrot.lane.b32.xlu0 %v3017, 9
    %v3141 = vpop.permute.xlu0 %3140
    %3142 = vrot.lane.b32.xlu0 %v3018, 9
    %v3143 = vpop.permute.xlu0 %3142
    %3144 = vrot.lane.b32.xlu0 %v3019, 9
    %v3145 = vpop.permute.xlu0 %3144
    %3146 = vrot.lane.b32.xlu0 %v3020, 9
    %v3147 = vpop.permute.xlu0 %3146
    %3148 = vrot.lane.b32.xlu0 %v3021, 9
    %v3149 = vpop.permute.xlu0 %3148
    %3150 = vrot.lane.b32.xlu0 %v3022, 9
    %v3151 = vpop.permute.xlu0 %3150
    %3152 = vrot.lane.b32.xlu0 %v3023, 9
    %v3153 = vpop.permute.xlu0 %3152
    %3154 = vrot.lane.b32.xlu0 %v3024, 9
    %v3155 = vpop.permute.xlu0 %3154
    %v3156 = vsel %vm1951, %v3131, %v3133
    %v3157 = vsel %vm1951, %v3135, %v3137
    %v3158 = vsel %vm1951, %v3139, %v3141
    %v3159 = vsel %vm1951, %v3143, %v3145
    %v3170 = vsel %vm306, %v3106, 0
    %v3173 = vsel %vm306, %v3108, 0
    %v3176 = vsel %vm306, %v3110, 0
    %v3179 = vsel %vm306, %v3112, 0
    %3181 = vmatprep.subr.bf16.mxu0 0
    %3182 = vmatpush1.bf16.msra.mxu0 %v3156
    %3183 = vmatprep.subr.bf16.mxu0 0
    %3184 = vmatpush1.bf16.msra.mxu0 %v3157
    %3185 = vmatprep.subr.bf16.mxu0 0
    %3186 = vmatpush1.bf16.msra.mxu0 %v3158
    %3187 = vmatprep.subr.bf16.mxu0 0
    %3188 = vmatpush1.bf16.msra.mxu0 %v3159
    %3189 = vmatprep.subr.bf16.mxu0 0
    %3190 = vmatpush1.bf16.msra.mxu0 %v3147
    %3191 = vmatprep.subr.bf16.mxu0 0
    %3192 = vmatpush1.bf16.msra.mxu0 %v3149
    %3193 = vmatprep.subr.bf16.mxu0 0
    %3194 = vmatpush1.bf16.msra.mxu0 %v3151
    %3195 = vmatprep.subr.bf16.mxu0 0
    %3196 = vmatpush1.bf16.msra.mxu0 %v3153
    %3197 = vmatprep.subr.bf16.mxu0 0
    %3198 = vmatpush1.bf16.msra.mxu0 %v3155
    %3199 = vmatprep.subr.bf16.mxu0 0
    %3200 = vmatpush1.bf16.msra.mxu0 0
    %3201 = vmatprep.subr.bf16.mxu0 0
    %3202 = vmatpush1.bf16.msra.mxu0 0
    %3203 = vmatprep.subr.bf16.mxu0 0
    %3204 = vmatpush1.bf16.msra.mxu0 0
    %3205 = vmatprep.subr.bf16.mxu0 0
    %3206 = vmatpush1.bf16.msra.mxu0 0
    %3207 = vmatprep.subr.bf16.mxu0 0
    %3208 = vmatpush1.bf16.msra.mxu0 0
    %3209 = vmatprep.subr.bf16.mxu0 0
    %3210 = vmatpush1.bf16.msra.mxu0 0
    %3211 = vmatprep.subr.bf16.mxu0 0
    %3212 = vmatpush1.bf16.msra.mxu0 0
    %3213 = vmatprep.mubr.bf16.mxu0 %v3170
    %3214 = vmatmul.mubr.bf16.gmra.mrb[0].mxu0 %v3105
    %v3215 = vpop.f32.mrb[0].mxu0
    %v3216 = vadd.f32 %v3044, %v3215
    %v3217 = vpop.f32.mrb[0].mxu0
    %v3218 = vpop.f32.mrb[0].mxu0
    %v3219 = vadd.f32 %v3049, %v3218
    %v3220 = vpop.f32.mrb[0].mxu0
    %3221 = vmatprep.mubr.bf16.mxu0 %v3173
    %3222 = vmatmul.mubr.bf16.gmra.mrb[0].mxu0 %v3107
    %v3223 = vpop.f32.mrb[0].mxu0
    %v3224 = vadd.f32 %v3054, %v3223
    %v3225 = vpop.f32.mrb[0].mxu0
    %v3226 = vpop.f32.mrb[0].mxu0
    %v3227 = vadd.f32 %v3059, %v3226
    %v3228 = vpop.f32.mrb[0].mxu0
    %3229 = vmatprep.mubr.bf16.mxu0 %v3176
    %3230 = vmatmul.mubr.bf16.gmra.mrb[0].mxu0 %v3109
    %v3231 = vpop.f32.mrb[0].mxu0
    %v3232 = vadd.f32 %v3064, %v3231
    %v3233 = vpop.f32.mrb[0].mxu0
    %v3234 = vpop.f32.mrb[0].mxu0
    %v3235 = vadd.f32 %v3069, %v3234
    %v3236 = vpop.f32.mrb[0].mxu0
    %3237 = vmatprep.mubr.bf16.mxu0 %v3179
    %3238 = vmatmul.mubr.bf16.gmra.mrb[0].mxu0 %v3111
    %v3239 = vpop.f32.mrb[0].mxu0
    %v3240 = vadd.f32 %v3074, %v3239
    %v3241 = vpop.f32.mrb[0].mxu0
    %v3242 = vpop.f32.mrb[0].mxu0
    %v3243 = vadd.f32 %v3079, %v3242
    %v3244 = vpop.f32.mrb[0].mxu0
    %3245 = vdwg.mxu0
    %v3246 = vmax.f32 %v3216, 0.0
    %v3247 = vmax.f32 %v3219, 0.0
    %v3248 = vmax.f32 %v3224, 0.0
    %v3249 = vmax.f32 %v3227, 0.0
    %v3250 = vmax.f32 %v3232, 0.0
    %v3251 = vmax.f32 %v3235, 0.0
    %v3252 = vmax.f32 %v3240, 0.0
    %v3253 = vmax.f32 %v3243, 0.0
    %v3254 = vld [vmem:[%s16] sm:$0xff]
    %v3255 = vld [vmem:[%s16 + $0x8] sm:$0xff]
    %v3256 = vld [vmem:[%s16 + $0x10] sm:$0xff]
    %v3257 = vld [vmem:[%s16 + $0x18] sm:$0xff]
    %v3258 = vld [vmem:[%s16 + $0x20] sm:$0xff]
    %v3259 = vld [vmem:[%s16 + $0x28] sm:$0xff]
    %v3260 = vld [vmem:[%s16 + $0x30] sm:$0xff]
    %v3261 = vld [vmem:[%s16 + $0x38] sm:$0xff]
    %v3262 = vunpack.c.l.bf16 %v3254
    %v3263 = vunpack.c.h.bf16 %v3254
    %v3264 = vunpack.c.l.bf16 %v3255
    %v3265 = vunpack.c.h.bf16 %v3255
    %v3266 = vunpack.c.l.bf16 %v3256
    %v3267 = vunpack.c.h.bf16 %v3256
    %v3268 = vunpack.c.l.bf16 %v3257
    %v3269 = vunpack.c.h.bf16 %v3257
    %v3270 = vunpack.c.l.bf16 %v3258
    %v3271 = vunpack.c.h.bf16 %v3258
    %v3272 = vunpack.c.l.bf16 %v3259
    %v3273 = vunpack.c.h.bf16 %v3259
    %v3274 = vunpack.c.l.bf16 %v3260
    %v3275 = vunpack.c.h.bf16 %v3260
    %v3276 = vunpack.c.l.bf16 %v3261
    %v3277 = vunpack.c.h.bf16 %v3261
    %v3279 = vsel %vm1170, %v3246, 0
    %v3282 = vsel %vm1170, %v3247, 0
    %v3285 = vsel %vm1170, %v3248, 0
    %v3288 = vsel %vm1170, %v3249, 0
    %v3291 = vsel %vm1170, %v3250, 0
    %v3294 = vsel %vm1170, %v3251, 0
    %v3297 = vsel %vm1170, %v3252, 0
    %v3300 = vsel %vm1170, %v3253, 0
    %3302 = vmatprep.subr.mxu0 %v3263
    %3303 = vmatpush1.msra.mxu0 %v3262
    %3304 = vmatprep.subr.mxu0 %v3265
    %3305 = vmatpush1.msra.mxu0 %v3264
    %3306 = vmatprep.subr.mxu0 %v3267
    %3307 = vmatpush1.msra.mxu0 %v3266
    %3308 = vmatprep.subr.mxu0 %v3269
    %3309 = vmatpush1.msra.mxu0 %v3268
    %3310 = vmatprep.subr.mxu0 %v3271
    %3311 = vmatpush1.msra.mxu0 %v3270
    %3312 = vmatprep.subr.mxu0 %v3273
    %3313 = vmatpush1.msra.mxu0 %v3272
    %3314 = vmatprep.subr.mxu0 %v3275
    %3315 = vmatpush1.msra.mxu0 %v3274
    %3316 = vmatprep.subr.mxu0 %v3277
    %3317 = vmatpush1.msra.mxu0 %v3276
    %3318 = vmatprep.subr.mxu0 0.0
    %3319 = vmatpush1.msra.mxu0 0.0
    %3320 = vmatprep.subr.mxu0 0.0
    %3321 = vmatpush1.msra.mxu0 0.0
    %3322 = vmatprep.subr.mxu0 0.0
    %3323 = vmatpush1.msra.mxu0 0.0
    %3324 = vmatprep.subr.mxu0 0.0
    %3325 = vmatpush1.msra.mxu0 0.0
    %3326 = vmatprep.subr.mxu0 0.0
    %3327 = vmatpush1.msra.mxu0 0.0
    %3328 = vmatprep.subr.mxu0 0.0
    %3329 = vmatpush1.msra.mxu0 0.0
    %3330 = vmatprep.subr.mxu0 0.0
    %3331 = vmatpush1.msra.mxu0 0.0
    %3332 = vmatprep.subr.mxu0 0.0
    %3333 = vmatpush1.msra.mxu0 0.0
    %3334 = vmatprep.subr.mxu0 0.0
    %3335 = vmatpush1.msra.mxu0 0.0
    %3336 = vmatprep.subr.mxu0 0.0
    %3337 = vmatpush1.msra.mxu0 0.0
    %3338 = vmatprep.subr.mxu0 0.0
    %3339 = vmatpush1.msra.mxu0 0.0
    %3340 = vmatprep.subr.mxu0 0.0
    %3341 = vmatpush1.msra.mxu0 0.0
    %3342 = vmatprep.subr.mxu0 0.0
    %3343 = vmatpush1.msra.mxu0 0.0
    %3344 = vmatprep.subr.mxu0 0.0
    %3345 = vmatpush1.msra.mxu0 0.0
    %3346 = vmatprep.subr.mxu0 0.0
    %3347 = vmatpush1.msra.mxu0 0.0
    %3348 = vmatprep.subr.mxu0 0.0
    %3349 = vmatpush1.msra.mxu0 0.0
    %3350 = vmatprep.subr.mxu0 0.0
    %3351 = vmatpush1.msra.mxu0 0.0
    %3352 = vmatprep.subr.mxu0 0.0
    %3353 = vmatpush1.msra.mxu0 0.0
    %3354 = vmatprep.subr.mxu0 0.0
    %3355 = vmatpush1.msra.mxu0 0.0
    %3356 = vmatprep.subr.mxu0 0.0
    %3357 = vmatpush1.msra.mxu0 0.0
    %3358 = vmatprep.subr.mxu0 0.0
    %3359 = vmatpush1.msra.mxu0 0.0
    %3360 = vmatprep.subr.mxu0 0.0
    %3361 = vmatpush1.msra.mxu0 0.0
    %3362 = vmatprep.subr.mxu0 0.0
    %3363 = vmatpush1.msra.mxu0 0.0
    %3364 = vmatprep.subr.mxu0 0.0
    %3365 = vmatpush1.msra.mxu0 0.0
    %3366 = vmatprep.mubr.f32.mxu0 0.0
    %3367 = vmatmul.mubr.f32.gmra.mrb[0].mxu0 %v3279
    %v3368 = vpop.f32.mrb[0].mxu0
    %v3369 = vadd.f32 0.0, %v3368
    %v3370 = vpop.f32.mrb[0].mxu0
    %v3371 = vadd.f32 0.0, %v3370
    %3372 = vmatprep.mubr.f32.mxu0 0.0
    %3373 = vmatmul.mubr.f32.gmra.mrb[0].mxu0 %v3282
    %v3374 = vpop.f32.mrb[0].mxu0
    %v3375 = vadd.f32 0.0, %v3374
    %v3376 = vpop.f32.mrb[0].mxu0
    %v3377 = vadd.f32 0.0, %v3376
    %3378 = vmatprep.mubr.f32.mxu0 0.0
    %3379 = vmatmul.mubr.f32.gmra.mrb[0].mxu0 %v3285
    %v3380 = vpop.f32.mrb[0].mxu0
    %v3381 = vadd.f32 0.0, %v3380
    %v3382 = vpop.f32.mrb[0].mxu0
    %v3383 = vadd.f32 0.0, %v3382
    %3384 = vmatprep.mubr.f32.mxu0 0.0
    %3385 = vmatmul.mubr.f32.gmra.mrb[0].mxu0 %v3288
    %v3386 = vpop.f32.mrb[0].mxu0
    %v3387 = vadd.f32 0.0, %v3386
    %v3388 = vpop.f32.mrb[0].mxu0
    %v3389 = vadd.f32 0.0, %v3388
    %3390 = vmatprep.mubr.f32.mxu0 0.0
    %3391 = vmatmul.mubr.f32.gmra.mrb[0].mxu0 %v3291
    %v3392 = vpop.f32.mrb[0].mxu0
    %v3393 = vadd.f32 0.0, %v3392
    %v3394 = vpop.f32.mrb[0].mxu0
    %v3395 = vadd.f32 0.0, %v3394
    %3396 = vmatprep.mubr.f32.mxu0 0.0
    %3397 = vmatmul.mubr.f32.gmra.mrb[0].mxu0 %v3294
    %v3398 = vpop.f32.mrb[0].mxu0
    %v3399 = vadd.f32 0.0, %v3398
    %v3400 = vpop.f32.mrb[0].mxu0
    %v3401 = vadd.f32 0.0, %v3400
    %3402 = vmatprep.mubr.f32.mxu0 0.0
    %3403 = vmatmul.mubr.f32.gmra.mrb[0].mxu0 %v3297
    %v3404 = vpop.f32.mrb[0].mxu0
    %v3405 = vadd.f32 0.0, %v3404
    %v3406 = vpop.f32.mrb[0].mxu0
    %v3407 = vadd.f32 0.0, %v3406
    %3408 = vmatprep.mubr.f32.mxu0 0.0
    %3409 = vmatmul.mubr.f32.gmra.mrb[0].mxu0 %v3300
    %v3410 = vpop.f32.mrb[0].mxu0
    %v3411 = vadd.f32 0.0, %v3410
    %v3412 = vpop.f32.mrb[0].mxu0
    %v3413 = vadd.f32 0.0, %v3412
    %3414 = vdwg.mxu0
    %3415 = vst [vmem:[#allocation2 + $0x8] sm:$0xff] %v3369
    %3416 = vst [vmem:[#allocation2 + $0x10] sm:$0xff] %v3371
    %3417 = vst [vmem:[#allocation2 + $0x28] sm:$0xff] %v3375
    %3418 = vst [vmem:[#allocation2 + $0x30] sm:$0xff] %v3377
    %3419 = vst [vmem:[#allocation2 + $0x48] sm:$0xff] %v3381
    %3420 = vst [vmem:[#allocation2 + $0x50] sm:$0xff] %v3383
    %3421 = vst [vmem:[#allocation2 + $0x68] sm:$0xff] %v3387
    %3422 = vst [vmem:[#allocation2 + $0x70] sm:$0xff] %v3389
    %3423 = vst [vmem:[#allocation2 + $0x88] sm:$0xff] %v3393
    %3424 = vst [vmem:[#allocation2 + $0x90] sm:$0xff] %v3395
    %3425 = vst [vmem:[#allocation2 + $0xa8] sm:$0xff] %v3399
    %3426 = vst [vmem:[#allocation2 + $0xb0] sm:$0xff] %v3401
    %3427 = vst [vmem:[#allocation2 + $0xc8] sm:$0xff] %v3405
    %3428 = vst [vmem:[#allocation2 + $0xd0] sm:$0xff] %v3407
    %3429 = vst [vmem:[#allocation2 + $0xe8] sm:$0xff] %v3411
    %3430 = vst [vmem:[#allocation2 + $0xf0] sm:$0xff] %v3413
    %v3431 = vld [vmem:[#allocation2] sm:$0xff]
    %v3432 = vld [vmem:[#allocation2 + $0x8] sm:$0xff]
    %v3433 = vld [vmem:[#allocation2 + $0x10] sm:$0xff]
    %v3434 = vld [vmem:[#allocation2 + $0x18] sm:$0xff]
    %v3435 = vld [vmem:[#allocation2 + $0x20] sm:$0xff]
    %v3436 = vld [vmem:[#allocation2 + $0x28] sm:$0xff]
    %v3437 = vld [vmem:[#allocation2 + $0x30] sm:$0xff]
    %v3438 = vld [vmem:[#allocation2 + $0x38] sm:$0xff]
    %v3439 = vld [vmem:[#allocation2 + $0x40] sm:$0xff]
    %v3440 = vld [vmem:[#allocation2 + $0x48] sm:$0xff]
    %v3441 = vld [vmem:[#allocation2 + $0x50] sm:$0xff]
    %v3442 = vld [vmem:[#allocation2 + $0x58] sm:$0xff]
    %v3443 = vld [vmem:[#allocation2 + $0x60] sm:$0xff]
    %v3444 = vld [vmem:[#allocation2 + $0x68] sm:$0xff]
    %v3445 = vld [vmem:[#allocation2 + $0x70] sm:$0xff]
    %v3446 = vld [vmem:[#allocation2 + $0x78] sm:$0xff]
    %v3447 = vld [vmem:[#allocation2 + $0x80] sm:$0xff]
    %v3448 = vld [vmem:[#allocation2 + $0x88] sm:$0xff]
    %v3449 = vld [vmem:[#allocation2 + $0x90] sm:$0xff]
    %v3450 = vld [vmem:[#allocation2 + $0x98] sm:$0xff]
    %v3451 = vld [vmem:[#allocation2 + $0xa0] sm:$0xff]
    %v3452 = vld [vmem:[#allocation2 + $0xa8] sm:$0xff]
    %v3453 = vld [vmem:[#allocation2 + $0xb0] sm:$0xff]
    %v3454 = vld [vmem:[#allocation2 + $0xb8] sm:$0xff]
    %v3455 = vld [vmem:[#allocation2 + $0xc0] sm:$0xff]
    %v3456 = vld [vmem:[#allocation2 + $0xc8] sm:$0xff]
    %v3457 = vld [vmem:[#allocation2 + $0xd0] sm:$0xff]
    %v3458 = vld [vmem:[#allocation2 + $0xd8] sm:$0xff]
    %v3459 = vld [vmem:[#allocation2 + $0xe0] sm:$0xff]
    %v3460 = vld [vmem:[#allocation2 + $0xe8] sm:$0xff]
    %v3461 = vld [vmem:[#allocation2 + $0xf0] sm:$0xff]
    %v3462 = vld [vmem:[#allocation2 + $0xf8] sm:$0xff]
    %v3463 = vmul.f32 %v3431, %v219
    %v3464 = vmul.f32 %v3432, %v223
    %v3465 = vmul.f32 %v3433, %v221
    %v3466 = vmul.f32 %v3435, %v219
    %v3467 = vmul.f32 %v3436, %v223
    %v3468 = vmul.f32 %v3437, %v221
    %v3469 = vmul.f32 %v3439, %v219
    %v3470 = vmul.f32 %v3440, %v223
    %v3471 = vmul.f32 %v3441, %v221
    %v3472 = vmul.f32 %v3443, %v219
    %v3473 = vmul.f32 %v3444, %v223
    %v3474 = vmul.f32 %v3445, %v221
    %v3475 = vmul.f32 %v3447, %v219
    %v3476 = vmul.f32 %v3448, %v223
    %v3477 = vmul.f32 %v3449, %v221
    %v3478 = vmul.f32 %v3451, %v219
    %v3479 = vmul.f32 %v3452, %v223
    %v3480 = vmul.f32 %v3453, %v221
    %v3481 = vmul.f32 %v3455, %v219
    %v3482 = vmul.f32 %v3456, %v223
    %v3483 = vmul.f32 %v3457, %v221
    %v3484 = vmul.f32 %v3459, %v219
    %v3485 = vmul.f32 %v3460, %v223
    %v3486 = vmul.f32 %v3461, %v221
    %v3487 = vmul.f32 %v3431, %v233
    %v3488 = vmul.f32 %v3432, %v237
    %v3489 = vmul.f32 %v3433, %v235
    %v3490 = vmul.f32 %v3435, %v233
    %v3491 = vmul.f32 %v3436, %v237
    %v3492 = vmul.f32 %v3437, %v235
    %v3493 = vmul.f32 %v3439, %v233
    %v3494 = vmul.f32 %v3440, %v237
    %v3495 = vmul.f32 %v3441, %v235
    %v3496 = vmul.f32 %v3443, %v233
    %v3497 = vmul.f32 %v3444, %v237
    %v3498 = vmul.f32 %v3445, %v235
    %v3499 = vmul.f32 %v3447, %v233
    %v3500 = vmul.f32 %v3448, %v237
    %v3501 = vmul.f32 %v3449, %v235
    %v3502 = vmul.f32 %v3451, %v233
    %v3503 = vmul.f32 %v3452, %v237
    %v3504 = vmul.f32 %v3453, %v235
    %v3505 = vmul.f32 %v3455, %v233
    %v3506 = vmul.f32 %v3456, %v237
    %v3507 = vmul.f32 %v3457, %v235
    %v3508 = vmul.f32 %v3459, %v233
    %v3509 = vmul.f32 %v3460, %v237
    %v3510 = vmul.f32 %v3461, %v235
    %v3511 = vmul.f32 %v3431, %v247
    %v3512 = vmul.f32 %v3432, %v251
    %v3513 = vmul.f32 %v3433, %v249
    %v3514 = vmul.f32 %v3435, %v247
    %v3515 = vmul.f32 %v3436, %v251
    %v3516 = vmul.f32 %v3437, %v249
    %v3517 = vmul.f32 %v3439, %v247
    %v3518 = vmul.f32 %v3440, %v251
    %v3519 = vmul.f32 %v3441, %v249
    %v3520 = vmul.f32 %v3443, %v247
    %v3521 = vmul.f32 %v3444, %v251
    %v3522 = vmul.f32 %v3445, %v249
    %v3523 = vmul.f32 %v3447, %v247
    %v3524 = vmul.f32 %v3448, %v251
    %v3525 = vmul.f32 %v3449, %v249
    %v3526 = vmul.f32 %v3451, %v247
    %v3527 = vmul.f32 %v3452, %v251
    %v3528 = vmul.f32 %v3453, %v249
    %v3529 = vmul.f32 %v3455, %v247
    %v3530 = vmul.f32 %v3456, %v251
    %v3531 = vmul.f32 %v3457, %v249
    %v3532 = vmul.f32 %v3459, %v247
    %v3533 = vmul.f32 %v3460, %v251
    %v3534 = vmul.f32 %v3461, %v249
    %v3535 = vmul.f32 %v3431, %v261
    %v3536 = vmul.f32 %v3432, %v265
    %v3537 = vmul.f32 %v3433, %v263
    %v3538 = vmul.f32 %v3435, %v261
    %v3539 = vmul.f32 %v3436, %v265
    %v3540 = vmul.f32 %v3437, %v263
    %v3541 = vmul.f32 %v3439, %v261
    %v3542 = vmul.f32 %v3440, %v265
    %v3543 = vmul.f32 %v3441, %v263
    %v3544 = vmul.f32 %v3443, %v261
    %v3545 = vmul.f32 %v3444, %v265
    %v3546 = vmul.f32 %v3445, %v263
    %v3547 = vmul.f32 %v3447, %v261
    %v3548 = vmul.f32 %v3448, %v265
    %v3549 = vmul.f32 %v3449, %v263
    %v3550 = vmul.f32 %v3451, %v261
    %v3551 = vmul.f32 %v3452, %v265
    %v3552 = vmul.f32 %v3453, %v263
    %v3553 = vmul.f32 %v3455, %v261
    %v3554 = vmul.f32 %v3456, %v265
    %v3555 = vmul.f32 %v3457, %v263
    %v3556 = vmul.f32 %v3459, %v261
    %v3557 = vmul.f32 %v3460, %v265
    %v3558 = vmul.f32 %v3461, %v263
    %v3559 = vmul.f32 %v3432, %v275
    %v3560 = vmul.f32 %v3433, %v279
    %v3561 = vmul.f32 %v3434, %v277
    %v3562 = vmul.f32 %v3436, %v275
    %v3563 = vmul.f32 %v3437, %v279
    %v3564 = vmul.f32 %v3438, %v277
    %v3565 = vmul.f32 %v3440, %v275
    %v3566 = vmul.f32 %v3441, %v279
    %v3567 = vmul.f32 %v3442, %v277
    %v3568 = vmul.f32 %v3444, %v275
    %v3569 = vmul.f32 %v3445, %v279
    %v3570 = vmul.f32 %v3446, %v277
    %v3571 = vmul.f32 %v3448, %v275
    %v3572 = vmul.f32 %v3449, %v279
    %v3573 = vmul.f32 %v3450, %v277
    %v3574 = vmul.f32 %v3452, %v275
    %v3575 = vmul.f32 %v3453, %v279
    %v3576 = vmul.f32 %v3454, %v277
    %v3577 = vmul.f32 %v3456, %v275
    %v3578 = vmul.f32 %v3457, %v279
    %v3579 = vmul.f32 %v3458, %v277
    %v3580 = vmul.f32 %v3460, %v275
    %v3581 = vmul.f32 %v3461, %v279
    %v3582 = vmul.f32 %v3462, %v277
    %v3583 = vmul.f32 %v3432, %v289
    %v3584 = vmul.f32 %v3433, %v293
    %v3585 = vmul.f32 %v3434, %v291
    %v3586 = vmul.f32 %v3436, %v289
    %v3587 = vmul.f32 %v3437, %v293
    %v3588 = vmul.f32 %v3438, %v291
    %v3589 = vmul.f32 %v3440, %v289
    %v3590 = vmul.f32 %v3441, %v293
    %v3591 = vmul.f32 %v3442, %v291
    %v3592 = vmul.f32 %v3444, %v289
    %v3593 = vmul.f32 %v3445, %v293
    %v3594 = vmul.f32 %v3446, %v291
    %v3595 = vmul.f32 %v3448, %v289
    %v3596 = vmul.f32 %v3449, %v293
    %v3597 = vmul.f32 %v3450, %v291
    %v3598 = vmul.f32 %v3452, %v289
    %v3599 = vmul.f32 %v3453, %v293
    %v3600 = vmul.f32 %v3454, %v291
    %v3601 = vmul.f32 %v3456, %v289
    %v3602 = vmul.f32 %v3457, %v293
    %v3603 = vmul.f32 %v3458, %v291
    %v3604 = vmul.f32 %v3460, %v289
    %v3605 = vmul.f32 %v3461, %v293
    %v3606 = vmul.f32 %v3462, %v291
    %v3607 = vmul.f32 %v3432, %v303
    %v3608 = vmul.f32 %v3433, %v307
    %v3609 = vmul.f32 %v3434, %v305
    %v3610 = vmul.f32 %v3436, %v303
    %v3611 = vmul.f32 %v3437, %v307
    %v3612 = vmul.f32 %v3438, %v305
    %v3613 = vmul.f32 %v3440, %v303
    %v3614 = vmul.f32 %v3441, %v307
    %v3615 = vmul.f32 %v3442, %v305
    %v3616 = vmul.f32 %v3444, %v303
    %v3617 = vmul.f32 %v3445, %v307
    %v3618 = vmul.f32 %v3446, %v305
    %v3619 = vmul.f32 %v3448, %v303
    %v3620 = vmul.f32 %v3449, %v307
    %v3621 = vmul.f32 %v3450, %v305
    %v3622 = vmul.f32 %v3452, %v303
    %v3623 = vmul.f32 %v3453, %v307
    %v3624 = vmul.f32 %v3454, %v305
    %v3625 = vmul.f32 %v3456, %v303
    %v3626 = vmul.f32 %v3457, %v307
    %v3627 = vmul.f32 %v3458, %v305
    %v3628 = vmul.f32 %v3460, %v303
    %v3629 = vmul.f32 %v3461, %v307
    %v3630 = vmul.f32 %v3462, %v305
    %v3631 = vmul.f32 %v3432, %v317
    %v3632 = vmul.f32 %v3433, %v321
    %v3633 = vmul.f32 %v3434, %v319
    %v3634 = vmul.f32 %v3436, %v317
    %v3635 = vmul.f32 %v3437, %v321
    %v3636 = vmul.f32 %v3438, %v319
    %v3637 = vmul.f32 %v3440, %v317
    %v3638 = vmul.f32 %v3441, %v321
    %v3639 = vmul.f32 %v3442, %v319
    %v3640 = vmul.f32 %v3444, %v317
    %v3641 = vmul.f32 %v3445, %v321
    %v3642 = vmul.f32 %v3446, %v319
    %v3643 = vmul.f32 %v3448, %v317
    %v3644 = vmul.f32 %v3449, %v321
    %v3645 = vmul.f32 %v3450, %v319
    %v3646 = vmul.f32 %v3452, %v317
    %v3647 = vmul.f32 %v3453, %v321
    %v3648 = vmul.f32 %v3454, %v319
    %v3649 = vmul.f32 %v3456, %v317
    %v3650 = vmul.f32 %v3457, %v321
    %v3651 = vmul.f32 %v3458, %v319
    %v3652 = vmul.f32 %v3460, %v317
    %v3653 = vmul.f32 %v3461, %v321
    %v3654 = vmul.f32 %v3462, %v319
    %3679 = vrot.lane.b32.xlu0 %v3487, 127
    %v3680 = vpop.permute.xlu0 %3679
    %3681 = vrot.lane.b32.xlu0 %v3488, 127
    %v3682 = vpop.permute.xlu0 %3681
    %3683 = vrot.lane.b32.xlu0 %v3489, 127
    %v3684 = vpop.permute.xlu0 %3683
    %3685 = vrot.lane.b32.xlu0 %v3490, 127
    %v3686 = vpop.permute.xlu0 %3685
    %3687 = vrot.lane.b32.xlu0 %v3491, 127
    %v3688 = vpop.permute.xlu0 %3687
    %3689 = vrot.lane.b32.xlu0 %v3492, 127
    %v3690 = vpop.permute.xlu0 %3689
    %3691 = vrot.lane.b32.xlu0 %v3493, 127
    %v3692 = vpop.permute.xlu0 %3691
    %3693 = vrot.lane.b32.xlu0 %v3494, 127
    %v3694 = vpop.permute.xlu0 %3693
    %3695 = vrot.lane.b32.xlu0 %v3495, 127
    %v3696 = vpop.permute.xlu0 %3695
    %3697 = vrot.lane.b32.xlu0 %v3496, 127
    %v3698 = vpop.permute.xlu0 %3697
    %3699 = vrot.lane.b32.xlu0 %v3497, 127
    %v3700 = vpop.permute.xlu0 %3699
    %3701 = vrot.lane.b32.xlu0 %v3498, 127
    %v3702 = vpop.permute.xlu0 %3701
    %3703 = vrot.lane.b32.xlu0 %v3499, 127
    %v3704 = vpop.permute.xlu0 %3703
    %3705 = vrot.lane.b32.xlu0 %v3500, 127
    %v3706 = vpop.permute.xlu0 %3705
    %3707 = vrot.lane.b32.xlu0 %v3501, 127
    %v3708 = vpop.permute.xlu0 %3707
    %3709 = vrot.lane.b32.xlu0 %v3502, 127
    %v3710 = vpop.permute.xlu0 %3709
    %3711 = vrot.lane.b32.xlu0 %v3503, 127
    %v3712 = vpop.permute.xlu0 %3711
    %3713 = vrot.lane.b32.xlu0 %v3504, 127
    %v3714 = vpop.permute.xlu0 %3713
    %3715 = vrot.lane.b32.xlu0 %v3505, 127
    %v3716 = vpop.permute.xlu0 %3715
    %3717 = vrot.lane.b32.xlu0 %v3506, 127
    %v3718 = vpop.permute.xlu0 %3717
    %3719 = vrot.lane.b32.xlu0 %v3507, 127
    %v3720 = vpop.permute.xlu0 %3719
    %3721 = vrot.lane.b32.xlu0 %v3508, 127
    %v3722 = vpop.permute.xlu0 %3721
    %3723 = vrot.lane.b32.xlu0 %v3509, 127
    %v3724 = vpop.permute.xlu0 %3723
    %3725 = vrot.lane.b32.xlu0 %v3510, 127
    %v3726 = vpop.permute.xlu0 %3725
    %v3727 = vsel %vm264, %v3680, %v3682
    %v3728 = vsel %vm264, %v3682, %v3684
    %v3729 = vsel %vm264, %v3686, %v3688
    %v3730 = vsel %vm264, %v3688, %v3690
    %v3731 = vsel %vm264, %v3692, %v3694
    %v3732 = vsel %vm264, %v3694, %v3696
    %v3733 = vsel %vm264, %v3698, %v3700
    %v3734 = vsel %vm264, %v3700, %v3702
    %v3735 = vsel %vm264, %v3704, %v3706
    %v3736 = vsel %vm264, %v3706, %v3708
    %v3737 = vsel %vm264, %v3710, %v3712
    %v3738 = vsel %vm264, %v3712, %v3714
    %v3739 = vsel %vm264, %v3716, %v3718
    %v3740 = vsel %vm264, %v3718, %v3720
    %v3741 = vsel %vm264, %v3722, %v3724
    %v3742 = vsel %vm264, %v3724, %v3726
    %3791 = vrot.lane.b32.xlu0 %v3511, 126
    %v3792 = vpop.permute.xlu0 %3791
    %3793 = vrot.lane.b32.xlu0 %v3512, 126
    %v3794 = vpop.permute.xlu0 %3793
    %3795 = vrot.lane.b32.xlu0 %v3513, 126
    %v3796 = vpop.permute.xlu0 %3795
    %3797 = vrot.lane.b32.xlu0 %v3514, 126
    %v3798 = vpop.permute.xlu0 %3797
    %3799 = vrot.lane.b32.xlu0 %v3515, 126
    %v3800 = vpop.permute.xlu0 %3799
    %3801 = vrot.lane.b32.xlu0 %v3516, 126
    %v3802 = vpop.permute.xlu0 %3801
    %3803 = vrot.lane.b32.xlu0 %v3517, 126
    %v3804 = vpop.permute.xlu0 %3803
    %3805 = vrot.lane.b32.xlu0 %v3518, 126
    %v3806 = vpop.permute.xlu0 %3805
    %3807 = vrot.lane.b32.xlu0 %v3519, 126
    %v3808 = vpop.permute.xlu0 %3807
    %3809 = vrot.lane.b32.xlu0 %v3520, 126
    %v3810 = vpop.permute.xlu0 %3809
    %3811 = vrot.lane.b32.xlu0 %v3521, 126
    %v3812 = vpop.permute.xlu0 %3811
    %3813 = vrot.lane.b32.xlu0 %v3522, 126
    %v3814 = vpop.permute.xlu0 %3813
    %3815 = vrot.lane.b32.xlu0 %v3523, 126
    %v3816 = vpop.permute.xlu0 %3815
    %3817 = vrot.lane.b32.xlu0 %v3524, 126
    %v3818 = vpop.permute.xlu0 %3817
    %3819 = vrot.lane.b32.xlu0 %v3525, 126
    %v3820 = vpop.permute.xlu0 %3819
    %3821 = vrot.lane.b32.xlu0 %v3526, 126
    %v3822 = vpop.permute.xlu0 %3821
    %3823 = vrot.lane.b32.xlu0 %v3527, 126
    %v3824 = vpop.permute.xlu0 %3823
    %3825 = vrot.lane.b32.xlu0 %v3528, 126
    %v3826 = vpop.permute.xlu0 %3825
    %3827 = vrot.lane.b32.xlu0 %v3529, 126
    %v3828 = vpop.permute.xlu0 %3827
    %3829 = vrot.lane.b32.xlu0 %v3530, 126
    %v3830 = vpop.permute.xlu0 %3829
    %3831 = vrot.lane.b32.xlu0 %v3531, 126
    %v3832 = vpop.permute.xlu0 %3831
    %3833 = vrot.lane.b32.xlu0 %v3532, 126
    %v3834 = vpop.permute.xlu0 %3833
    %3835 = vrot.lane.b32.xlu0 %v3533, 126
    %v3836 = vpop.permute.xlu0 %3835
    %3837 = vrot.lane.b32.xlu0 %v3534, 126
    %v3838 = vpop.permute.xlu0 %3837
    %v3839 = vsel %vm351, %v3792, %v3794
    %v3840 = vsel %vm351, %v3794, %v3796
    %v3841 = vsel %vm351, %v3798, %v3800
    %v3842 = vsel %vm351, %v3800, %v3802
    %v3843 = vsel %vm351, %v3804, %v3806
    %v3844 = vsel %vm351, %v3806, %v3808
    %v3845 = vsel %vm351, %v3810, %v3812
    %v3846 = vsel %vm351, %v3812, %v3814
    %v3847 = vsel %vm351, %v3816, %v3818
    %v3848 = vsel %vm351, %v3818, %v3820
    %v3849 = vsel %vm351, %v3822, %v3824
    %v3850 = vsel %vm351, %v3824, %v3826
    %v3851 = vsel %vm351, %v3828, %v3830
    %v3852 = vsel %vm351, %v3830, %v3832
    %v3853 = vsel %vm351, %v3834, %v3836
    %v3854 = vsel %vm351, %v3836, %v3838
    %3903 = vrot.lane.b32.xlu0 %v3535, 112
    %v3904 = vpop.permute.xlu0 %3903
    %3905 = vrot.lane.b32.xlu0 %v3536, 112
    %v3906 = vpop.permute.xlu0 %3905
    %3907 = vrot.lane.b32.xlu0 %v3537, 112
    %v3908 = vpop.permute.xlu0 %3907
    %3909 = vrot.lane.b32.xlu0 %v3538, 112
    %v3910 = vpop.permute.xlu0 %3909
    %3911 = vrot.lane.b32.xlu0 %v3539, 112
    %v3912 = vpop.permute.xlu0 %3911
    %3913 = vrot.lane.b32.xlu0 %v3540, 112
    %v3914 = vpop.permute.xlu0 %3913
    %3915 = vrot.lane.b32.xlu0 %v3541, 112
    %v3916 = vpop.permute.xlu0 %3915
    %3917 = vrot.lane.b32.xlu0 %v3542, 112
    %v3918 = vpop.permute.xlu0 %3917
    %3919 = vrot.lane.b32.xlu0 %v3543, 112
    %v3920 = vpop.permute.xlu0 %3919
    %3921 = vrot.lane.b32.xlu0 %v3544, 112
    %v3922 = vpop.permute.xlu0 %3921
    %3923 = vrot.lane.b32.xlu0 %v3545, 112
    %v3924 = vpop.permute.xlu0 %3923
    %3925 = vrot.lane.b32.xlu0 %v3546, 112
    %v3926 = vpop.permute.xlu0 %3925
    %3927 = vrot.lane.b32.xlu0 %v3547, 112
    %v3928 = vpop.permute.xlu0 %3927
    %3929 = vrot.lane.b32.xlu0 %v3548, 112
    %v3930 = vpop.permute.xlu0 %3929
    %3931 = vrot.lane.b32.xlu0 %v3549, 112
    %v3932 = vpop.permute.xlu0 %3931
    %3933 = vrot.lane.b32.xlu0 %v3550, 112
    %v3934 = vpop.permute.xlu0 %3933
    %3935 = vrot.lane.b32.xlu0 %v3551, 112
    %v3936 = vpop.permute.xlu0 %3935
    %3937 = vrot.lane.b32.xlu0 %v3552, 112
    %v3938 = vpop.permute.xlu0 %3937
    %3939 = vrot.lane.b32.xlu0 %v3553, 112
    %v3940 = vpop.permute.xlu0 %3939
    %3941 = vrot.lane.b32.xlu0 %v3554, 112
    %v3942 = vpop.permute.xlu0 %3941
    %3943 = vrot.lane.b32.xlu0 %v3555, 112
    %v3944 = vpop.permute.xlu0 %3943
    %3945 = vrot.lane.b32.xlu0 %v3556, 112
    %v3946 = vpop.permute.xlu0 %3945
    %3947 = vrot.lane.b32.xlu0 %v3557, 112
    %v3948 = vpop.permute.xlu0 %3947
    %3949 = vrot.lane.b32.xlu0 %v3558, 112
    %v3950 = vpop.permute.xlu0 %3949
    %v3951 = vsel %vm236, %v3904, %v3906
    %v3952 = vsel %vm236, %v3906, %v3908
    %v3953 = vsel %vm236, %v3910, %v3912
    %v3954 = vsel %vm236, %v3912, %v3914
    %v3955 = vsel %vm236, %v3916, %v3918
    %v3956 = vsel %vm236, %v3918, %v3920
    %v3957 = vsel %vm236, %v3922, %v3924
    %v3958 = vsel %vm236, %v3924, %v3926
    %v3959 = vsel %vm236, %v3928, %v3930
    %v3960 = vsel %vm236, %v3930, %v3932
    %v3961 = vsel %vm236, %v3934, %v3936
    %v3962 = vsel %vm236, %v3936, %v3938
    %v3963 = vsel %vm236, %v3940, %v3942
    %v3964 = vsel %vm236, %v3942, %v3944
    %v3965 = vsel %vm236, %v3946, %v3948
    %v3966 = vsel %vm236, %v3948, %v3950
    %4007 = vrot.lane.b32.xlu0 %v3432, 111
    %v4008 = vpop.permute.xlu0 %4007
    %4009 = vrot.lane.b32.xlu0 %v3433, 111
    %v4010 = vpop.permute.xlu0 %4009
    %4011 = vrot.lane.b32.xlu0 %v3436, 111
    %v4012 = vpop.permute.xlu0 %4011
    %4013 = vrot.lane.b32.xlu0 %v3437, 111
    %v4014 = vpop.permute.xlu0 %4013
    %4015 = vrot.lane.b32.xlu0 %v3440, 111
    %v4016 = vpop.permute.xlu0 %4015
    %4017 = vrot.lane.b32.xlu0 %v3441, 111
    %v4018 = vpop.permute.xlu0 %4017
    %4019 = vrot.lane.b32.xlu0 %v3444, 111
    %v4020 = vpop.permute.xlu0 %4019
    %4021 = vrot.lane.b32.xlu0 %v3445, 111
    %v4022 = vpop.permute.xlu0 %4021
    %4023 = vrot.lane.b32.xlu0 %v3448, 111
    %v4024 = vpop.permute.xlu0 %4023
    %4025 = vrot.lane.b32.xlu0 %v3449, 111
    %v4026 = vpop.permute.xlu0 %4025
    %4027 = vrot.lane.b32.xlu0 %v3452, 111
    %v4028 = vpop.permute.xlu0 %4027
    %4029 = vrot.lane.b32.xlu0 %v3453, 111
    %v4030 = vpop.permute.xlu0 %4029
    %4031 = vrot.lane.b32.xlu0 %v3456, 111
    %v4032 = vpop.permute.xlu0 %4031
    %4033 = vrot.lane.b32.xlu0 %v3457, 111
    %v4034 = vpop.permute.xlu0 %4033
    %4035 = vrot.lane.b32.xlu0 %v3460, 111
    %v4036 = vpop.permute.xlu0 %4035
    %4037 = vrot.lane.b32.xlu0 %v3461, 111
    %v4038 = vpop.permute.xlu0 %4037
    %v4039 = vsel %vm222, %v4008, %v4010
    %v4040 = vsel %vm222, %v4012, %v4014
    %v4041 = vsel %vm222, %v4016, %v4018
    %v4042 = vsel %vm222, %v4020, %v4022
    %v4043 = vsel %vm222, %v4024, %v4026
    %v4044 = vsel %vm222, %v4028, %v4030
    %v4045 = vsel %vm222, %v4032, %v4034
    %v4046 = vsel %vm222, %v4036, %v4038
    %4095 = vrot.lane.b32.xlu0 %v3559, 110
    %v4096 = vpop.permute.xlu0 %4095
    %4097 = vrot.lane.b32.xlu0 %v3560, 110
    %v4098 = vpop.permute.xlu0 %4097
    %4099 = vrot.lane.b32.xlu0 %v3561, 110
    %v4100 = vpop.permute.xlu0 %4099
    %4101 = vrot.lane.b32.xlu0 %v3562, 110
    %v4102 = vpop.permute.xlu0 %4101
    %4103 = vrot.lane.b32.xlu0 %v3563, 110
    %v4104 = vpop.permute.xlu0 %4103
    %4105 = vrot.lane.b32.xlu0 %v3564, 110
    %v4106 = vpop.permute.xlu0 %4105
    %4107 = vrot.lane.b32.xlu0 %v3565, 110
    %v4108 = vpop.permute.xlu0 %4107
    %4109 = vrot.lane.b32.xlu0 %v3566, 110
    %v4110 = vpop.permute.xlu0 %4109
    %4111 = vrot.lane.b32.xlu0 %v3567, 110
    %v4112 = vpop.permute.xlu0 %4111
    %4113 = vrot.lane.b32.xlu0 %v3568, 110
    %v4114 = vpop.permute.xlu0 %4113
    %4115 = vrot.lane.b32.xlu0 %v3569, 110
    %v4116 = vpop.permute.xlu0 %4115
    %4117 = vrot.lane.b32.xlu0 %v3570, 110
    %v4118 = vpop.permute.xlu0 %4117
    %4119 = vrot.lane.b32.xlu0 %v3571, 110
    %v4120 = vpop.permute.xlu0 %4119
    %4121 = vrot.lane.b32.xlu0 %v3572, 110
    %v4122 = vpop.permute.xlu0 %4121
    %4123 = vrot.lane.b32.xlu0 %v3573, 110
    %v4124 = vpop.permute.xlu0 %4123
    %4125 = vrot.lane.b32.xlu0 %v3574, 110
    %v4126 = vpop.permute.xlu0 %4125
    %4127 = vrot.lane.b32.xlu0 %v3575, 110
    %v4128 = vpop.permute.xlu0 %4127
    %4129 = vrot.lane.b32.xlu0 %v3576, 110
    %v4130 = vpop.permute.xlu0 %4129
    %4131 = vrot.lane.b32.xlu0 %v3577, 110
    %v4132 = vpop.permute.xlu0 %4131
    %4133 = vrot.lane.b32.xlu0 %v3578, 110
    %v4134 = vpop.permute.xlu0 %4133
    %4135 = vrot.lane.b32.xlu0 %v3579, 110
    %v4136 = vpop.permute.xlu0 %4135
    %4137 = vrot.lane.b32.xlu0 %v3580, 110
    %v4138 = vpop.permute.xlu0 %4137
    %4139 = vrot.lane.b32.xlu0 %v3581, 110
    %v4140 = vpop.permute.xlu0 %4139
    %4141 = vrot.lane.b32.xlu0 %v3582, 110
    %v4142 = vpop.permute.xlu0 %4141
    %v4143 = vsel %vm390, %v4096, %v4098
    %v4144 = vsel %vm390, %v4098, %v4100
    %v4145 = vsel %vm390, %v4102, %v4104
    %v4146 = vsel %vm390, %v4104, %v4106
    %v4147 = vsel %vm390, %v4108, %v4110
    %v4148 = vsel %vm390, %v4110, %v4112
    %v4149 = vsel %vm390, %v4114, %v4116
    %v4150 = vsel %vm390, %v4116, %v4118
    %v4151 = vsel %vm390, %v4120, %v4122
    %v4152 = vsel %vm390, %v4122, %v4124
    %v4153 = vsel %vm390, %v4126, %v4128
    %v4154 = vsel %vm390, %v4128, %v4130
    %v4155 = vsel %vm390, %v4132, %v4134
    %v4156 = vsel %vm390, %v4134, %v4136
    %v4157 = vsel %vm390, %v4138, %v4140
    %v4158 = vsel %vm390, %v4140, %v4142
    %4207 = vrot.lane.b32.xlu0 %v3583, 96
    %v4208 = vpop.permute.xlu0 %4207
    %4209 = vrot.lane.b32.xlu0 %v3584, 96
    %v4210 = vpop.permute.xlu0 %4209
    %4211 = vrot.lane.b32.xlu0 %v3585, 96
    %v4212 = vpop.permute.xlu0 %4211
    %4213 = vrot.lane.b32.xlu0 %v3586, 96
    %v4214 = vpop.permute.xlu0 %4213
    %4215 = vrot.lane.b32.xlu0 %v3587, 96
    %v4216 = vpop.permute.xlu0 %4215
    %4217 = vrot.lane.b32.xlu0 %v3588, 96
    %v4218 = vpop.permute.xlu0 %4217
    %4219 = vrot.lane.b32.xlu0 %v3589, 96
    %v4220 = vpop.permute.xlu0 %4219
    %4221 = vrot.lane.b32.xlu0 %v3590, 96
    %v4222 = vpop.permute.xlu0 %4221
    %4223 = vrot.lane.b32.xlu0 %v3591, 96
    %v4224 = vpop.permute.xlu0 %4223
    %4225 = vrot.lane.b32.xlu0 %v3592, 96
    %v4226 = vpop.permute.xlu0 %4225
    %4227 = vrot.lane.b32.xlu0 %v3593, 96
    %v4228 = vpop.permute.xlu0 %4227
    %4229 = vrot.lane.b32.xlu0 %v3594, 96
    %v4230 = vpop.permute.xlu0 %4229
    %4231 = vrot.lane.b32.xlu0 %v3595, 96
    %v4232 = vpop.permute.xlu0 %4231
    %4233 = vrot.lane.b32.xlu0 %v3596, 96
    %v4234 = vpop.permute.xlu0 %4233
    %4235 = vrot.lane.b32.xlu0 %v3597, 96
    %v4236 = vpop.permute.xlu0 %4235
    %4237 = vrot.lane.b32.xlu0 %v3598, 96
    %v4238 = vpop.permute.xlu0 %4237
    %4239 = vrot.lane.b32.xlu0 %v3599, 96
    %v4240 = vpop.permute.xlu0 %4239
    %4241 = vrot.lane.b32.xlu0 %v3600, 96
    %v4242 = vpop.permute.xlu0 %4241
    %4243 = vrot.lane.b32.xlu0 %v3601, 96
    %v4244 = vpop.permute.xlu0 %4243
    %4245 = vrot.lane.b32.xlu0 %v3602, 96
    %v4246 = vpop.permute.xlu0 %4245
    %4247 = vrot.lane.b32.xlu0 %v3603, 96
    %v4248 = vpop.permute.xlu0 %4247
    %4249 = vrot.lane.b32.xlu0 %v3604, 96
    %v4250 = vpop.permute.xlu0 %4249
    %4251 = vrot.lane.b32.xlu0 %v3605, 96
    %v4252 = vpop.permute.xlu0 %4251
    %4253 = vrot.lane.b32.xlu0 %v3606, 96
    %v4254 = vpop.permute.xlu0 %4253
    %v4255 = vsel %vm405, %v4208, %v4210
    %v4256 = vsel %vm405, %v4210, %v4212
    %v4257 = vsel %vm405, %v4214, %v4216
    %v4258 = vsel %vm405, %v4216, %v4218
    %v4259 = vsel %vm405, %v4220, %v4222
    %v4260 = vsel %vm405, %v4222, %v4224
    %v4261 = vsel %vm405, %v4226, %v4228
    %v4262 = vsel %vm405, %v4228, %v4230
    %v4263 = vsel %vm405, %v4232, %v4234
    %v4264 = vsel %vm405, %v4234, %v4236
    %v4265 = vsel %vm405, %v4238, %v4240
    %v4266 = vsel %vm405, %v4240, %v4242
    %v4267 = vsel %vm405, %v4244, %v4246
    %v4268 = vsel %vm405, %v4246, %v4248
    %v4269 = vsel %vm405, %v4250, %v4252
    %v4270 = vsel %vm405, %v4252, %v4254
    %4319 = vrot.lane.b32.xlu0 %v3607, 95
    %v4320 = vpop.permute.xlu0 %4319
    %4321 = vrot.lane.b32.xlu0 %v3608, 95
    %v4322 = vpop.permute.xlu0 %4321
    %4323 = vrot.lane.b32.xlu0 %v3609, 95
    %v4324 = vpop.permute.xlu0 %4323
    %4325 = vrot.lane.b32.xlu0 %v3610, 95
    %v4326 = vpop.permute.xlu0 %4325
    %4327 = vrot.lane.b32.xlu0 %v3611, 95
    %v4328 = vpop.permute.xlu0 %4327
    %4329 = vrot.lane.b32.xlu0 %v3612, 95
    %v4330 = vpop.permute.xlu0 %4329
    %4331 = vrot.lane.b32.xlu0 %v3613, 95
    %v4332 = vpop.permute.xlu0 %4331
    %4333 = vrot.lane.b32.xlu0 %v3614, 95
    %v4334 = vpop.permute.xlu0 %4333
    %4335 = vrot.lane.b32.xlu0 %v3615, 95
    %v4336 = vpop.permute.xlu0 %4335
    %4337 = vrot.lane.b32.xlu0 %v3616, 95
    %v4338 = vpop.permute.xlu0 %4337
    %4339 = vrot.lane.b32.xlu0 %v3617, 95
    %v4340 = vpop.permute.xlu0 %4339
    %4341 = vrot.lane.b32.xlu0 %v3618, 95
    %v4342 = vpop.permute.xlu0 %4341
    %4343 = vrot.lane.b32.xlu0 %v3619, 95
    %v4344 = vpop.permute.xlu0 %4343
    %4345 = vrot.lane.b32.xlu0 %v3620, 95
    %v4346 = vpop.permute.xlu0 %4345
    %4347 = vrot.lane.b32.xlu0 %v3621, 95
    %v4348 = vpop.permute.xlu0 %4347
    %4349 = vrot.lane.b32.xlu0 %v3622, 95
    %v4350 = vpop.permute.xlu0 %4349
    %4351 = vrot.lane.b32.xlu0 %v3623, 95
    %v4352 = vpop.permute.xlu0 %4351
    %4353 = vrot.lane.b32.xlu0 %v3624, 95
    %v4354 = vpop.permute.xlu0 %4353
    %4355 = vrot.lane.b32.xlu0 %v3625, 95
    %v4356 = vpop.permute.xlu0 %4355
    %4357 = vrot.lane.b32.xlu0 %v3626, 95
    %v4358 = vpop.permute.xlu0 %4357
    %4359 = vrot.lane.b32.xlu0 %v3627, 95
    %v4360 = vpop.permute.xlu0 %4359
    %4361 = vrot.lane.b32.xlu0 %v3628, 95
    %v4362 = vpop.permute.xlu0 %4361
    %4363 = vrot.lane.b32.xlu0 %v3629, 95
    %v4364 = vpop.permute.xlu0 %4363
    %4365 = vrot.lane.b32.xlu0 %v3630, 95
    %v4366 = vpop.permute.xlu0 %4365
    %v4367 = vsel %vm420, %v4320, %v4322
    %v4368 = vsel %vm420, %v4322, %v4324
    %v4369 = vsel %vm420, %v4326, %v4328
    %v4370 = vsel %vm420, %v4328, %v4330
    %v4371 = vsel %vm420, %v4332, %v4334
    %v4372 = vsel %vm420, %v4334, %v4336
    %v4373 = vsel %vm420, %v4338, %v4340
    %v4374 = vsel %vm420, %v4340, %v4342
    %v4375 = vsel %vm420, %v4344, %v4346
    %v4376 = vsel %vm420, %v4346, %v4348
    %v4377 = vsel %vm420, %v4350, %v4352
    %v4378 = vsel %vm420, %v4352, %v4354
    %v4379 = vsel %vm420, %v4356, %v4358
    %v4380 = vsel %vm420, %v4358, %v4360
    %v4381 = vsel %vm420, %v4362, %v4364
    %v4382 = vsel %vm420, %v4364, %v4366
    %4431 = vrot.lane.b32.xlu0 %v3631, 94
    %v4432 = vpop.permute.xlu0 %4431
    %4433 = vrot.lane.b32.xlu0 %v3632, 94
    %v4434 = vpop.permute.xlu0 %4433
    %4435 = vrot.lane.b32.xlu0 %v3633, 94
    %v4436 = vpop.permute.xlu0 %4435
    %4437 = vrot.lane.b32.xlu0 %v3634, 94
    %v4438 = vpop.permute.xlu0 %4437
    %4439 = vrot.lane.b32.xlu0 %v3635, 94
    %v4440 = vpop.permute.xlu0 %4439
    %4441 = vrot.lane.b32.xlu0 %v3636, 94
    %v4442 = vpop.permute.xlu0 %4441
    %4443 = vrot.lane.b32.xlu0 %v3637, 94
    %v4444 = vpop.permute.xlu0 %4443
    %4445 = vrot.lane.b32.xlu0 %v3638, 94
    %v4446 = vpop.permute.xlu0 %4445
    %4447 = vrot.lane.b32.xlu0 %v3639, 94
    %v4448 = vpop.permute.xlu0 %4447
    %4449 = vrot.lane.b32.xlu0 %v3640, 94
    %v4450 = vpop.permute.xlu0 %4449
    %4451 = vrot.lane.b32.xlu0 %v3641, 94
    %v4452 = vpop.permute.xlu0 %4451
    %4453 = vrot.lane.b32.xlu0 %v3642, 94
    %v4454 = vpop.permute.xlu0 %4453
    %4455 = vrot.lane.b32.xlu0 %v3643, 94
    %v4456 = vpop.permute.xlu0 %4455
    %4457 = vrot.lane.b32.xlu0 %v3644, 94
    %v4458 = vpop.permute.xlu0 %4457
    %4459 = vrot.lane.b32.xlu0 %v3645, 94
    %v4460 = vpop.permute.xlu0 %4459
    %4461 = vrot.lane.b32.xlu0 %v3646, 94
    %v4462 = vpop.permute.xlu0 %4461
    %4463 = vrot.lane.b32.xlu0 %v3647, 94
    %v4464 = vpop.permute.xlu0 %4463
    %4465 = vrot.lane.b32.xlu0 %v3648, 94
    %v4466 = vpop.permute.xlu0 %4465
    %4467 = vrot.lane.b32.xlu0 %v3649, 94
    %v4468 = vpop.permute.xlu0 %4467
    %4469 = vrot.lane.b32.xlu0 %v3650, 94
    %v4470 = vpop.permute.xlu0 %4469
    %4471 = vrot.lane.b32.xlu0 %v3651, 94
    %v4472 = vpop.permute.xlu0 %4471
    %4473 = vrot.lane.b32.xlu0 %v3652, 94
    %v4474 = vpop.permute.xlu0 %4473
    %4475 = vrot.lane.b32.xlu0 %v3653, 94
    %v4476 = vpop.permute.xlu0 %4475
    %4477 = vrot.lane.b32.xlu0 %v3654, 94
    %v4478 = vpop.permute.xlu0 %4477
    %v4479 = vsel %vm435, %v4432, %v4434
    %v4480 = vsel %vm435, %v4434, %v4436
    %v4481 = vsel %vm435, %v4438, %v4440
    %v4482 = vsel %vm435, %v4440, %v4442
    %v4483 = vsel %vm435, %v4444, %v4446
    %v4484 = vsel %vm435, %v4446, %v4448
    %v4485 = vsel %vm435, %v4450, %v4452
    %v4486 = vsel %vm435, %v4452, %v4454
    %v4487 = vsel %vm435, %v4456, %v4458
    %v4488 = vsel %vm435, %v4458, %v4460
    %v4489 = vsel %vm435, %v4462, %v4464
    %v4490 = vsel %vm435, %v4464, %v4466
    %v4491 = vsel %vm435, %v4468, %v4470
    %v4492 = vsel %vm435, %v4470, %v4472
    %v4493 = vsel %vm435, %v4474, %v4476
    %v4494 = vsel %vm435, %v4476, %v4478
    %v4519 = vpack.c.bf16 %v3466, %v3463
    %v4520 = vpack.c.bf16 %v3467, %v3464
    %v4521 = vpack.c.bf16 %v3468, %v3465
    %v4522 = vpack.c.bf16 %v3472, %v3469
    %v4523 = vpack.c.bf16 %v3473, %v3470
    %v4524 = vpack.c.bf16 %v3474, %v3471
    %v4525 = vpack.c.bf16 %v3478, %v3475
    %v4526 = vpack.c.bf16 %v3479, %v3476
    %v4527 = vpack.c.bf16 %v3480, %v3477
    %v4528 = vpack.c.bf16 %v3484, %v3481
    %v4529 = vpack.c.bf16 %v3485, %v3482
    %v4530 = vpack.c.bf16 %v3486, %v3483
    %v4531 = vpack.c.bf16 %v3729, %v3727
    %v4532 = vpack.c.bf16 %v3730, %v3728
    %v4533 = vpack.c.bf16 %v3690, %v3684
    %v4534 = vpack.c.bf16 %v3733, %v3731
    %v4535 = vpack.c.bf16 %v3734, %v3732
    %v4536 = vpack.c.bf16 %v3702, %v3696
    %v4537 = vpack.c.bf16 %v3737, %v3735
    %v4538 = vpack.c.bf16 %v3738, %v3736
    %v4539 = vpack.c.bf16 %v3714, %v3708
    %v4540 = vpack.c.bf16 %v3741, %v3739
    %v4541 = vpack.c.bf16 %v3742, %v3740
    %v4542 = vpack.c.bf16 %v3726, %v3720
    %v4543 = vpack.c.bf16 %v3841, %v3839
    %v4544 = vpack.c.bf16 %v3842, %v3840
    %v4545 = vpack.c.bf16 %v3802, %v3796
    %v4546 = vpack.c.bf16 %v3845, %v3843
    %v4547 = vpack.c.bf16 %v3846, %v3844
    %v4548 = vpack.c.bf16 %v3814, %v3808
    %v4549 = vpack.c.bf16 %v3849, %v3847
    %v4550 = vpack.c.bf16 %v3850, %v3848
    %v4551 = vpack.c.bf16 %v3826, %v3820
    %v4552 = vpack.c.bf16 %v3853, %v3851
    %v4553 = vpack.c.bf16 %v3854, %v3852
    %v4554 = vpack.c.bf16 %v3838, %v3832
    %v4555 = vpack.c.bf16 %v3953, %v3951
    %v4556 = vpack.c.bf16 %v3954, %v3952
    %v4557 = vpack.c.bf16 %v3914, %v3908
    %v4558 = vpack.c.bf16 %v3957, %v3955
    %v4559 = vpack.c.bf16 %v3958, %v3956
    %v4560 = vpack.c.bf16 %v3926, %v3920
    %v4561 = vpack.c.bf16 %v3961, %v3959
    %v4562 = vpack.c.bf16 %v3962, %v3960
    %v4563 = vpack.c.bf16 %v3938, %v3932
    %v4564 = vpack.c.bf16 %v3965, %v3963
    %v4565 = vpack.c.bf16 %v3966, %v3964
    %v4566 = vpack.c.bf16 %v3950, %v3944
    %v4567 = vpack.c.bf16 %v4012, %v4008
    %v4568 = vpack.c.bf16 %v4040, %v4039
    %v4569 = vpack.c.bf16 %v4014, %v4010
    %v4570 = vpack.c.bf16 %v4020, %v4016
    %v4571 = vpack.c.bf16 %v4042, %v4041
    %v4572 = vpack.c.bf16 %v4022, %v4018
    %v4573 = vpack.c.bf16 %v4028, %v4024
    %v4574 = vpack.c.bf16 %v4044, %v4043
    %v4575 = vpack.c.bf16 %v4030, %v4026
    %v4576 = vpack.c.bf16 %v4036, %v4032
    %v4577 = vpack.c.bf16 %v4046, %v4045
    %v4578 = vpack.c.bf16 %v4038, %v4034
    %v4579 = vpack.c.bf16 %v4102, %v4096
    %v4580 = vpack.c.bf16 %v4145, %v4143
    %v4581 = vpack.c.bf16 %v4146, %v4144
    %v4582 = vpack.c.bf16 %v4114, %v4108
    %v4583 = vpack.c.bf16 %v4149, %v4147
    %v4584 = vpack.c.bf16 %v4150, %v4148
    %v4585 = vpack.c.bf16 %v4126, %v4120
    %v4586 = vpack.c.bf16 %v4153, %v4151
    %v4587 = vpack.c.bf16 %v4154, %v4152
    %v4588 = vpack.c.bf16 %v4138, %v4132
    %v4589 = vpack.c.bf16 %v4157, %v4155
    %v4590 = vpack.c.bf16 %v4158, %v4156
    %v4591 = vpack.c.bf16 %v4214, %v4208
    %v4592 = vpack.c.bf16 %v4257, %v4255
    %v4593 = vpack.c.bf16 %v4258, %v4256
    %v4594 = vpack.c.bf16 %v4226, %v4220
    %v4595 = vpack.c.bf16 %v4261, %v4259
    %v4596 = vpack.c.bf16 %v4262, %v4260
    %v4597 = vpack.c.bf16 %v4238, %v4232
    %v4598 = vpack.c.bf16 %v4265, %v4263
    %v4599 = vpack.c.bf16 %v4266, %v4264
    %v4600 = vpack.c.bf16 %v4250, %v4244
    %v4601 = vpack.c.bf16 %v4269, %v4267
    %v4602 = vpack.c.bf16 %v4270, %v4268
    %v4603 = vpack.c.bf16 %v4326, %v4320
    %v4604 = vpack.c.bf16 %v4369, %v4367
    %v4605 = vpack.c.bf16 %v4370, %v4368
    %v4606 = vpack.c.bf16 %v4338, %v4332
    %v4607 = vpack.c.bf16 %v4373, %v4371
    %v4608 = vpack.c.bf16 %v4374, %v4372
    %v4609 = vpack.c.bf16 %v4350, %v4344
    %v4610 = vpack.c.bf16 %v4377, %v4375
    %v4611 = vpack.c.bf16 %v4378, %v4376
    %v4612 = vpack.c.bf16 %v4362, %v4356
    %v4613 = vpack.c.bf16 %v4381, %v4379
    %v4614 = vpack.c.bf16 %v4382, %v4380
    %v4615 = vpack.c.bf16 %v4438, %v4432
    %v4616 = vpack.c.bf16 %v4481, %v4479
    %v4617 = vpack.c.bf16 %v4482, %v4480
    %v4618 = vpack.c.bf16 %v4450, %v4444
    %v4619 = vpack.c.bf16 %v4485, %v4483
    %v4620 = vpack.c.bf16 %v4486, %v4484
    %v4621 = vpack.c.bf16 %v4462, %v4456
    %v4622 = vpack.c.bf16 %v4489, %v4487
    %v4623 = vpack.c.bf16 %v4490, %v4488
    %v4624 = vpack.c.bf16 %v4474, %v4468
    %v4625 = vpack.c.bf16 %v4493, %v4491
    %v4626 = vpack.c.bf16 %v4494, %v4492
    %v4627 = vld [vmem:[%s11] sm:$0xff]
    %v4628 = vld [vmem:[%s11 + $0x8] sm:$0xff]
    %v4629 = vld [vmem:[%s11 + $0x10] sm:$0xf]
    %v4630 = vld [vmem:[#allocation3] sm:$0xff]
    %4632 = vset.pattern.permute.xlu0 0
    %4633 = vperm.xlu0 %4632, %v4630
    %v4634 = vpop.permute.xlu0 %4633
    %v4639 = vunpack.c.l.b16 %v4627
    %v4640 = vunpack.c.h.b16 %v4627
    %v4641 = vunpack.c.l.b16 %v4628
    %v4642 = vunpack.c.h.b16 %v4628
    %v4643 = vunpack.c.l.b16 %v4629
    %v4644 = vpack.c.b16 %v4639, %v4639
    %v4645 = vpack.c.b16 %v4640, %v4640
    %v4646 = vpack.c.b16 %v4641, %v4641
    %v4647 = vpack.c.b16 %v4642, %v4642
    %v4648 = vpack.c.b16 %v4643, %v4643
    %4761 = vrot.lane.b32.xlu0 %v4519, 17
    %v4762 = vpop.permute.xlu0 %4761
    %4763 = vrot.lane.b32.xlu0 %v4520, 17
    %v4764 = vpop.permute.xlu0 %4763
    %4765 = vrot.lane.b32.xlu0 %v4521, 17
    %v4766 = vpop.permute.xlu0 %4765
    %4767 = vrot.lane.b32.xlu0 %v4522, 17
    %v4768 = vpop.permute.xlu0 %4767
    %4769 = vrot.lane.b32.xlu0 %v4523, 17
    %v4770 = vpop.permute.xlu0 %4769
    %4771 = vrot.lane.b32.xlu0 %v4524, 17
    %v4772 = vpop.permute.xlu0 %4771
    %4773 = vrot.lane.b32.xlu0 %v4525, 17
    %v4774 = vpop.permute.xlu0 %4773
    %4775 = vrot.lane.b32.xlu0 %v4526, 17
    %v4776 = vpop.permute.xlu0 %4775
    %4777 = vrot.lane.b32.xlu0 %v4527, 17
    %v4778 = vpop.permute.xlu0 %4777
    %4779 = vrot.lane.b32.xlu0 %v4528, 17
    %v4780 = vpop.permute.xlu0 %4779
    %4781 = vrot.lane.b32.xlu0 %v4529, 17
    %v4782 = vpop.permute.xlu0 %4781
    %4783 = vrot.lane.b32.xlu0 %v4530, 17
    %v4784 = vpop.permute.xlu0 %4783
    %4785 = vrot.lane.b32.xlu0 %v4531, 17
    %v4786 = vpop.permute.xlu0 %4785
    %4787 = vrot.lane.b32.xlu0 %v4532, 17
    %v4788 = vpop.permute.xlu0 %4787
    %4789 = vrot.lane.b32.xlu0 %v4533, 17
    %v4790 = vpop.permute.xlu0 %4789
    %4791 = vrot.lane.b32.xlu0 %v4534, 17
    %v4792 = vpop.permute.xlu0 %4791
    %4793 = vrot.lane.b32.xlu0 %v4535, 17
    %v4794 = vpop.permute.xlu0 %4793
    %4795 = vrot.lane.b32.xlu0 %v4536, 17
    %v4796 = vpop.permute.xlu0 %4795
    %4797 = vrot.lane.b32.xlu0 %v4537, 17
    %v4798 = vpop.permute.xlu0 %4797
    %4799 = vrot.lane.b32.xlu0 %v4538, 17
    %v4800 = vpop.permute.xlu0 %4799
    %4801 = vrot.lane.b32.xlu0 %v4539, 17
    %v4802 = vpop.permute.xlu0 %4801
    %4803 = vrot.lane.b32.xlu0 %v4540, 17
    %v4804 = vpop.permute.xlu0 %4803
    %4805 = vrot.lane.b32.xlu0 %v4541, 17
    %v4806 = vpop.permute.xlu0 %4805
    %4807 = vrot.lane.b32.xlu0 %v4542, 17
    %v4808 = vpop.permute.xlu0 %4807
    %4809 = vrot.lane.b32.xlu0 %v4543, 17
    %v4810 = vpop.permute.xlu0 %4809
    %4811 = vrot.lane.b32.xlu0 %v4544, 17
    %v4812 = vpop.permute.xlu0 %4811
    %4813 = vrot.lane.b32.xlu0 %v4545, 17
    %v4814 = vpop.permute.xlu0 %4813
    %4815 = vrot.lane.b32.xlu0 %v4546, 17
    %v4816 = vpop.permute.xlu0 %4815
    %4817 = vrot.lane.b32.xlu0 %v4547, 17
    %v4818 = vpop.permute.xlu0 %4817
    %4819 = vrot.lane.b32.xlu0 %v4548, 17
    %v4820 = vpop.permute.xlu0 %4819
    %4821 = vrot.lane.b32.xlu0 %v4549, 17
    %v4822 = vpop.permute.xlu0 %4821
    %4823 = vrot.lane.b32.xlu0 %v4550, 17
    %v4824 = vpop.permute.xlu0 %4823
    %4825 = vrot.lane.b32.xlu0 %v4551, 17
    %v4826 = vpop.permute.xlu0 %4825
    %4827 = vrot.lane.b32.xlu0 %v4552, 17
    %v4828 = vpop.permute.xlu0 %4827
    %4829 = vrot.lane.b32.xlu0 %v4553, 17
    %v4830 = vpop.permute.xlu0 %4829
    %4831 = vrot.lane.b32.xlu0 %v4554, 17
    %v4832 = vpop.permute.xlu0 %4831
    %4833 = vrot.lane.b32.xlu0 %v4555, 17
    %v4834 = vpop.permute.xlu0 %4833
    %4835 = vrot.lane.b32.xlu0 %v4556, 17
    %v4836 = vpop.permute.xlu0 %4835
    %4837 = vrot.lane.b32.xlu0 %v4557, 17
    %v4838 = vpop.permute.xlu0 %4837
    %4839 = vrot.lane.b32.xlu0 %v4558, 17
    %v4840 = vpop.permute.xlu0 %4839
    %4841 = vrot.lane.b32.xlu0 %v4559, 17
    %v4842 = vpop.permute.xlu0 %4841
    %4843 = vrot.lane.b32.xlu0 %v4560, 17
    %v4844 = vpop.permute.xlu0 %4843
    %4845 = vrot.lane.b32.xlu0 %v4561, 17
    %v4846 = vpop.permute.xlu0 %4845
    %4847 = vrot.lane.b32.xlu0 %v4562, 17
    %v4848 = vpop.permute.xlu0 %4847
    %4849 = vrot.lane.b32.xlu0 %v4563, 17
    %v4850 = vpop.permute.xlu0 %4849
    %4851 = vrot.lane.b32.xlu0 %v4564, 17
    %v4852 = vpop.permute.xlu0 %4851
    %4853 = vrot.lane.b32.xlu0 %v4565, 17
    %v4854 = vpop.permute.xlu0 %4853
    %4855 = vrot.lane.b32.xlu0 %v4566, 17
    %v4856 = vpop.permute.xlu0 %4855
    %4857 = vrot.lane.b32.xlu0 %v4567, 17
    %v4858 = vpop.permute.xlu0 %4857
    %4859 = vrot.lane.b32.xlu0 %v4568, 17
    %v4860 = vpop.permute.xlu0 %4859
    %4861 = vrot.lane.b32.xlu0 %v4569, 17
    %v4862 = vpop.permute.xlu0 %4861
    %4863 = vrot.lane.b32.xlu0 %v4570, 17
    %v4864 = vpop.permute.xlu0 %4863
    %4865 = vrot.lane.b32.xlu0 %v4571, 17
    %v4866 = vpop.permute.xlu0 %4865
    %4867 = vrot.lane.b32.xlu0 %v4572, 17
    %v4868 = vpop.permute.xlu0 %4867
    %4869 = vrot.lane.b32.xlu0 %v4573, 17
    %v4870 = vpop.permute.xlu0 %4869
    %4871 = vrot.lane.b32.xlu0 %v4574, 17
    %v4872 = vpop.permute.xlu0 %4871
    %4873 = vrot.lane.b32.xlu0 %v4575, 17
    %v4874 = vpop.permute.xlu0 %4873
    %4875 = vrot.lane.b32.xlu0 %v4576, 17
    %v4876 = vpop.permute.xlu0 %4875
    %4877 = vrot.lane.b32.xlu0 %v4577, 17
    %v4878 = vpop.permute.xlu0 %4877
    %4879 = vrot.lane.b32.xlu0 %v4578, 17
    %v4880 = vpop.permute.xlu0 %4879
    %4881 = vrot.lane.b32.xlu0 %v4579, 17
    %v4882 = vpop.permute.xlu0 %4881
    %4883 = vrot.lane.b32.xlu0 %v4580, 17
    %v4884 = vpop.permute.xlu0 %4883
    %4885 = vrot.lane.b32.xlu0 %v4581, 17
    %v4886 = vpop.permute.xlu0 %4885
    %4887 = vrot.lane.b32.xlu0 %v4582, 17
    %v4888 = vpop.permute.xlu0 %4887
    %4889 = vrot.lane.b32.xlu0 %v4583, 17
    %v4890 = vpop.permute.xlu0 %4889
    %4891 = vrot.lane.b32.xlu0 %v4584, 17
    %v4892 = vpop.permute.xlu0 %4891
    %4893 = vrot.lane.b32.xlu0 %v4585, 17
    %v4894 = vpop.permute.xlu0 %4893
    %4895 = vrot.lane.b32.xlu0 %v4586, 17
    %v4896 = vpop.permute.xlu0 %4895
    %4897 = vrot.lane.b32.xlu0 %v4587, 17
    %v4898 = vpop.permute.xlu0 %4897
    %4899 = vrot.lane.b32.xlu0 %v4588, 17
    %v4900 = vpop.permute.xlu0 %4899
    %4901 = vrot.lane.b32.xlu0 %v4589, 17
    %v4902 = vpop.permute.xlu0 %4901
    %4903 = vrot.lane.b32.xlu0 %v4590, 17
    %v4904 = vpop.permute.xlu0 %4903
    %4905 = vrot.lane.b32.xlu0 %v4591, 17
    %v4906 = vpop.permute.xlu0 %4905
    %4907 = vrot.lane.b32.xlu0 %v4592, 17
    %v4908 = vpop.permute.xlu0 %4907
    %4909 = vrot.lane.b32.xlu0 %v4593, 17
    %v4910 = vpop.permute.xlu0 %4909
    %4911 = vrot.lane.b32.xlu0 %v4594, 17
    %v4912 = vpop.permute.xlu0 %4911
    %4913 = vrot.lane.b32.xlu0 %v4595, 17
    %v4914 = vpop.permute.xlu0 %4913
    %4915 = vrot.lane.b32.xlu0 %v4596, 17
    %v4916 = vpop.permute.xlu0 %4915
    %4917 = vrot.lane.b32.xlu0 %v4597, 17
    %v4918 = vpop.permute.xlu0 %4917
    %4919 = vrot.lane.b32.xlu0 %v4598, 17
    %v4920 = vpop.permute.xlu0 %4919
    %4921 = vrot.lane.b32.xlu0 %v4599, 17
    %v4922 = vpop.permute.xlu0 %4921
    %4923 = vrot.lane.b32.xlu0 %v4600, 17
    %v4924 = vpop.permute.xlu0 %4923
    %4925 = vrot.lane.b32.xlu0 %v4601, 17
    %v4926 = vpop.permute.xlu0 %4925
    %4927 = vrot.lane.b32.xlu0 %v4602, 17
    %v4928 = vpop.permute.xlu0 %4927
    %4929 = vrot.lane.b32.xlu0 %v4603, 17
    %v4930 = vpop.permute.xlu0 %4929
    %4931 = vrot.lane.b32.xlu0 %v4604, 17
    %v4932 = vpop.permute.xlu0 %4931
    %4933 = vrot.lane.b32.xlu0 %v4605, 17
    %v4934 = vpop.permute.xlu0 %4933
    %4935 = vrot.lane.b32.xlu0 %v4606, 17
    %v4936 = vpop.permute.xlu0 %4935
    %4937 = vrot.lane.b32.xlu0 %v4607, 17
    %v4938 = vpop.permute.xlu0 %4937
    %4939 = vrot.lane.b32.xlu0 %v4608, 17
    %v4940 = vpop.permute.xlu0 %4939
    %4941 = vrot.lane.b32.xlu0 %v4609, 17
    %v4942 = vpop.permute.xlu0 %4941
    %4943 = vrot.lane.b32.xlu0 %v4610, 17
    %v4944 = vpop.permute.xlu0 %4943
    %4945 = vrot.lane.b32.xlu0 %v4611, 17
    %v4946 = vpop.permute.xlu0 %4945
    %4947 = vrot.lane.b32.xlu0 %v4612, 17
    %v4948 = vpop.permute.xlu0 %4947
    %4949 = vrot.lane.b32.xlu0 %v4613, 17
    %v4950 = vpop.permute.xlu0 %4949
    %4951 = vrot.lane.b32.xlu0 %v4614, 17
    %v4952 = vpop.permute.xlu0 %4951
    %4953 = vrot.lane.b32.xlu0 %v4615, 17
    %v4954 = vpop.permute.xlu0 %4953
    %4955 = vrot.lane.b32.xlu0 %v4616, 17
    %v4956 = vpop.permute.xlu0 %4955
    %4957 = vrot.lane.b32.xlu0 %v4617, 17
    %v4958 = vpop.permute.xlu0 %4957
    %4959 = vrot.lane.b32.xlu0 %v4618, 17
    %v4960 = vpop.permute.xlu0 %4959
    %4961 = vrot.lane.b32.xlu0 %v4619, 17
    %v4962 = vpop.permute.xlu0 %4961
    %4963 = vrot.lane.b32.xlu0 %v4620, 17
    %v4964 = vpop.permute.xlu0 %4963
    %4965 = vrot.lane.b32.xlu0 %v4621, 17
    %v4966 = vpop.permute.xlu0 %4965
    %4967 = vrot.lane.b32.xlu0 %v4622, 17
    %v4968 = vpop.permute.xlu0 %4967
    %4969 = vrot.lane.b32.xlu0 %v4623, 17
    %v4970 = vpop.permute.xlu0 %4969
    %4971 = vrot.lane.b32.xlu0 %v4624, 17
    %v4972 = vpop.permute.xlu0 %4971
    %4973 = vrot.lane.b32.xlu0 %v4625, 17
    %v4974 = vpop.permute.xlu0 %4973
    %4975 = vrot.lane.b32.xlu0 %v4626, 17
    %v4976 = vpop.permute.xlu0 %4975
    %v4977 = vsel %vm577, %v4762, %v4764
    %v4978 = vsel %vm577, %v4764, %v4766
    %v4979 = vsel %vm577, %v4768, %v4770
    %v4980 = vsel %vm577, %v4770, %v4772
    %v4981 = vsel %vm577, %v4774, %v4776
    %v4982 = vsel %vm577, %v4776, %v4778
    %v4983 = vsel %vm577, %v4780, %v4782
    %v4984 = vsel %vm577, %v4782, %v4784
    %v4985 = vsel %vm577, %v4786, %v4788
    %v4986 = vsel %vm577, %v4788, %v4790
    %v4987 = vsel %vm577, %v4792, %v4794
    %v4988 = vsel %vm577, %v4794, %v4796
    %v4989 = vsel %vm577, %v4798, %v4800
    %v4990 = vsel %vm577, %v4800, %v4802
    %v4991 = vsel %vm577, %v4804, %v4806
    %v4992 = vsel %vm577, %v4806, %v4808
    %v4993 = vsel %vm577, %v4810, %v4812
    %v4994 = vsel %vm577, %v4812, %v4814
    %v4995 = vsel %vm577, %v4816, %v4818
    %v4996 = vsel %vm577, %v4818, %v4820
    %v4997 = vsel %vm577, %v4822, %v4824
    %v4998 = vsel %vm577, %v4824, %v4826
    %v4999 = vsel %vm577, %v4828, %v4830
    %v5000 = vsel %vm577, %v4830, %v4832
    %v5001 = vsel %vm577, %v4834, %v4836
    %v5002 = vsel %vm577, %v4836, %v4838
    %v5003 = vsel %vm577, %v4840, %v4842
    %v5004 = vsel %vm577, %v4842, %v4844
    %v5005 = vsel %vm577, %v4846, %v4848
    %v5006 = vsel %vm577, %v4848, %v4850
    %v5007 = vsel %vm577, %v4852, %v4854
    %v5008 = vsel %vm577, %v4854, %v4856
    %v5009 = vsel %vm577, %v4858, %v4860
    %v5010 = vsel %vm577, %v4860, %v4862
    %v5011 = vsel %vm577, %v4864, %v4866
    %v5012 = vsel %vm577, %v4866, %v4868
    %v5013 = vsel %vm577, %v4870, %v4872
    %v5014 = vsel %vm577, %v4872, %v4874
    %v5015 = vsel %vm577, %v4876, %v4878
    %v5016 = vsel %vm577, %v4878, %v4880
    %v5017 = vsel %vm577, %v4882, %v4884
    %v5018 = vsel %vm577, %v4884, %v4886
    %v5019 = vsel %vm577, %v4888, %v4890
    %v5020 = vsel %vm577, %v4890, %v4892
    %v5021 = vsel %vm577, %v4894, %v4896
    %v5022 = vsel %vm577, %v4896, %v4898
    %v5023 = vsel %vm577, %v4900, %v4902
    %v5024 = vsel %vm577, %v4902, %v4904
    %v5025 = vsel %vm577, %v4906, %v4908
    %v5026 = vsel %vm577, %v4908, %v4910
    %v5027 = vsel %vm577, %v4912, %v4914
    %v5028 = vsel %vm577, %v4914, %v4916
    %v5029 = vsel %vm577, %v4918, %v4920
    %v5030 = vsel %vm577, %v4920, %v4922
    %v5031 = vsel %vm577, %v4924, %v4926
    %v5032 = vsel %vm577, %v4926, %v4928
    %v5033 = vsel %vm577, %v4930, %v4932
    %v5034 = vsel %vm577, %v4932, %v4934
    %v5035 = vsel %vm577, %v4936, %v4938
    %v5036 = vsel %vm577, %v4938, %v4940
    %v5037 = vsel %vm577, %v4942, %v4944
    %v5038 = vsel %vm577, %v4944, %v4946
    %v5039 = vsel %vm577, %v4948, %v4950
    %v5040 = vsel %vm577, %v4950, %v4952
    %v5041 = vsel %vm577, %v4954, %v4956
    %v5042 = vsel %vm577, %v4956, %v4958
    %v5043 = vsel %vm577, %v4960, %v4962
    %v5044 = vsel %vm577, %v4962, %v4964
    %v5045 = vsel %vm577, %v4966, %v4968
    %v5046 = vsel %vm577, %v4968, %v4970
    %v5047 = vsel %vm577, %v4972, %v4974
    %v5048 = vsel %vm577, %v4974, %v4976
    %v5122 = vsel %vm1170, %v4648, 0
    %5124 = vmatprep.subr.bf16.mxu0 %v4978
    %5125 = vmatpush1.bf16.msra.mxu0 %v4977
    %5126 = vmatprep.subr.bf16.mxu0 %v4980
    %5127 = vmatpush1.bf16.msra.mxu0 %v4979
    %5128 = vmatprep.subr.bf16.mxu0 %v4982
    %5129 = vmatpush1.bf16.msra.mxu0 %v4981
    %5130 = vmatprep.subr.bf16.mxu0 %v4984
    %5131 = vmatpush1.bf16.msra.mxu0 %v4983
    %5132 = vmatprep.subr.bf16.mxu0 %v4986
    %5133 = vmatpush1.bf16.msra.mxu0 %v4985
    %5134 = vmatprep.subr.bf16.mxu0 %v4988
    %5135 = vmatpush1.bf16.msra.mxu0 %v4987
    %5136 = vmatprep.subr.bf16.mxu0 %v4990
    %5137 = vmatpush1.bf16.msra.mxu0 %v4989
    %5138 = vmatprep.subr.bf16.mxu0 %v4992
    %5139 = vmatpush1.bf16.msra.mxu0 %v4991
    %5140 = vmatprep.subr.bf16.mxu0 %v4994
    %5141 = vmatpush1.bf16.msra.mxu0 %v4993
    %5142 = vmatprep.subr.bf16.mxu0 %v4996
    %5143 = vmatpush1.bf16.msra.mxu0 %v4995
    %5144 = vmatprep.subr.bf16.mxu0 %v4998
    %5145 = vmatpush1.bf16.msra.mxu0 %v4997
    %5146 = vmatprep.subr.bf16.mxu0 %v5000
    %5147 = vmatpush1.bf16.msra.mxu0 %v4999
    %5148 = vmatprep.subr.bf16.mxu0 %v5002
    %5149 = vmatpush1.bf16.msra.mxu0 %v5001
    %5150 = vmatprep.subr.bf16.mxu0 %v5004
    %5151 = vmatpush1.bf16.msra.mxu0 %v5003
    %5152 = vmatprep.subr.bf16.mxu0 %v5006
    %5153 = vmatpush1.bf16.msra.mxu0 %v5005
    %5154 = vmatprep.subr.bf16.mxu0 %v5008
    %5155 = vmatpush1.bf16.msra.mxu0 %v5007
    %5156 = vmatprep.mubr.bf16.mxu0 %v4645
    %5157 = vmatmul.mubr.bf16.gmra.mrb[0].mxu0 %v4644
    %v5158 = vpop.f32.mrb[0].mxu0
    %v5159 = vadd.f32 %v4634, %v5158
    %v5160 = vpop.f32.mrb[0].mxu0
    %v5161 = vadd.f32 %v4634, %v5160
    %v5162 = vpop.f32.mrb[0].mxu0
    %v5163 = vpop.f32.mrb[0].mxu0
    %5164 = vdwg.mxu0
    %5165 = vmatprep.subr.bf16.mxu0 %v5010
    %5166 = vmatpush1.bf16.msra.mxu0 %v5009
    %5167 = vmatprep.subr.bf16.mxu0 %v5012
    %5168 = vmatpush1.bf16.msra.mxu0 %v5011
    %5169 = vmatprep.subr.bf16.mxu0 %v5014
    %5170 = vmatpush1.bf16.msra.mxu0 %v5013
    %5171 = vmatprep.subr.bf16.mxu0 %v5016
    %5172 = vmatpush1.bf16.msra.mxu0 %v5015
    %5173 = vmatprep.subr.bf16.mxu0 %v5018
    %5174 = vmatpush1.bf16.msra.mxu0 %v5017
    %5175 = vmatprep.subr.bf16.mxu0 %v5020
    %5176 = vmatpush1.bf16.msra.mxu0 %v5019
    %5177 = vmatprep.subr.bf16.mxu0 %v5022
    %5178 = vmatpush1.bf16.msra.mxu0 %v5021
    %5179 = vmatprep.subr.bf16.mxu0 %v5024
    %5180 = vmatpush1.bf16.msra.mxu0 %v5023
    %5181 = vmatprep.subr.bf16.mxu0 %v5026
    %5182 = vmatpush1.bf16.msra.mxu0 %v5025
    %5183 = vmatprep.subr.bf16.mxu0 %v5028
    %5184 = vmatpush1.bf16.msra.mxu0 %v5027
    %5185 = vmatprep.subr.bf16.mxu0 %v5030
    %5186 = vmatpush1.bf16.msra.mxu0 %v5029
    %5187 = vmatprep.subr.bf16.mxu0 %v5032
    %5188 = vmatpush1.bf16.msra.mxu0 %v5031
    %5189 = vmatprep.subr.bf16.mxu0 %v5034
    %5190 = vmatpush1.bf16.msra.mxu0 %v5033
    %5191 = vmatprep.subr.bf16.mxu0 %v5036
    %5192 = vmatpush1.bf16.msra.mxu0 %v5035
    %5193 = vmatprep.subr.bf16.mxu0 %v5038
    %5194 = vmatpush1.bf16.msra.mxu0 %v5037
    %5195 = vmatprep.subr.bf16.mxu0 %v5040
    %5196 = vmatpush1.bf16.msra.mxu0 %v5039
    %5197 = vmatprep.mubr.bf16.mxu0 %v4647
    %5198 = vmatmul.mubr.bf16.gmra.mrb[0].mxu0 %v4646
    %v5199 = vpop.f32.mrb[0].mxu0
    %v5200 = vadd.f32 %v5159, %v5199
    %v5201 = vpop.f32.mrb[0].mxu0
    %v5202 = vadd.f32 %v5161, %v5201
    %v5203 = vpop.f32.mrb[0].mxu0
    %v5204 = vpop.f32.mrb[0].mxu0
    %5205 = vdwg.mxu0
    %5206 = vmatprep.subr.bf16.mxu0 %v5042
    %5207 = vmatpush1.bf16.msra.mxu0 %v5041
    %5208 = vmatprep.subr.bf16.mxu0 %v5044
    %5209 = vmatpush1.bf16.msra.mxu0 %v5043
    %5210 = vmatprep.subr.bf16.mxu0 %v5046
    %5211 = vmatpush1.bf16.msra.mxu0 %v5045
    %5212 = vmatprep.subr.bf16.mxu0 %v5048
    %5213 = vmatpush1.bf16.msra.mxu0 %v5047
    %5214 = vmatprep.subr.bf16.mxu0 0
    %5215 = vmatpush1.bf16.msra.mxu0 0
    %5216 = vmatprep.subr.bf16.mxu0 0
    %5217 = vmatpush1.bf16.msra.mxu0 0
    %5218 = vmatprep.subr.bf16.mxu0 0
    %5219 = vmatpush1.bf16.msra.mxu0 0
    %5220 = vmatprep.subr.bf16.mxu0 0
    %5221 = vmatpush1.bf16.msra.mxu0 0
    %5222 = vmatprep.subr.bf16.mxu0 0
    %5223 = vmatpush1.bf16.msra.mxu0 0
    %5224 = vmatprep.subr.bf16.mxu0 0
    %5225 = vmatpush1.bf16.msra.mxu0 0
    %5226 = vmatprep.subr.bf16.mxu0 0
    %5227 = vmatpush1.bf16.msra.mxu0 0
    %5228 = vmatprep.subr.bf16.mxu0 0
    %5229 = vmatpush1.bf16.msra.mxu0 0
    %5230 = vmatprep.subr.bf16.mxu0 0
    %5231 = vmatpush1.bf16.msra.mxu0 0
    %5232 = vmatprep.subr.bf16.mxu0 0
    %5233 = vmatpush1.bf16.msra.mxu0 0
    %5234 = vmatprep.subr.bf16.mxu0 0
    %5235 = vmatpush1.bf16.msra.mxu0 0
    %5236 = vmatprep.subr.bf16.mxu0 0
    %5237 = vmatpush1.bf16.msra.mxu0 0
    %5238 = vmatprep.mubr.bf16.mxu0 0
    %5239 = vmatmul.mubr.bf16.gmra.mrb[0].mxu0 %v5122
    %v5240 = vpop.f32.mrb[0].mxu0
    %v5241 = vadd.f32 %v5200, %v5240
    %v5242 = vpop.f32.mrb[0].mxu0
    %v5243 = vadd.f32 %v5202, %v5242
    %v5244 = vpop.f32.mrb[0].mxu0
    %v5245 = vpop.f32.mrb[0].mxu0
    %5246 = vdwg.mxu0
    %v5247 = vmax.f32 %v5241, 0.0
    %v5248 = vmax.f32 %v5243, 0.0
    %5249 = vst [vmem:[%s17] sm:$0xff] %v5247
    %5250 = vst [vmem:[%s17 + $0x8] sm:$0xff] %v5248
    // Predicated region
    $region74: #{my_conv_autoencoder1.1} parent=1 // pred_check
      _
    $region75: #{my_conv_autoencoder1.1} parent=1 // pred_check_branch
      %5252 = sbr.rel (0) target = $region77
    $region76: #{my_conv_autoencoder1.1} parent=1 // pred_region
      _
    $region77: #{my_conv_autoencoder1.1} parent=1 // pred_fallthru
      _
    // Predicated region
    $region78: #{my_conv_autoencoder1.1} parent=1 // pred_check
      _
    $region79: #{my_conv_autoencoder1.1} parent=1 // pred_check_branch
      %5254 = sbr.rel (0) target = $region81
    $region80: #{my_conv_autoencoder1.1} parent=1 // pred_region
      _
    $region81: #{my_conv_autoencoder1.1} parent=1 // pred_fallthru
      _
    %5255 = vsyncpa [#allocation4], 1

</llo_original>
